<compile_context>
chip_gen: v7x
topology: tpu7x:2x2x1
jax: 0.10.0
libtpu: 0.0.40
codegen_flags: <defaults>
</compile_context>

<pallas_src>
import functools

import jax
import jax.numpy as jnp
from jax.experimental import pallas as pl
from jax.experimental.pallas import tpu as pltpu


def _vmem_limit_bytes():
    """Per-generation VMEM limit: leave ~16 MiB headroom, cap at 100 MiB."""
    try:
        cap = int(getattr(pltpu.get_tpu_info(), "vmem_capacity_bytes", 0))
    except Exception:
        cap = 0
    if cap <= 0:
        cap = 64 * 1024 * 1024        # conservative default (v7x-sized VMEM)
    return max(32 * 1024 * 1024, min(cap - 16 * 1024 * 1024, 100 * 1024 * 1024))


_VMEM_LIMIT = _vmem_limit_bytes()


def _round_up(x, m):
    return (x + m - 1) // m * m


def _pick_tile(dim, desired, align):
    """Largest `align`-multiple divisor of `dim` <= desired; `dim` if small; else None."""
    if dim <= desired:
        return dim
    t = (desired // align) * align
    while t >= align:
        if dim % t == 0:
            return t
        t -= align
    return None


# ----------------------------- Pallas kernels -----------------------------

def stem_expand_kernel(p_ref, w1_ref, b1_ref, w2_ref, b2_ref, h_ref, y_ref):
    """Fused stem conv (GEMM over im2col patches) + SiLU + 1x1 expand + SiLU.

    K is tiny (<=32) so there is no K grid / accumulator scratch: write straight to
    the lane-dense expanded output; the 32-wide stem activation is stored only
    because it is the MBConv residual.
    """
    y = jnp.dot(p_ref[...], w1_ref[...], preferred_element_type=jnp.float32)
    y = y + b1_ref[...].astype(jnp.float32)
    y = y * jax.nn.sigmoid(y)                              # SiLU (f32)
    y_bf = y.astype(y_ref.dtype)
    y_ref[...] = y_bf                                      # residual copy
    h = jnp.dot(y_bf, w2_ref[...], preferred_element_type=jnp.float32)
    h = h + b2_ref[...].astype(jnp.float32)
    h = h * jax.nn.sigmoid(h)
    h_ref[...] = h.astype(h_ref.dtype)


def dw3x3_silu_pool_kernel(x_ref, w_ref, b_ref, o_ref, pool_ref):
    """Per-batch depthwise 3x3 (stride 1, pad 1) + bias + SiLU, fused global avg-pool.

    W-shifts via pltpu.roll (XLU) + iota border masking; H-shifts via vreg-aligned
    row slices.  No halo scratch, no zero-fill pass, no sublane-misaligned slices.
    """
    _, H, W, C = x_ref.shape
    x = x_ref[0].astype(jnp.float32)                       # (H, W, C)
    col = jax.lax.broadcasted_iota(jnp.int32, (H, W, C), 1)
    # rolled[w] = x[w-1] (shift=+1); rolled[w] = x[w+1] (shift=W-1 == -1 mod W)
    x_l = jnp.where(col > 0, pltpu.roll(x, shift=1, axis=1), 0.0)
    x_r = jnp.where(col < W - 1, pltpu.roll(x, shift=W - 1, axis=1), 0.0)
    taps = (x_l, x, x_r)
    zrow = jnp.zeros((1, W, C), jnp.float32)
    acc = jnp.zeros((H, W, C), jnp.float32)
    for dy in range(3):                                    # static unroll, 9 taps
        for dx in range(3):
            t = taps[dx]
            if dy == 0:
                t = jnp.concatenate([zrow, t[:H - 1]], axis=0)      # x[h-1]
            elif dy == 2:
                t = jnp.concatenate([t[1:], zrow], axis=0)          # x[h+1]
            acc = acc + t * w_ref[dy * 3 + dx, :].astype(jnp.float32)
    y = acc + b_ref[0, :].astype(jnp.float32)
    y = y * jax.nn.sigmoid(y)                              # SiLU
    o_ref[0] = y.astype(o_ref.dtype)
    pool_ref[0] = jnp.mean(y, axis=(0, 1))[None, :].astype(pool_ref.dtype)


def se_mlp_kernel(p_ref, w1_ref, b1_ref, w2_ref, b2_ref, o_ref):
    """Fused squeeze-excite MLP: sigmoid(silu(p @ w1 + b1) @ w2 + b2)."""
    h = jnp.dot(p_ref[...], w1_ref[...], preferred_element_type=jnp.float32)
    h = h + b1_ref[...].astype(jnp.float32)
    h = h * jax.nn.sigmoid(h)
    g = jnp.dot(h.astype(w2_ref.dtype), w2_ref[...], preferred_element_type=jnp.float32)
    g = g + b2_ref[...].astype(jnp.float32)
    o_ref[...] = jax.nn.sigmoid(g).astype(o_ref.dtype)


def proj_head_pool_kernel(inv_hw, h_ref, s_ref, pw_ref, pb_ref, r_ref,
                          hw_ref, hb_ref, o_ref, acc_ref):
    """Fused SE-rescale + 1x1 project (+bias+residual) + 1x1 head conv + SiLU +
    global average pool.  Neither the projected nor the head activation is written to
    HBM; pooled features accumulate in f32 VMEM scratch across M-tiles."""
    m = pl.program_id(1)

    @pl.when(m == 0)
    def _init():
        acc_ref[...] = jnp.zeros_like(acc_ref)

    hs = (h_ref[0].astype(jnp.float32) * s_ref[0].astype(jnp.float32)).astype(h_ref.dtype)
    y = jnp.dot(hs, pw_ref[...], preferred_element_type=jnp.float32)
    y = y + pb_ref[...].astype(jnp.float32) + r_ref[0].astype(jnp.float32)
    z = jnp.dot(y.astype(hw_ref.dtype), hw_ref[...], preferred_element_type=jnp.float32)
    z = z + hb_ref[...].astype(jnp.float32)
    z = z * jax.nn.sigmoid(z)                              # SiLU (head epilogue)
    acc_ref[...] += jnp.sum(z, axis=0, keepdims=True)

    @pl.when(m == pl.num_programs(1) - 1)
    def _finalize():
        o_ref[0] = (acc_ref[...] * inv_hw).astype(o_ref.dtype)


def classifier_kernel(x_ref, w_ref, b_ref, o_ref):
    """Folded classifier GEMM (backbone 1280->1000 folded with Linear(1000->nc))."""
    acc = jnp.dot(x_ref[...], w_ref[...], preferred_element_type=jnp.float32)
    o_ref[...] = (acc + b_ref[...].astype(jnp.float32)).astype(o_ref.dtype)


# ------------------------------ wrappers -----------------------------------

def pallas_stem_expand(patches, w1, b1, w2, b2, tm_desired=512):
    M, K = patches.shape
    C0 = w1.shape[1]
    Ce = w2.shape[1]
    tm = _pick_tile(M, tm_desired, 8)
    if tm is None:                      # awkward M: pad rows, slice off afterwards
        tm = tm_desired
        Mp = _round_up(M, tm)
        patches = jnp.pad(patches, ((0, Mp - M), (0, 0)))
    else:
        Mp = M
    cost = pl.CostEstimate(
        flops=2 * Mp * K * C0 + 2 * Mp * C0 * Ce,
        transcendentals=Mp * (C0 + Ce),
        bytes_accessed=int(patches.size * 2 + Mp * (C0 + Ce) * 2
                           + (w1.size + w2.size + C0 + Ce) * 2))
    h, y = pl.pallas_call(
        stem_expand_kernel,
        out_shape=(jax.ShapeDtypeStruct((Mp, Ce), patches.dtype),
                   jax.ShapeDtypeStruct((Mp, C0), patches.dtype)),
        grid=(Mp // tm,),
        in_specs=[pl.BlockSpec((tm, K), lambda i: (i, 0)),
                  pl.BlockSpec((K, C0), lambda i: (0, 0)),
                  pl.BlockSpec((1, C0), lambda i: (0, 0)),
                  pl.BlockSpec((C0, Ce), lambda i: (0, 0)),
                  pl.BlockSpec((1, Ce), lambda i: (0, 0))],
        out_specs=(pl.BlockSpec((tm, Ce), lambda i: (i, 0)),
                   pl.BlockSpec((tm, C0), lambda i: (i, 0))),
        compiler_params=pltpu.CompilerParams(
            dimension_semantics=("parallel",), vmem_limit_bytes=_VMEM_LIMIT),
        cost_estimate=cost,
    )(patches, w1, b1.reshape(1, C0), w2, b2.reshape(1, Ce))
    return h[:M], y[:M]


def pallas_dwconv3x3_silu_pool(x, w9, bias):
    # TODO(synk): tile over H-row blocks (halo via index_map) at real resolutions so the
    # per-step block + f32 accumulator stay within v7x's 64 MiB VMEM and feed both TCs.
    B, H, W, C = x.shape
    cost = pl.CostEstimate(
        flops=2 * 9 * B * H * W * C,
        transcendentals=B * H * W * C,
        bytes_accessed=int((2 * x.size + B * C) * x.dtype.itemsize
                           + (w9.size + C) * w9.dtype.itemsize))
    return pl.pallas_call(
        dw3x3_silu_pool_kernel,
        out_shape=(jax.ShapeDtypeStruct((B, H, W, C), x.dtype),
                   jax.ShapeDtypeStruct((B, 1, C), x.dtype)),
        grid=(B,),
        in_specs=[pl.BlockSpec((1, H, W, C), lambda b: (b, 0, 0, 0)),
                  pl.BlockSpec((9, C), lambda b: (0, 0)),
                  pl.BlockSpec((1, C), lambda b: (0, 0))],
        out_specs=(pl.BlockSpec((1, H, W, C), lambda b: (b, 0, 0, 0)),
                   pl.BlockSpec((1, 1, C), lambda b: (b, 0, 0))),
        compiler_params=pltpu.CompilerParams(
            dimension_semantics=("parallel",), vmem_limit_bytes=_VMEM_LIMIT),
        cost_estimate=cost,
    )(x, w9, bias.reshape(1, C))


def pallas_se_mlp(pooled, w1, b1, w2, b2):
    B, C = pooled.shape
    Cr = w1.shape[1]
    return pl.pallas_call(
        se_mlp_kernel,
        out_shape=jax.ShapeDtypeStruct((B, C), pooled.dtype),
        grid=(1,),
        in_specs=[pl.BlockSpec((B, C), lambda i: (0, 0)),
                  pl.BlockSpec((C, Cr), lambda i: (0, 0)),
                  pl.BlockSpec((1, Cr), lambda i: (0, 0)),
                  pl.BlockSpec((Cr, C), lambda i: (0, 0)),
                  pl.BlockSpec((1, C), lambda i: (0, 0))],
        out_specs=pl.BlockSpec((B, C), lambda i: (0, 0)),
        compiler_params=pltpu.CompilerParams(dimension_semantics=("arbitrary",)),
    )(pooled, w1, b1.reshape(1, Cr), w2, b2.reshape(1, C))


def pallas_proj_head_pool(h, s, proj_w, proj_b, residual, head_w, head_b,
                          tm_desired=512):
    B, HW, Ce = h.shape
    Cp = proj_w.shape[1]
    Ch = head_w.shape[1]
    tms = _pick_tile(HW, tm_desired, 8)
    if tms is None:
        tms = HW      # pooling forbids row padding; fall back to one block per batch
    cost = pl.CostEstimate(
        flops=2 * B * HW * (Ce * Cp + Cp * Ch) + B * HW * Ce,
        transcendentals=B * HW * Ch,
        bytes_accessed=int((h.size + residual.size + s.size) * h.dtype.itemsize
                           + (proj_w.size + head_w.size) * proj_w.dtype.itemsize
                           + B * Ch * h.dtype.itemsize))
    out = pl.pallas_call(
        functools.partial(proj_head_pool_kernel, 1.0 / float(HW)),
        out_shape=jax.ShapeDtypeStruct((B, 1, Ch), h.dtype),
        grid=(B, HW // tms),
        in_specs=[pl.BlockSpec((1, tms, Ce), lambda b, m: (b, m, 0)),
                  pl.BlockSpec((1, 1, Ce), lambda b, m: (b, 0, 0)),
                  pl.BlockSpec((Ce, Cp), lambda b, m: (0, 0)),
                  pl.BlockSpec((1, Cp), lambda b, m: (0, 0)),
                  pl.BlockSpec((1, tms, Cp), lambda b, m: (b, m, 0)),
                  pl.BlockSpec((Cp, Ch), lambda b, m: (0, 0)),
                  pl.BlockSpec((1, Ch), lambda b, m: (0, 0))],
        out_specs=pl.BlockSpec((1, 1, Ch), lambda b, m: (b, 0, 0)),
        scratch_shapes=[pltpu.VMEM((1, Ch), jnp.float32)],
        compiler_params=pltpu.CompilerParams(
            dimension_semantics=("parallel", "arbitrary"),
            vmem_limit_bytes=_VMEM_LIMIT),
        cost_estimate=cost,
    )(h, s, proj_w, proj_b.reshape(1, Cp), residual, head_w, head_b.reshape(1, Ch))
    return out.reshape(B, Ch)


def pallas_classifier(feat, w, bias):
    B, K = feat.shape
    N = w.shape[1]
    return pl.pallas_call(
        classifier_kernel,
        out_shape=jax.ShapeDtypeStruct((B, N), jnp.float32),
        grid=(1,),
        in_specs=[pl.BlockSpec((B, K), lambda i: (0, 0)),
                  pl.BlockSpec((K, N), lambda i: (0, 0)),
                  pl.BlockSpec((1, N), lambda i: (0, 0))],
        out_specs=pl.BlockSpec((B, N), lambda i: (0, 0)),
        compiler_params=pltpu.CompilerParams(
            dimension_semantics=("arbitrary",), vmem_limit_bytes=_VMEM_LIMIT),
    )(feat, w, bias.reshape(1, N))


# ------------------------------ glue (plain JAX) ----------------------------

def extract_patches(x, ksize, stride, pad):
    """im2col for the stem conv: NHWC -> (B*Ho*Wo, ksize*ksize*Cin)."""
    # TODO(synk): assemble patches in-kernel (strided DMA / index_map) at real resolutions.
    x = jnp.pad(x, ((0, 0), (pad, pad), (pad, pad), (0, 0)))
    B, Hp, Wp, C = x.shape
    Ho = (Hp - ksize) // stride + 1
    Wo = (Wp - ksize) // stride + 1
    cols = []
    for dy in range(ksize):
        for dx in range(ksize):
            cols.append(x[:, dy:dy + stride * Ho:stride, dx:dx + stride * Wo:stride, :])
    patches = jnp.concatenate(cols, axis=-1)            # (B, Ho, Wo, k*k*C)
    return patches.reshape(B * Ho * Wo, ksize * ksize * C), (B, Ho, Wo)


def init_params(key, num_classes):
    ks = jax.random.split(key, 20)
    n = lambda k, s, sc=0.05: (sc * jax.random.normal(k, s)).astype(jnp.float32)
    return dict(
        stem_w=n(ks[0], (3, 3, 3, 32)),      stem_b=n(ks[1], (32,)),
        exp_w=n(ks[2], (32, 128)),           exp_b=n(ks[3], (128,)),
        dw_w=n(ks[4], (3, 3, 128)),          dw_b=n(ks[5], (128,)),
        se1_w=n(ks[6], (128, 32)),           se1_b=n(ks[7], (32,)),
        se2_w=n(ks[8], (32, 128)),           se2_b=n(ks[9], (128,)),
        proj_w=n(ks[10], (128, 32)),         proj_b=n(ks[11], (32,)),
        head_w=n(ks[12], (32, 1280)),        head_b=n(ks[13], (1280,)),
        cls_w=n(ks[14], (1280, 1000)),       cls_b=n(ks[15], (1000,)),
        fc_w=n(ks[16], (1000, num_classes)), fc_b=n(ks[17], (num_classes,)),
    )


def prepare_inference_params(p):
    """One-time eval-mode param prep: reshape, fold the two Linears, pad, cast bf16."""
    C0 = p["stem_w"].shape[-1]
    stem_w = p["stem_w"].reshape(-1, C0)                              # (27, 32)
    stem_w = jnp.pad(stem_w, ((0, (-stem_w.shape[0]) % 8), (0, 0)))   # K 27 -> 32
    dw_w = p["dw_w"].reshape(9, -1)
    # Fold backbone classifier (->1000) with nn.Linear(1000->nc); pad N to 128 (lane-dense).
    nc = p["fc_w"].shape[1]
    Wf = p["cls_w"] @ p["fc_w"]                                       # (1280, nc)
    bf = p["cls_b"] @ p["fc_w"] + p["fc_b"]                           # (nc,)
    npad = (-nc) % 128
    Wf = jnp.pad(Wf, ((0, 0), (0, npad)))
    bf = jnp.pad(bf, (0, npad))
    cp = dict(stem_w=stem_w, stem_b=p["stem_b"],
              exp_w=p["exp_w"], exp_b=p["exp_b"],
              dw_w=dw_w, dw_b=p["dw_b"],
              se1_w=p["se1_w"], se1_b=p["se1_b"],
              se2_w=p["se2_w"], se2_b=p["se2_b"],
              proj_w=p["proj_w"], proj_b=p["proj_b"],
              head_w=p["head_w"], head_b=p["head_b"],
              cls_w=Wf, cls_b=bf)
    return {k: v.astype(jnp.bfloat16) for k, v in cp.items()}


def efficientnet_forward(x_nchw, cp, *, num_classes):
    # PyTorch feeds NCHW; compute in NHWC (channels on the 128-lane axis), bf16.
    x = jnp.transpose(x_nchw, (0, 2, 3, 1)).astype(jnp.bfloat16)

    # Stem conv3x3 s2 (3->32) + SiLU and 1x1 expand (32->128) + SiLU: one fused kernel.
    patches, (B, Ho, Wo) = extract_patches(x, ksize=3, stride=2, pad=1)
    Kp = cp["stem_w"].shape[0]
    patches = jnp.pad(patches, ((0, 0), (0, Kp - patches.shape[1])))
    C0 = cp["stem_w"].shape[1]
    Ce = cp["exp_w"].shape[1]
    h, res = pallas_stem_expand(patches, cp["stem_w"], cp["stem_b"],
                                cp["exp_w"], cp["exp_b"])
    h = h.reshape(B, Ho, Wo, Ce)

    # Depthwise 3x3 + SiLU with fused SE squeeze (global avg-pool of the dw output).
    h, pooled = pallas_dwconv3x3_silu_pool(h, cp["dw_w"], cp["dw_b"])
    s = pallas_se_mlp(pooled.reshape(B, Ce),
                      cp["se1_w"], cp["se1_b"], cp["se2_w"], cp["se2_b"])

    # SE-rescale + 1x1 project + residual + 1x1 head conv + SiLU + global avg-pool,
    # all fused — no HBM round-trip for the projected or head activations.
    HW = Ho * Wo
    feat = pallas_proj_head_pool(h.reshape(B, HW, Ce), s.reshape(B, 1, Ce),
                                 cp["proj_w"], cp["proj_b"],
                                 res.reshape(B, HW, C0),
                                 cp["head_w"], cp["head_b"])

    # Fused classifier (backbone 1280->1000 folded with nn.Linear(1000->nc), N padded to 128).
    # TODO(synk): torchvision classifier Dropout is identity in eval mode; omitted.
    logits_p = pallas_classifier(feat, cp["cls_w"], cp["cls_b"])
    return logits_p[:, :num_classes]


if __name__ == "__main__":
    num_classes = 10
    key = jax.random.PRNGKey(0)
    k_x, k_p = jax.random.split(key)
    x = jax.random.normal(k_x, (2, 3, 16, 16), jnp.float32)   # NCHW, like PyTorch
    raw_params = init_params(k_p, num_classes)
    cparams = prepare_inference_params(raw_params)            # one-time eval-mode prep

    fwd = jax.jit(functools.partial(efficientnet_forward, num_classes=num_classes))
    out = fwd(x, cparams)
    jax.block_until_ready(out)
    assert out.shape == (2, num_classes)
    assert jnp.all(jnp.isfinite(out))
    print("KERNEL_OK")
</pallas_src>

<mosaic_0001>
module attributes {stable_mosaic.version = 11 : i64} {
  func.func @dw3x3_silu_pool_kernel(%arg0: i32, %arg1: memref<1x8x8x128xbf16, #tpu.memory_space<vmem>>, %arg2: memref<9x128xbf16, #tpu.memory_space<vmem>>, %arg3: memref<1x128xbf16, #tpu.memory_space<vmem>>, %arg4: memref<1x8x8x128xbf16, #tpu.memory_space<vmem>>, %arg5: memref<1x1x128xbf16, #tpu.memory_space<vmem>>) attributes {dimension_semantics = [#tpu.dimension_semantics<parallel>], iteration_bounds = array<i64: 2>, scalar_prefetch = 0 : i64, scratch_operands = 0 : i64, tpu.core_type = #tpu.core_type<tc>, window_params = [{transform_indices = @transform_0, window_bounds = array<i64: 1, 8, 8, 128>}, {pipeline_mode = #tpu.pipeline_mode<synchronous>, transform_indices = @transform_1, window_bounds = array<i64: 9, 128>}, {pipeline_mode = #tpu.pipeline_mode<synchronous>, transform_indices = @transform_2, window_bounds = array<i64: 1, 128>}, {transform_indices = @transform_3, window_bounds = array<i64: 1, 8, 8, 128>}, {transform_indices = @transform_4, window_bounds = array<i64: 1, 1, 128>}]} {
    %c0 = arith.constant 0 : index
    %c0_0 = arith.constant 0 : index
    %c0_1 = arith.constant 0 : index
    %c0_2 = arith.constant 0 : index
    %0 = vector.load %arg1[%c0, %c0_0, %c0_1, %c0_2] : memref<1x8x8x128xbf16, #tpu.memory_space<vmem>>, vector<1x8x8x128xbf16>
    %1 = vector.shape_cast %0 : vector<1x8x8x128xbf16> to vector<8x8x128xbf16>
    %2 = arith.extf %1 : vector<8x8x128xbf16> to vector<8x8x128xf32>
    %3 = tpu.iota {dimensions = array<i32: 1>} : vector<8x8x128xi32>
    %c0_i32 = arith.constant 0 : i32
    %4 = vector.broadcast %c0_i32 : i32 to vector<8x8x128xi32>
    %5 = arith.cmpi sgt, %3, %4 : vector<8x8x128xi32>
    %c1_i32 = arith.constant 1 : i32
    %6 = tpu.dynamic_rotate %2 by %c1_i32 dim 1 : vector<8x8x128xf32>, i32 -> vector<8x8x128xf32>
    %cst = arith.constant 0.000000e+00 : f32
    %7 = vector.broadcast %cst : f32 to vector<8x8x128xf32>
    %8 = arith.select %5, %6, %7 : vector<8x8x128xi1>, vector<8x8x128xf32>
    %c7_i32 = arith.constant 7 : i32
    %9 = vector.broadcast %c7_i32 : i32 to vector<8x8x128xi32>
    %10 = arith.cmpi slt, %3, %9 : vector<8x8x128xi32>
    %c7_i32_3 = arith.constant 7 : i32
    %11 = tpu.dynamic_rotate %2 by %c7_i32_3 dim 1 : vector<8x8x128xf32>, i32 -> vector<8x8x128xf32>
    %cst_4 = arith.constant 0.000000e+00 : f32
    %12 = vector.broadcast %cst_4 : f32 to vector<8x8x128xf32>
    %13 = arith.select %10, %11, %12 : vector<8x8x128xi1>, vector<8x8x128xf32>
    %cst_5 = arith.constant 0.000000e+00 : f32
    %14 = vector.broadcast %cst_5 : f32 to vector<1x8x128xf32>
    %cst_6 = arith.constant 0.000000e+00 : f32
    %15 = vector.broadcast %cst_6 : f32 to vector<8x8x128xf32>
    %16 = vector.extract_strided_slice %8 {offsets = [0, 0, 0], sizes = [7, 8, 128], strides = [1, 1, 1]} : vector<8x8x128xf32> to vector<7x8x128xf32>
    %17 = tpu.concatenate %14, %16 in 0 : vector<1x8x128xf32>, vector<7x8x128xf32> -> vector<8x8x128xf32>
    %c0_7 = arith.constant 0 : index
    %c0_8 = arith.constant 0 : index
    %18 = vector.load %arg2[%c0_7, %c0_8] : memref<9x128xbf16, #tpu.memory_space<vmem>>, vector<1x128xbf16>
    %19 = vector.shape_cast %18 : vector<1x128xbf16> to vector<128xbf16>
    %20 = arith.extf %19 : vector<128xbf16> to vector<128xf32>
    %21 = vector.shape_cast %20 : vector<128xf32> to vector<1x1x128xf32>
    %22 = vector.broadcast %21 : vector<1x1x128xf32> to vector<8x8x128xf32>
    %23 = arith.mulf %17, %22 : vector<8x8x128xf32>
    %24 = arith.addf %15, %23 : vector<8x8x128xf32>
    %25 = vector.extract_strided_slice %2 {offsets = [0, 0, 0], sizes = [7, 8, 128], strides = [1, 1, 1]} : vector<8x8x128xf32> to vector<7x8x128xf32>
    %26 = tpu.concatenate %14, %25 in 0 : vector<1x8x128xf32>, vector<7x8x128xf32> -> vector<8x8x128xf32>
    %c1 = arith.constant 1 : index
    %c0_9 = arith.constant 0 : index
    %27 = vector.load %arg2[%c1, %c0_9] : memref<9x128xbf16, #tpu.memory_space<vmem>>, vector<1x128xbf16>
    %28 = vector.shape_cast %27 : vector<1x128xbf16> to vector<128xbf16>
    %29 = arith.extf %28 : vector<128xbf16> to vector<128xf32>
    %30 = vector.shape_cast %29 : vector<128xf32> to vector<1x1x128xf32>
    %31 = vector.broadcast %30 : vector<1x1x128xf32> to vector<8x8x128xf32>
    %32 = arith.mulf %26, %31 : vector<8x8x128xf32>
    %33 = arith.addf %24, %32 : vector<8x8x128xf32>
    %34 = vector.extract_strided_slice %13 {offsets = [0, 0, 0], sizes = [7, 8, 128], strides = [1, 1, 1]} : vector<8x8x128xf32> to vector<7x8x128xf32>
    %35 = tpu.concatenate %14, %34 in 0 : vector<1x8x128xf32>, vector<7x8x128xf32> -> vector<8x8x128xf32>
    %c2 = arith.constant 2 : index
    %c0_10 = arith.constant 0 : index
    %36 = vector.load %arg2[%c2, %c0_10] : memref<9x128xbf16, #tpu.memory_space<vmem>>, vector<1x128xbf16>
    %37 = vector.shape_cast %36 : vector<1x128xbf16> to vector<128xbf16>
    %38 = arith.extf %37 : vector<128xbf16> to vector<128xf32>
    %39 = vector.shape_cast %38 : vector<128xf32> to vector<1x1x128xf32>
    %40 = vector.broadcast %39 : vector<1x1x128xf32> to vector<8x8x128xf32>
    %41 = arith.mulf %35, %40 : vector<8x8x128xf32>
    %42 = arith.addf %33, %41 : vector<8x8x128xf32>
    %c3 = arith.constant 3 : index
    %c0_11 = arith.constant 0 : index
    %43 = vector.load %arg2[%c3, %c0_11] : memref<9x128xbf16, #tpu.memory_space<vmem>>, vector<1x128xbf16>
    %44 = vector.shape_cast %43 : vector<1x128xbf16> to vector<128xbf16>
    %45 = arith.extf %44 : vector<128xbf16> to vector<128xf32>
    %46 = vector.shape_cast %45 : vector<128xf32> to vector<1x1x128xf32>
    %47 = vector.broadcast %46 : vector<1x1x128xf32> to vector<8x8x128xf32>
    %48 = arith.mulf %8, %47 : vector<8x8x128xf32>
    %49 = arith.addf %42, %48 : vector<8x8x128xf32>
    %c4 = arith.constant 4 : index
    %c0_12 = arith.constant 0 : index
    %50 = vector.load %arg2[%c4, %c0_12] : memref<9x128xbf16, #tpu.memory_space<vmem>>, vector<1x128xbf16>
    %51 = vector.shape_cast %50 : vector<1x128xbf16> to vector<128xbf16>
    %52 = arith.extf %51 : vector<128xbf16> to vector<128xf32>
    %53 = vector.shape_cast %52 : vector<128xf32> to vector<1x1x128xf32>
    %54 = vector.broadcast %53 : vector<1x1x128xf32> to vector<8x8x128xf32>
    %55 = arith.mulf %2, %54 : vector<8x8x128xf32>
    %56 = arith.addf %49, %55 : vector<8x8x128xf32>
    %c5 = arith.constant 5 : index
    %c0_13 = arith.constant 0 : index
    %57 = vector.load %arg2[%c5, %c0_13] : memref<9x128xbf16, #tpu.memory_space<vmem>>, vector<1x128xbf16>
    %58 = vector.shape_cast %57 : vector<1x128xbf16> to vector<128xbf16>
    %59 = arith.extf %58 : vector<128xbf16> to vector<128xf32>
    %60 = vector.shape_cast %59 : vector<128xf32> to vector<1x1x128xf32>
    %61 = vector.broadcast %60 : vector<1x1x128xf32> to vector<8x8x128xf32>
    %62 = arith.mulf %13, %61 : vector<8x8x128xf32>
    %63 = arith.addf %56, %62 : vector<8x8x128xf32>
    %64 = vector.extract_strided_slice %8 {offsets = [1, 0, 0], sizes = [7, 8, 128], strides = [1, 1, 1]} : vector<8x8x128xf32> to vector<7x8x128xf32>
    %65 = tpu.concatenate %64, %14 in 0 : vector<7x8x128xf32>, vector<1x8x128xf32> -> vector<8x8x128xf32>
    %c6 = arith.constant 6 : index
    %c0_14 = arith.constant 0 : index
    %66 = vector.load %arg2[%c6, %c0_14] : memref<9x128xbf16, #tpu.memory_space<vmem>>, vector<1x128xbf16>
    %67 = vector.shape_cast %66 : vector<1x128xbf16> to vector<128xbf16>
    %68 = arith.extf %67 : vector<128xbf16> to vector<128xf32>
    %69 = vector.shape_cast %68 : vector<128xf32> to vector<1x1x128xf32>
    %70 = vector.broadcast %69 : vector<1x1x128xf32> to vector<8x8x128xf32>
    %71 = arith.mulf %65, %70 : vector<8x8x128xf32>
    %72 = arith.addf %63, %71 : vector<8x8x128xf32>
    %73 = vector.extract_strided_slice %2 {offsets = [1, 0, 0], sizes = [7, 8, 128], strides = [1, 1, 1]} : vector<8x8x128xf32> to vector<7x8x128xf32>
    %74 = tpu.concatenate %73, %14 in 0 : vector<7x8x128xf32>, vector<1x8x128xf32> -> vector<8x8x128xf32>
    %c7 = arith.constant 7 : index
    %c0_15 = arith.constant 0 : index
    %75 = vector.load %arg2[%c7, %c0_15] : memref<9x128xbf16, #tpu.memory_space<vmem>>, vector<1x128xbf16>
    %76 = vector.shape_cast %75 : vector<1x128xbf16> to vector<128xbf16>
    %77 = arith.extf %76 : vector<128xbf16> to vector<128xf32>
    %78 = vector.shape_cast %77 : vector<128xf32> to vector<1x1x128xf32>
    %79 = vector.broadcast %78 : vector<1x1x128xf32> to vector<8x8x128xf32>
    %80 = arith.mulf %74, %79 : vector<8x8x128xf32>
    %81 = arith.addf %72, %80 : vector<8x8x128xf32>
    %82 = vector.extract_strided_slice %13 {offsets = [1, 0, 0], sizes = [7, 8, 128], strides = [1, 1, 1]} : vector<8x8x128xf32> to vector<7x8x128xf32>
    %83 = tpu.concatenate %82, %14 in 0 : vector<7x8x128xf32>, vector<1x8x128xf32> -> vector<8x8x128xf32>
    %c8 = arith.constant 8 : index
    %c0_16 = arith.constant 0 : index
    %84 = vector.load %arg2[%c8, %c0_16] : memref<9x128xbf16, #tpu.memory_space<vmem>>, vector<1x128xbf16>
    %85 = vector.shape_cast %84 : vector<1x128xbf16> to vector<128xbf16>
    %86 = arith.extf %85 : vector<128xbf16> to vector<128xf32>
    %87 = vector.shape_cast %86 : vector<128xf32> to vector<1x1x128xf32>
    %88 = vector.broadcast %87 : vector<1x1x128xf32> to vector<8x8x128xf32>
    %89 = arith.mulf %83, %88 : vector<8x8x128xf32>
    %90 = arith.addf %81, %89 : vector<8x8x128xf32>
    %c0_17 = arith.constant 0 : index
    %c0_18 = arith.constant 0 : index
    %91 = vector.load %arg3[%c0_17, %c0_18] : memref<1x128xbf16, #tpu.memory_space<vmem>>, vector<1x128xbf16>
    %92 = vector.shape_cast %91 : vector<1x128xbf16> to vector<128xbf16>
    %93 = arith.extf %92 : vector<128xbf16> to vector<128xf32>
    %94 = vector.shape_cast %93 : vector<128xf32> to vector<1x1x128xf32>
    %95 = vector.broadcast %94 : vector<1x1x128xf32> to vector<8x8x128xf32>
    %96 = arith.addf %90, %95 : vector<8x8x128xf32>
    %97 = arith.negf %96 : vector<8x8x128xf32>
    %98 = math.exp %97 : vector<8x8x128xf32>
    %cst_19 = arith.constant 1.000000e+00 : f32
    %99 = vector.broadcast %cst_19 : f32 to vector<8x8x128xf32>
    %100 = arith.addf %99, %98 : vector<8x8x128xf32>
    %101 = arith.divf %99, %100 : vector<8x8x128xf32>
    %102 = arith.mulf %96, %101 : vector<8x8x128xf32>
    %103 = arith.truncf %102 : vector<8x8x128xf32> to vector<8x8x128xbf16>
    %c0_20 = arith.constant 0 : index
    %c0_21 = arith.constant 0 : index
    %c0_22 = arith.constant 0 : index
    %c0_23 = arith.constant 0 : index
    %104 = vector.load %arg4[%c0_20, %c0_21, %c0_22, %c0_23] : memref<1x8x8x128xbf16, #tpu.memory_space<vmem>>, vector<1x8x8x128xbf16>
    %105 = vector.shape_cast %104 : vector<1x8x8x128xbf16> to vector<8x8x128xbf16>
    %106 = vector.shape_cast %103 : vector<8x8x128xbf16> to vector<1x8x8x128xbf16>
    tpu.vector_store %arg4[%c0_20, %c0_21, %c0_22, %c0_23], %106 {strides = array<i32>} : memref<1x8x8x128xbf16, #tpu.memory_space<vmem>>, vector<1x8x8x128xbf16>,
    %cst_24 = arith.constant dense<0.000000e+00> : vector<128xf32>
    %107 = vector.multi_reduction <add>, %102, %cst_24 [0, 1] : vector<8x8x128xf32> to vector<128xf32>
    %cst_25 = arith.constant 6.400000e+01 : f32
    %108 = vector.broadcast %cst_25 : f32 to vector<128xf32>
    %109 = arith.divf %107, %108 : vector<128xf32>
    %110 = vector.shape_cast %109 : vector<128xf32> to vector<1x128xf32>
    %111 = arith.truncf %110 : vector<1x128xf32> to vector<1x128xbf16>
    %c0_26 = arith.constant 0 : index
    %c0_27 = arith.constant 0 : index
    %c0_28 = arith.constant 0 : index
    %112 = vector.load %arg5[%c0_26, %c0_27, %c0_28] : memref<1x1x128xbf16, #tpu.memory_space<vmem>>, vector<1x1x128xbf16>
    %113 = vector.shape_cast %112 : vector<1x1x128xbf16> to vector<1x128xbf16>
    %114 = vector.shape_cast %111 : vector<1x128xbf16> to vector<1x1x128xbf16>
    tpu.vector_store %arg5[%c0_26, %c0_27, %c0_28], %114 {strides = array<i32>} : memref<1x1x128xbf16, #tpu.memory_space<vmem>>, vector<1x1x128xbf16>,
    return
  }
  func.func @transform_0(%arg0: i32) -> (i32, i32, i32, i32) {
    %c0_i32 = arith.constant 0 : i32
    %c0_i32_0 = arith.constant 0 : i32
    %c0_i32_1 = arith.constant 0 : i32
    %c0_i32_2 = arith.constant 0 : i32
    return %arg0, %c0_i32, %c0_i32_0, %c0_i32_1 : i32, i32, i32, i32
  }
  func.func @transform_1(%arg0: i32) -> (i32, i32) {
    %c0_i32 = arith.constant 0 : i32
    %c0_i32_0 = arith.constant 0 : i32
    %c0_i32_1 = arith.constant 0 : i32
    return %c0_i32, %c0_i32_0 : i32, i32
  }
  func.func @transform_2(%arg0: i32) -> (i32, i32) {
    %c0_i32 = arith.constant 0 : i32
    %c0_i32_0 = arith.constant 0 : i32
    %c0_i32_1 = arith.constant 0 : i32
    return %c0_i32, %c0_i32_0 : i32, i32
  }
  func.func @transform_3(%arg0: i32) -> (i32, i32, i32, i32) {
    %c0_i32 = arith.constant 0 : i32
    %c0_i32_0 = arith.constant 0 : i32
    %c0_i32_1 = arith.constant 0 : i32
    %c0_i32_2 = arith.constant 0 : i32
    return %arg0, %c0_i32, %c0_i32_0, %c0_i32_1 : i32, i32, i32, i32
  }
  func.func @transform_4(%arg0: i32) -> (i32, i32, i32) {
    %c0_i32 = arith.constant 0 : i32
    %c0_i32_0 = arith.constant 0 : i32
    %c0_i32_1 = arith.constant 0 : i32
    return %arg0, %c0_i32, %c0_i32_0 : i32, i32, i32
  }
}

module attributes {stable_mosaic.version = 11 : i64} {
  func.func @stem_expand_kernel(%arg0: i32, %arg1: memref<128x32xbf16, #tpu.memory_space<vmem>>, %arg2: memref<32x32xbf16, #tpu.memory_space<vmem>>, %arg3: memref<1x32xbf16, #tpu.memory_space<vmem>>, %arg4: memref<32x128xbf16, #tpu.memory_space<vmem>>, %arg5: memref<1x128xbf16, #tpu.memory_space<vmem>>, %arg6: memref<128x128xbf16, #tpu.memory_space<vmem>>, %arg7: memref<128x32xbf16, #tpu.memory_space<vmem>>) attributes {dimension_semantics = [#tpu.dimension_semantics<parallel>], iteration_bounds = array<i64: 1>, scalar_prefetch = 0 : i64, scratch_operands = 0 : i64, tpu.core_type = #tpu.core_type<tc>, window_params = [{transform_indices = @transform_0, window_bounds = array<i64: 128, 32>}, {pipeline_mode = #tpu.pipeline_mode<synchronous>, transform_indices = @transform_1, window_bounds = array<i64: 32, 32>}, {pipeline_mode = #tpu.pipeline_mode<synchronous>, transform_indices = @transform_2, window_bounds = array<i64: 1, 32>}, {pipeline_mode = #tpu.pipeline_mode<synchronous>, transform_indices = @transform_3, window_bounds = array<i64: 32, 128>}, {pipeline_mode = #tpu.pipeline_mode<synchronous>, transform_indices = @transform_4, window_bounds = array<i64: 1, 128>}, {transform_indices = @transform_5, window_bounds = array<i64: 128, 128>}, {transform_indices = @transform_6, window_bounds = array<i64: 128, 32>}]} {
    %c0 = arith.constant 0 : index
    %c0_0 = arith.constant 0 : index
    %0 = vector.load %arg1[%c0, %c0_0] : memref<128x32xbf16, #tpu.memory_space<vmem>>, vector<128x32xbf16>
    %c0_1 = arith.constant 0 : index
    %c0_2 = arith.constant 0 : index
    %1 = vector.load %arg2[%c0_1, %c0_2] : memref<32x32xbf16, #tpu.memory_space<vmem>>, vector<32x32xbf16>
    %cst = arith.constant dense<0.000000e+00> : vector<128x32xf32>
    %2 = tpu.matmul %0, %1, %cst {dimension_numbers = #tpu.dot_dimension_numbers<[1], [0], [0], [1], [0, 0, 1, 1], [], []>} : vector<128x32xbf16>, vector<32x32xbf16>, vector<128x32xf32> -> vector<128x32xf32>
    %c0_3 = arith.constant 0 : index
    %c0_4 = arith.constant 0 : index
    %3 = vector.load %arg3[%c0_3, %c0_4] : memref<1x32xbf16, #tpu.memory_space<vmem>>, vector<1x32xbf16>
    %4 = arith.extf %3 : vector<1x32xbf16> to vector<1x32xf32>
    %5 = vector.broadcast %4 : vector<1x32xf32> to vector<128x32xf32>
    %6 = arith.addf %2, %5 : vector<128x32xf32>
    %7 = arith.negf %6 : vector<128x32xf32>
    %8 = math.exp %7 : vector<128x32xf32>
    %cst_5 = arith.constant 1.000000e+00 : f32
    %9 = vector.broadcast %cst_5 : f32 to vector<128x32xf32>
    %10 = arith.addf %9, %8 : vector<128x32xf32>
    %11 = arith.divf %9, %10 : vector<128x32xf32>
    %12 = arith.mulf %6, %11 : vector<128x32xf32>
    %13 = arith.truncf %12 : vector<128x32xf32> to vector<128x32xbf16>
    %c0_6 = arith.constant 0 : index
    %c0_7 = arith.constant 0 : index
    %14 = vector.load %arg7[%c0_6, %c0_7] : memref<128x32xbf16, #tpu.memory_space<vmem>>, vector<128x32xbf16>
    tpu.vector_store %arg7[%c0_6, %c0_7], %13 {strides = array<i32>} : memref<128x32xbf16, #tpu.memory_space<vmem>>, vector<128x32xbf16>,
    %c0_8 = arith.constant 0 : index
    %c0_9 = arith.constant 0 : index
    %15 = vector.load %arg4[%c0_8, %c0_9] : memref<32x128xbf16, #tpu.memory_space<vmem>>, vector<32x128xbf16>
    %cst_10 = arith.constant dense<0.000000e+00> : vector<128x128xf32>
    %16 = tpu.matmul %13, %15, %cst_10 {dimension_numbers = #tpu.dot_dimension_numbers<[1], [0], [0], [1], [0, 0, 1, 1], [], []>} : vector<128x32xbf16>, vector<32x128xbf16>, vector<128x128xf32> -> vector<128x128xf32>
    %c0_11 = arith.constant 0 : index
    %c0_12 = arith.constant 0 : index
    %17 = vector.load %arg5[%c0_11, %c0_12] : memref<1x128xbf16, #tpu.memory_space<vmem>>, vector<1x128xbf16>
    %18 = arith.extf %17 : vector<1x128xbf16> to vector<1x128xf32>
    %19 = vector.broadcast %18 : vector<1x128xf32> to vector<128x128xf32>
    %20 = arith.addf %16, %19 : vector<128x128xf32>
    %21 = arith.negf %20 : vector<128x128xf32>
    %22 = math.exp %21 : vector<128x128xf32>
    %cst_13 = arith.constant 1.000000e+00 : f32
    %23 = vector.broadcast %cst_13 : f32 to vector<128x128xf32>
    %24 = arith.addf %23, %22 : vector<128x128xf32>
    %25 = arith.divf %23, %24 : vector<128x128xf32>
    %26 = arith.mulf %20, %25 : vector<128x128xf32>
    %27 = arith.truncf %26 : vector<128x128xf32> to vector<128x128xbf16>
    %c0_14 = arith.constant 0 : index
    %c0_15 = arith.constant 0 : index
    %28 = vector.load %arg6[%c0_14, %c0_15] : memref<128x128xbf16, #tpu.memory_space<vmem>>, vector<128x128xbf16>
    tpu.vector_store %arg6[%c0_14, %c0_15], %27 {strides = array<i32>} : memref<128x128xbf16, #tpu.memory_space<vmem>>, vector<128x128xbf16>,
    return
  }
  func.func @transform_0(%arg0: i32) -> (i32, i32) {
    %c0_i32 = arith.constant 0 : i32
    %c0_i32_0 = arith.constant 0 : i32
    return %arg0, %c0_i32 : i32, i32
  }
  func.func @transform_1(%arg0: i32) -> (i32, i32) {
    %c0_i32 = arith.constant 0 : i32
    %c0_i32_0 = arith.constant 0 : i32
    %c0_i32_1 = arith.constant 0 : i32
    return %c0_i32, %c0_i32_0 : i32, i32
  }
  func.func @transform_2(%arg0: i32) -> (i32, i32) {
    %c0_i32 = arith.constant 0 : i32
    %c0_i32_0 = arith.constant 0 : i32
    %c0_i32_1 = arith.constant 0 : i32
    return %c0_i32, %c0_i32_0 : i32, i32
  }
  func.func @transform_3(%arg0: i32) -> (i32, i32) {
    %c0_i32 = arith.constant 0 : i32
    %c0_i32_0 = arith.constant 0 : i32
    %c0_i32_1 = arith.constant 0 : i32
    return %c0_i32, %c0_i32_0 : i32, i32
  }
  func.func @transform_4(%arg0: i32) -> (i32, i32) {
    %c0_i32 = arith.constant 0 : i32
    %c0_i32_0 = arith.constant 0 : i32
    %c0_i32_1 = arith.constant 0 : i32
    return %c0_i32, %c0_i32_0 : i32, i32
  }
  func.func @transform_5(%arg0: i32) -> (i32, i32) {
    %c0_i32 = arith.constant 0 : i32
    %c0_i32_0 = arith.constant 0 : i32
    return %arg0, %c0_i32 : i32, i32
  }
  func.func @transform_6(%arg0: i32) -> (i32, i32) {
    %c0_i32 = arith.constant 0 : i32
    %c0_i32_0 = arith.constant 0 : i32
    return %arg0, %c0_i32 : i32, i32
  }
}

module attributes {stable_mosaic.version = 11 : i64} {
  func.func @se_mlp_kernel(%arg0: i32, %arg1: memref<2x128xbf16, #tpu.memory_space<vmem>>, %arg2: memref<128x32xbf16, #tpu.memory_space<vmem>>, %arg3: memref<1x32xbf16, #tpu.memory_space<vmem>>, %arg4: memref<32x128xbf16, #tpu.memory_space<vmem>>, %arg5: memref<1x128xbf16, #tpu.memory_space<vmem>>, %arg6: memref<2x128xbf16, #tpu.memory_space<vmem>>) attributes {dimension_semantics = [#tpu.dimension_semantics<arbitrary>], iteration_bounds = array<i64: 1>, scalar_prefetch = 0 : i64, scratch_operands = 0 : i64, tpu.core_type = #tpu.core_type<tc>, window_params = [{pipeline_mode = #tpu.pipeline_mode<synchronous>, transform_indices = @transform_0, window_bounds = array<i64: 2, 128>}, {pipeline_mode = #tpu.pipeline_mode<synchronous>, transform_indices = @transform_1, window_bounds = array<i64: 128, 32>}, {pipeline_mode = #tpu.pipeline_mode<synchronous>, transform_indices = @transform_2, window_bounds = array<i64: 1, 32>}, {pipeline_mode = #tpu.pipeline_mode<synchronous>, transform_indices = @transform_3, window_bounds = array<i64: 32, 128>}, {pipeline_mode = #tpu.pipeline_mode<synchronous>, transform_indices = @transform_4, window_bounds = array<i64: 1, 128>}, {pipeline_mode = #tpu.pipeline_mode<synchronous>, transform_indices = @transform_5, window_bounds = array<i64: 2, 128>}]} {
    %c0 = arith.constant 0 : index
    %c0_0 = arith.constant 0 : index
    %0 = vector.load %arg1[%c0, %c0_0] : memref<2x128xbf16, #tpu.memory_space<vmem>>, vector<2x128xbf16>
    %c0_1 = arith.constant 0 : index
    %c0_2 = arith.constant 0 : index
    %1 = vector.load %arg2[%c0_1, %c0_2] : memref<128x32xbf16, #tpu.memory_space<vmem>>, vector<128x32xbf16>
    %cst = arith.constant dense<0.000000e+00> : vector<2x32xf32>
    %2 = tpu.matmul %0, %1, %cst {dimension_numbers = #tpu.dot_dimension_numbers<[1], [0], [0], [1], [0, 0, 1, 1], [], []>} : vector<2x128xbf16>, vector<128x32xbf16>, vector<2x32xf32> -> vector<2x32xf32>
    %c0_3 = arith.constant 0 : index
    %c0_4 = arith.constant 0 : index
    %3 = vector.load %arg3[%c0_3, %c0_4] : memref<1x32xbf16, #tpu.memory_space<vmem>>, vector<1x32xbf16>
    %4 = arith.extf %3 : vector<1x32xbf16> to vector<1x32xf32>
    %5 = vector.broadcast %4 : vector<1x32xf32> to vector<2x32xf32>
    %6 = arith.addf %2, %5 : vector<2x32xf32>
    %7 = arith.negf %6 : vector<2x32xf32>
    %8 = math.exp %7 : vector<2x32xf32>
    %cst_5 = arith.constant 1.000000e+00 : f32
    %9 = vector.broadcast %cst_5 : f32 to vector<2x32xf32>
    %10 = arith.addf %9, %8 : vector<2x32xf32>
    %11 = arith.divf %9, %10 : vector<2x32xf32>
    %12 = arith.mulf %6, %11 : vector<2x32xf32>
    %13 = arith.truncf %12 : vector<2x32xf32> to vector<2x32xbf16>
    %c0_6 = arith.constant 0 : index
    %c0_7 = arith.constant 0 : index
    %14 = vector.load %arg4[%c0_6, %c0_7] : memref<32x128xbf16, #tpu.memory_space<vmem>>, vector<32x128xbf16>
    %cst_8 = arith.constant dense<0.000000e+00> : vector<2x128xf32>
    %15 = tpu.matmul %13, %14, %cst_8 {dimension_numbers = #tpu.dot_dimension_numbers<[1], [0], [0], [1], [0, 0, 1, 1], [], []>} : vector<2x32xbf16>, vector<32x128xbf16>, vector<2x128xf32> -> vector<2x128xf32>
    %c0_9 = arith.constant 0 : index
    %c0_10 = arith.constant 0 : index
    %16 = vector.load %arg5[%c0_9, %c0_10] : memref<1x128xbf16, #tpu.memory_space<vmem>>, vector<1x128xbf16>
    %17 = arith.extf %16 : vector<1x128xbf16> to vector<1x128xf32>
    %18 = vector.broadcast %17 : vector<1x128xf32> to vector<2x128xf32>
    %19 = arith.addf %15, %18 : vector<2x128xf32>
    %20 = arith.negf %19 : vector<2x128xf32>
    %21 = math.exp %20 : vector<2x128xf32>
    %cst_11 = arith.constant 1.000000e+00 : f32
    %22 = vector.broadcast %cst_11 : f32 to vector<2x128xf32>
    %23 = arith.addf %22, %21 : vector<2x128xf32>
    %24 = arith.divf %22, %23 : vector<2x128xf32>
    %25 = arith.truncf %24 : vector<2x128xf32> to vector<2x128xbf16>
    %c0_12 = arith.constant 0 : index
    %c0_13 = arith.constant 0 : index
    %26 = vector.load %arg6[%c0_12, %c0_13] : memref<2x128xbf16, #tpu.memory_space<vmem>>, vector<2x128xbf16>
    tpu.vector_store %arg6[%c0_12, %c0_13], %25 {strides = array<i32>} : memref<2x128xbf16, #tpu.memory_space<vmem>>, vector<2x128xbf16>,
    return
  }
  func.func @transform_0(%arg0: i32) -> (i32, i32) {
    %c0_i32 = arith.constant 0 : i32
    %c0_i32_0 = arith.constant 0 : i32
    %c0_i32_1 = arith.constant 0 : i32
    return %c0_i32, %c0_i32_0 : i32, i32
  }
  func.func @transform_1(%arg0: i32) -> (i32, i32) {
    %c0_i32 = arith.constant 0 : i32
    %c0_i32_0 = arith.constant 0 : i32
    %c0_i32_1 = arith.constant 0 : i32
    return %c0_i32, %c0_i32_0 : i32, i32
  }
  func.func @transform_2(%arg0: i32) -> (i32, i32) {
    %c0_i32 = arith.constant 0 : i32
    %c0_i32_0 = arith.constant 0 : i32
    %c0_i32_1 = arith.constant 0 : i32
    return %c0_i32, %c0_i32_0 : i32, i32
  }
  func.func @transform_3(%arg0: i32) -> (i32, i32) {
    %c0_i32 = arith.constant 0 : i32
    %c0_i32_0 = arith.constant 0 : i32
    %c0_i32_1 = arith.constant 0 : i32
    return %c0_i32, %c0_i32_0 : i32, i32
  }
  func.func @transform_4(%arg0: i32) -> (i32, i32) {
    %c0_i32 = arith.constant 0 : i32
    %c0_i32_0 = arith.constant 0 : i32
    %c0_i32_1 = arith.constant 0 : i32
    return %c0_i32, %c0_i32_0 : i32, i32
  }
  func.func @transform_5(%arg0: i32) -> (i32, i32) {
    %c0_i32 = arith.constant 0 : i32
    %c0_i32_0 = arith.constant 0 : i32
    %c0_i32_1 = arith.constant 0 : i32
    return %c0_i32, %c0_i32_0 : i32, i32
  }
}

module attributes {stable_mosaic.version = 11 : i64} {
  func.func @proj_head_pool_kernel(%arg0: i32, %arg1: i32, %arg2: memref<1x64x128xbf16, #tpu.memory_space<vmem>>, %arg3: memref<1x1x128xbf16, #tpu.memory_space<vmem>>, %arg4: memref<128x32xbf16, #tpu.memory_space<vmem>>, %arg5: memref<1x32xbf16, #tpu.memory_space<vmem>>, %arg6: memref<1x64x32xbf16, #tpu.memory_space<vmem>>, %arg7: memref<32x1280xbf16, #tpu.memory_space<vmem>>, %arg8: memref<1x1280xbf16, #tpu.memory_space<vmem>>, %arg9: memref<1x1x1280xbf16, #tpu.memory_space<vmem>>, %arg10: memref<1x1280xf32, #tpu.memory_space<vmem>>) attributes {dimension_semantics = [#tpu.dimension_semantics<parallel>, #tpu.dimension_semantics<arbitrary>], iteration_bounds = array<i64: 2, 1>, scalar_prefetch = 0 : i64, scratch_operands = 1 : i64, tpu.core_type = #tpu.core_type<tc>, window_params = [{transform_indices = @transform_0, window_bounds = array<i64: 1, 64, 128>}, {transform_indices = @transform_1, window_bounds = array<i64: 1, 1, 128>}, {pipeline_mode = #tpu.pipeline_mode<synchronous>, transform_indices = @transform_2, window_bounds = array<i64: 128, 32>}, {pipeline_mode = #tpu.pipeline_mode<synchronous>, transform_indices = @transform_3, window_bounds = array<i64: 1, 32>}, {transform_indices = @transform_4, window_bounds = array<i64: 1, 64, 32>}, {pipeline_mode = #tpu.pipeline_mode<synchronous>, transform_indices = @transform_5, window_bounds = array<i64: 32, 1280>}, {pipeline_mode = #tpu.pipeline_mode<synchronous>, transform_indices = @transform_6, window_bounds = array<i64: 1, 1280>}, {transform_indices = @transform_7, window_bounds = array<i64: 1, 1, 1280>}]} {
    %c0_i32 = arith.constant 0 : i32
    %0 = arith.cmpi eq, %arg1, %c0_i32 : i32
    %1 = arith.extui %0 : i1 to i32
    %c0_i32_0 = arith.constant 0 : i32
    %2 = arith.cmpi ne, %1, %c0_i32_0 : i32
    scf.if %2 {
      %cst_26 = arith.constant 0.000000e+00 : f32
      %43 = vector.broadcast %cst_26 : f32 to vector<1x1280xf32>
      %c0_27 = arith.constant 0 : index
      %c0_28 = arith.constant 0 : index
      %44 = vector.load %arg10[%c0_27, %c0_28] : memref<1x1280xf32, #tpu.memory_space<vmem>>, vector<1x1280xf32>
      tpu.vector_store %arg10[%c0_27, %c0_28], %43 {strides = array<i32>} : memref<1x1280xf32, #tpu.memory_space<vmem>>, vector<1x1280xf32>,
    } else {
    }
    %c0 = arith.constant 0 : index
    %c0_1 = arith.constant 0 : index
    %c0_2 = arith.constant 0 : index
    %3 = vector.load %arg2[%c0, %c0_1, %c0_2] : memref<1x64x128xbf16, #tpu.memory_space<vmem>>, vector<1x64x128xbf16>
    %4 = vector.shape_cast %3 : vector<1x64x128xbf16> to vector<64x128xbf16>
    %5 = arith.extf %4 : vector<64x128xbf16> to vector<64x128xf32>
    %c0_3 = arith.constant 0 : index
    %c0_4 = arith.constant 0 : index
    %c0_5 = arith.constant 0 : index
    %6 = vector.load %arg3[%c0_3, %c0_4, %c0_5] : memref<1x1x128xbf16, #tpu.memory_space<vmem>>, vector<1x1x128xbf16>
    %7 = vector.shape_cast %6 : vector<1x1x128xbf16> to vector<1x128xbf16>
    %8 = arith.extf %7 : vector<1x128xbf16> to vector<1x128xf32>
    %9 = vector.broadcast %8 : vector<1x128xf32> to vector<64x128xf32>
    %10 = arith.mulf %5, %9 : vector<64x128xf32>
    %11 = arith.truncf %10 : vector<64x128xf32> to vector<64x128xbf16>
    %c0_6 = arith.constant 0 : index
    %c0_7 = arith.constant 0 : index
    %12 = vector.load %arg4[%c0_6, %c0_7] : memref<128x32xbf16, #tpu.memory_space<vmem>>, vector<128x32xbf16>
    %cst = arith.constant dense<0.000000e+00> : vector<64x32xf32>
    %13 = tpu.matmul %11, %12, %cst {dimension_numbers = #tpu.dot_dimension_numbers<[1], [0], [0], [1], [0, 0, 1, 1], [], []>} : vector<64x128xbf16>, vector<128x32xbf16>, vector<64x32xf32> -> vector<64x32xf32>
    %c0_8 = arith.constant 0 : index
    %c0_9 = arith.constant 0 : index
    %14 = vector.load %arg5[%c0_8, %c0_9] : memref<1x32xbf16, #tpu.memory_space<vmem>>, vector<1x32xbf16>
    %15 = arith.extf %14 : vector<1x32xbf16> to vector<1x32xf32>
    %16 = vector.broadcast %15 : vector<1x32xf32> to vector<64x32xf32>
    %17 = arith.addf %13, %16 : vector<64x32xf32>
    %c0_10 = arith.constant 0 : index
    %c0_11 = arith.constant 0 : index
    %c0_12 = arith.constant 0 : index
    %18 = vector.load %arg6[%c0_10, %c0_11, %c0_12] : memref<1x64x32xbf16, #tpu.memory_space<vmem>>, vector<1x64x32xbf16>
    %19 = vector.shape_cast %18 : vector<1x64x32xbf16> to vector<64x32xbf16>
    %20 = arith.extf %19 : vector<64x32xbf16> to vector<64x32xf32>
    %21 = arith.addf %17, %20 : vector<64x32xf32>
    %22 = arith.truncf %21 : vector<64x32xf32> to vector<64x32xbf16>
    %c0_13 = arith.constant 0 : index
    %c0_14 = arith.constant 0 : index
    %23 = vector.load %arg7[%c0_13, %c0_14] : memref<32x1280xbf16, #tpu.memory_space<vmem>>, vector<32x1280xbf16>
    %cst_15 = arith.constant dense<0.000000e+00> : vector<64x1280xf32>
    %24 = tpu.matmul %22, %23, %cst_15 {dimension_numbers = #tpu.dot_dimension_numbers<[1], [0], [0], [1], [0, 0, 1, 1], [], []>} : vector<64x32xbf16>, vector<32x1280xbf16>, vector<64x1280xf32> -> vector<64x1280xf32>
    %c0_16 = arith.constant 0 : index
    %c0_17 = arith.constant 0 : index
    %25 = vector.load %arg8[%c0_16, %c0_17] : memref<1x1280xbf16, #tpu.memory_space<vmem>>, vector<1x1280xbf16>
    %26 = arith.extf %25 : vector<1x1280xbf16> to vector<1x1280xf32>
    %27 = vector.broadcast %26 : vector<1x1280xf32> to vector<64x1280xf32>
    %28 = arith.addf %24, %27 : vector<64x1280xf32>
    %29 = arith.negf %28 : vector<64x1280xf32>
    %30 = math.exp %29 : vector<64x1280xf32>
    %cst_18 = arith.constant 1.000000e+00 : f32
    %31 = vector.broadcast %cst_18 : f32 to vector<64x1280xf32>
    %32 = arith.addf %31, %30 : vector<64x1280xf32>
    %33 = arith.divf %31, %32 : vector<64x1280xf32>
    %34 = arith.mulf %28, %33 : vector<64x1280xf32>
    %c0_19 = arith.constant 0 : index
    %c0_20 = arith.constant 0 : index
    %35 = vector.load %arg10[%c0_19, %c0_20] : memref<1x1280xf32, #tpu.memory_space<vmem>>, vector<1x1280xf32>
    %cst_21 = arith.constant dense<0.000000e+00> : vector<1280xf32>
    %36 = vector.multi_reduction <add>, %34, %cst_21 [0] : vector<64x1280xf32> to vector<1280xf32>
    %37 = vector.shape_cast %36 : vector<1280xf32> to vector<1x1280xf32>
    %38 = arith.addf %35, %37 : vector<1x1280xf32>
    %c0_22 = arith.constant 0 : index
    %c0_23 = arith.constant 0 : index
    %39 = vector.load %arg10[%c0_22, %c0_23] : memref<1x1280xf32, #tpu.memory_space<vmem>>, vector<1x1280xf32>
    tpu.vector_store %arg10[%c0_22, %c0_23], %38 {strides = array<i32>} : memref<1x1280xf32, #tpu.memory_space<vmem>>, vector<1x1280xf32>,
    %c0_i32_24 = arith.constant 0 : i32
    %40 = arith.cmpi eq, %arg1, %c0_i32_24 : i32
    %41 = arith.extui %40 : i1 to i32
    %c0_i32_25 = arith.constant 0 : i32
    %42 = arith.cmpi ne, %41, %c0_i32_25 : i32
    scf.if %42 {
      %c0_26 = arith.constant 0 : index
      %c0_27 = arith.constant 0 : index
      %43 = vector.load %arg10[%c0_26, %c0_27] : memref<1x1280xf32, #tpu.memory_space<vmem>>, vector<1x1280xf32>
      %cst_28 = arith.constant 1.562500e-02 : f32
      %44 = vector.broadcast %cst_28 : f32 to vector<1x1280xf32>
      %45 = arith.mulf %43, %44 : vector<1x1280xf32>
      %46 = arith.truncf %45 : vector<1x1280xf32> to vector<1x1280xbf16>
      %c0_29 = arith.constant 0 : index
      %c0_30 = arith.constant 0 : index
      %c0_31 = arith.constant 0 : index
      %47 = vector.load %arg9[%c0_29, %c0_30, %c0_31] : memref<1x1x1280xbf16, #tpu.memory_space<vmem>>, vector<1x1x1280xbf16>
      %48 = vector.shape_cast %47 : vector<1x1x1280xbf16> to vector<1x1280xbf16>
      %49 = vector.shape_cast %46 : vector<1x1280xbf16> to vector<1x1x1280xbf16>
      tpu.vector_store %arg9[%c0_29, %c0_30, %c0_31], %49 {strides = array<i32>} : memref<1x1x1280xbf16, #tpu.memory_space<vmem>>, vector<1x1x1280xbf16>,
    } else {
    }
    return
  }
  func.func @transform_0(%arg0: i32, %arg1: i32) -> (i32, i32, i32) {
    %c0_i32 = arith.constant 0 : i32
    %c0_i32_0 = arith.constant 0 : i32
    return %arg0, %arg1, %c0_i32 : i32, i32, i32
  }
  func.func @transform_1(%arg0: i32, %arg1: i32) -> (i32, i32, i32) {
    %c0_i32 = arith.constant 0 : i32
    %c0_i32_0 = arith.constant 0 : i32
    %c0_i32_1 = arith.constant 0 : i32
    return %arg0, %c0_i32, %c0_i32_0 : i32, i32, i32
  }
  func.func @transform_2(%arg0: i32, %arg1: i32) -> (i32, i32) {
    %c0_i32 = arith.constant 0 : i32
    %c0_i32_0 = arith.constant 0 : i32
    %c0_i32_1 = arith.constant 0 : i32
    return %c0_i32, %c0_i32_0 : i32, i32
  }
  func.func @transform_3(%arg0: i32, %arg1: i32) -> (i32, i32) {
    %c0_i32 = arith.constant 0 : i32
    %c0_i32_0 = arith.constant 0 : i32
    %c0_i32_1 = arith.constant 0 : i32
    return %c0_i32, %c0_i32_0 : i32, i32
  }
  func.func @transform_4(%arg0: i32, %arg1: i32) -> (i32, i32, i32) {
    %c0_i32 = arith.constant 0 : i32
    %c0_i32_0 = arith.constant 0 : i32
    return %arg0, %arg1, %c0_i32 : i32, i32, i32
  }
  func.func @transform_5(%arg0: i32, %arg1: i32) -> (i32, i32) {
    %c0_i32 = arith.constant 0 : i32
    %c0_i32_0 = arith.constant 0 : i32
    %c0_i32_1 = arith.constant 0 : i32
    return %c0_i32, %c0_i32_0 : i32, i32
  }
  func.func @transform_6(%arg0: i32, %arg1: i32) -> (i32, i32) {
    %c0_i32 = arith.constant 0 : i32
    %c0_i32_0 = arith.constant 0 : i32
    %c0_i32_1 = arith.constant 0 : i32
    return %c0_i32, %c0_i32_0 : i32, i32
  }
  func.func @transform_7(%arg0: i32, %arg1: i32) -> (i32, i32, i32) {
    %c0_i32 = arith.constant 0 : i32
    %c0_i32_0 = arith.constant 0 : i32
    %c0_i32_1 = arith.constant 0 : i32
    return %arg0, %c0_i32, %c0_i32_0 : i32, i32, i32
  }
}

module attributes {stable_mosaic.version = 11 : i64} {
  func.func @classifier_kernel(%arg0: i32, %arg1: memref<2x1280xbf16, #tpu.memory_space<vmem>>, %arg2: memref<1280x128xbf16, #tpu.memory_space<vmem>>, %arg3: memref<1x128xbf16, #tpu.memory_space<vmem>>, %arg4: memref<2x128xf32, #tpu.memory_space<vmem>>) attributes {dimension_semantics = [#tpu.dimension_semantics<arbitrary>], iteration_bounds = array<i64: 1>, scalar_prefetch = 0 : i64, scratch_operands = 0 : i64, tpu.core_type = #tpu.core_type<tc>, window_params = [{pipeline_mode = #tpu.pipeline_mode<synchronous>, transform_indices = @transform_0, window_bounds = array<i64: 2, 1280>}, {pipeline_mode = #tpu.pipeline_mode<synchronous>, transform_indices = @transform_1, window_bounds = array<i64: 1280, 128>}, {pipeline_mode = #tpu.pipeline_mode<synchronous>, transform_indices = @transform_2, window_bounds = array<i64: 1, 128>}, {pipeline_mode = #tpu.pipeline_mode<synchronous>, transform_indices = @transform_3, window_bounds = array<i64: 2, 128>}]} {
    %c0 = arith.constant 0 : index
    %c0_0 = arith.constant 0 : index
    %0 = vector.load %arg1[%c0, %c0_0] : memref<2x1280xbf16, #tpu.memory_space<vmem>>, vector<2x1280xbf16>
    %c0_1 = arith.constant 0 : index
    %c0_2 = arith.constant 0 : index
    %1 = vector.load %arg2[%c0_1, %c0_2] : memref<1280x128xbf16, #tpu.memory_space<vmem>>, vector<1280x128xbf16>
    %cst = arith.constant dense<0.000000e+00> : vector<2x128xf32>
    %2 = tpu.matmul %0, %1, %cst {dimension_numbers = #tpu.dot_dimension_numbers<[1], [0], [0], [1], [0, 0, 1, 1], [], []>} : vector<2x1280xbf16>, vector<1280x128xbf16>, vector<2x128xf32> -> vector<2x128xf32>
    %c0_3 = arith.constant 0 : index
    %c0_4 = arith.constant 0 : index
    %3 = vector.load %arg3[%c0_3, %c0_4] : memref<1x128xbf16, #tpu.memory_space<vmem>>, vector<1x128xbf16>
    %4 = arith.extf %3 : vector<1x128xbf16> to vector<1x128xf32>
    %5 = vector.broadcast %4 : vector<1x128xf32> to vector<2x128xf32>
    %6 = arith.addf %2, %5 : vector<2x128xf32>
    %c0_5 = arith.constant 0 : index
    %c0_6 = arith.constant 0 : index
    %7 = vector.load %arg4[%c0_5, %c0_6] : memref<2x128xf32, #tpu.memory_space<vmem>>, vector<2x128xf32>
    tpu.vector_store %arg4[%c0_5, %c0_6], %6 {strides = array<i32>} : memref<2x128xf32, #tpu.memory_space<vmem>>, vector<2x128xf32>,
    return
  }
  func.func @transform_0(%arg0: i32) -> (i32, i32) {
    %c0_i32 = arith.constant 0 : i32
    %c0_i32_0 = arith.constant 0 : i32
    %c0_i32_1 = arith.constant 0 : i32
    return %c0_i32, %c0_i32_0 : i32, i32
  }
  func.func @transform_1(%arg0: i32) -> (i32, i32) {
    %c0_i32 = arith.constant 0 : i32
    %c0_i32_0 = arith.constant 0 : i32
    %c0_i32_1 = arith.constant 0 : i32
    return %c0_i32, %c0_i32_0 : i32, i32
  }
  func.func @transform_2(%arg0: i32) -> (i32, i32) {
    %c0_i32 = arith.constant 0 : i32
    %c0_i32_0 = arith.constant 0 : i32
    %c0_i32_1 = arith.constant 0 : i32
    return %c0_i32, %c0_i32_0 : i32, i32
  }
  func.func @transform_3(%arg0: i32) -> (i32, i32) {
    %c0_i32 = arith.constant 0 : i32
    %c0_i32_0 = arith.constant 0 : i32
    %c0_i32_1 = arith.constant 0 : i32
    return %c0_i32, %c0_i32_0 : i32, i32
  }
}

</mosaic_0001>

<llo_original>
// kernel: efficientnet_forward.7
$region0: #{efficientnet_forward.7}
  #allocation0 [shape = 'u32[]', space=smem, size = 0x4, offset = 0x4, fixed_abs, tag = 'smem constant byte address 0x4 - core index']
  #allocation1 [shape = 'u32[144,128]{1,0:T(1,128)}', space=vmem, size = 0x12000, scoped, tag = 'internal scratch']
  %s0 = inlined_call_operand.vmem [shape: bf16[2,128], index: 0, kind: input, shape index: {}]
  %s1 = inlined_call_operand.vmem [shape: bf16[128,32], index: 1, kind: input, shape index: {}]
  %s2 = inlined_call_operand.vmem [shape: bf16[1,32], index: 2, kind: input, shape index: {}]
  %s3 = inlined_call_operand.vmem [shape: bf16[32,128], index: 3, kind: input, shape index: {}]
  %s4 = inlined_call_operand.vmem [shape: bf16[1,128], index: 4, kind: input, shape index: {}]
  %s5 = inlined_call_operand.vmem [shape: bf16[2,128], index: 5, kind: output, shape index: {}]
  %s6 = sld [smem:[#allocation0]]
  $region30: #{efficientnet_forward.7} parent=0
    _
  %s8 = ssub.s32 1, %s6
  %s9 = scalar_select 0, %s8, %s6
  // Predicated region
  $region2: #{efficientnet_forward.7} parent=0 // pred_check
    _
  $region3: #{efficientnet_forward.7} parent=0 // pred_check_branch
    %11 = sbr.rel (0) target = $region5
  $region4: #{efficientnet_forward.7} parent=0 // pred_region
    _
  $region5: #{efficientnet_forward.7} parent=0 // pred_fallthru
    _
  // Predicated region
  $region6: #{efficientnet_forward.7} parent=0 // pred_check
    _
  $region7: #{efficientnet_forward.7} parent=0 // pred_check_branch
    %13 = sbr.rel (0) target = $region9
  $region8: #{efficientnet_forward.7} parent=0 // pred_region
    _
  $region9: #{efficientnet_forward.7} parent=0 // pred_fallthru
    _
  // Predicated region
  $region10: #{efficientnet_forward.7} parent=0 // pred_check
    _
  $region11: #{efficientnet_forward.7} parent=0 // pred_check_branch
    %15 = sbr.rel (0) target = $region13
  $region12: #{efficientnet_forward.7} parent=0 // pred_region
    _
  $region13: #{efficientnet_forward.7} parent=0 // pred_fallthru
    _
  // Predicated region
  $region14: #{efficientnet_forward.7} parent=0 // pred_check
    _
  $region15: #{efficientnet_forward.7} parent=0 // pred_check_branch
    %17 = sbr.rel (0) target = $region17
  $region16: #{efficientnet_forward.7} parent=0 // pred_region
    _
  $region17: #{efficientnet_forward.7} parent=0 // pred_fallthru
    _
  // Predicated region
  $region18: #{efficientnet_forward.7} parent=0 // pred_check
    _
  $region19: #{efficientnet_forward.7} parent=0 // pred_check_branch
    %19 = sbr.rel (0) target = $region21
  $region20: #{efficientnet_forward.7} parent=0 // pred_region
    _
  $region21: #{efficientnet_forward.7} parent=0 // pred_fallthru
    _
  %v21 = vld [vmem:[%s0] sm:$0x1]
  %v22 = vld [vmem:[%s1] sm:$0xf]
  %v23 = vld [vmem:[%s1 + $0x4] sm:$0xf]
  %v24 = vld [vmem:[%s1 + $0x8] sm:$0xf]
  %v25 = vld [vmem:[%s1 + $0xc] sm:$0xf]
  %v26 = vld [vmem:[%s1 + $0x10] sm:$0xf]
  %v27 = vld [vmem:[%s1 + $0x14] sm:$0xf]
  %v28 = vld [vmem:[%s1 + $0x18] sm:$0xf]
  %v29 = vld [vmem:[%s1 + $0x1c] sm:$0xf]
  %v30 = vld [vmem:[%s1 + $0x20] sm:$0xf]
  %v31 = vld [vmem:[%s1 + $0x24] sm:$0xf]
  %v32 = vld [vmem:[%s1 + $0x28] sm:$0xf]
  %v33 = vld [vmem:[%s1 + $0x2c] sm:$0xf]
  %v34 = vld [vmem:[%s1 + $0x30] sm:$0xf]
  %v35 = vld [vmem:[%s1 + $0x34] sm:$0xf]
  %v36 = vld [vmem:[%s1 + $0x38] sm:$0xf]
  %v37 = vld [vmem:[%s1 + $0x3c] sm:$0xf]
  %v38 = vld [vmem:[%s2] sm:$0x1]
  %v39 = vunpack.c.l.bf16 %v38
  %v40 = vlaneseq
  %v41 = vshrl.u32 %v40, 7
  %v42 = vsub.s32 0, %v41
  %v43 = vrot.slane %v39, %v42
  %v60 = vunpack.c.l.b16 %v22
  %v61 = vunpack.c.l.b16 %v23
  %v62 = vunpack.c.l.b16 %v24
  %v63 = vunpack.c.l.b16 %v25
  %v64 = vunpack.c.l.b16 %v26
  %v65 = vunpack.c.l.b16 %v27
  %v66 = vunpack.c.l.b16 %v28
  %v67 = vunpack.c.l.b16 %v29
  %v68 = vunpack.c.l.b16 %v30
  %v69 = vunpack.c.l.b16 %v31
  %v70 = vunpack.c.l.b16 %v32
  %v71 = vunpack.c.l.b16 %v33
  %v72 = vunpack.c.l.b16 %v34
  %v73 = vunpack.c.l.b16 %v35
  %v74 = vunpack.c.l.b16 %v36
  %v75 = vunpack.c.l.b16 %v37
  %v76 = vpack.c.b16 %v61, %v60
  %v77 = vpack.c.b16 %v63, %v62
  %v78 = vpack.c.b16 %v65, %v64
  %v79 = vpack.c.b16 %v67, %v66
  %v80 = vpack.c.b16 %v69, %v68
  %v81 = vpack.c.b16 %v71, %v70
  %v82 = vpack.c.b16 %v73, %v72
  %v83 = vpack.c.b16 %v75, %v74
  %92 = vmatprep.subr.bf16.mxu0 0
  %93 = vmatpush1.bf16.msra.mxu0 %v76
  %94 = vmatprep.subr.bf16.mxu0 0
  %95 = vmatpush1.bf16.msra.mxu0 %v77
  %96 = vmatprep.subr.bf16.mxu0 0
  %97 = vmatpush1.bf16.msra.mxu0 %v78
  %98 = vmatprep.subr.bf16.mxu0 0
  %99 = vmatpush1.bf16.msra.mxu0 %v79
  %100 = vmatprep.subr.bf16.mxu0 0
  %101 = vmatpush1.bf16.msra.mxu0 %v80
  %102 = vmatprep.subr.bf16.mxu0 0
  %103 = vmatpush1.bf16.msra.mxu0 %v81
  %104 = vmatprep.subr.bf16.mxu0 0
  %105 = vmatpush1.bf16.msra.mxu0 %v82
  %106 = vmatprep.subr.bf16.mxu0 0
  %107 = vmatpush1.bf16.msra.mxu0 %v83
  %108 = vmatprep.subr.bf16.mxu0 0
  %109 = vmatpush1.bf16.msra.mxu0 0
  %110 = vmatprep.subr.bf16.mxu0 0
  %111 = vmatpush1.bf16.msra.mxu0 0
  %112 = vmatprep.subr.bf16.mxu0 0
  %113 = vmatpush1.bf16.msra.mxu0 0
  %114 = vmatprep.subr.bf16.mxu0 0
  %115 = vmatpush1.bf16.msra.mxu0 0
  %116 = vmatprep.subr.bf16.mxu0 0
  %117 = vmatpush1.bf16.msra.mxu0 0
  %118 = vmatprep.subr.bf16.mxu0 0
  %119 = vmatpush1.bf16.msra.mxu0 0
  %120 = vmatprep.subr.bf16.mxu0 0
  %121 = vmatpush1.bf16.msra.mxu0 0
  %122 = vmatprep.subr.bf16.mxu0 0
  %123 = vmatpush1.bf16.msra.mxu0 0
  %124 = vmatprep.mubr.bf16.mxu0 0
  %125 = vmatmul.mubr.bf16.gmra.mrb[0].mxu0 %v21
  %v126 = vpop.f32.mrb[0].mxu0
  %v127 = vadd.f32 %v43, %v126
  %v128 = vpop.f32.mrb[0].mxu0
  %v129 = vpop.f32.mrb[0].mxu0
  %v130 = vpop.f32.mrb[0].mxu0
  %131 = vdwg.mxu0
  %v132 = vxor.u32 %v127, 2147483648
  %v133 = vmul.f32 %v132, 1.442695
  %v134 = vpow.pop %v133
  %v135 = vadd.f32 %v134, 1.0
  %v136 = vrcp.pop %v135
  %v137 = vmul.f32 1.0, %v136
  %v138 = vmul.f32 %v127, %v137
  %v139 = vpack.c.bf16 %v138, %v138
  %v140 = vld [vmem:[%s3] sm:$0xf]
  %v141 = vld [vmem:[%s3 + $0x4] sm:$0xf]
  %v142 = vld [vmem:[%s3 + $0x8] sm:$0xf]
  %v143 = vld [vmem:[%s3 + $0xc] sm:$0xf]
  %v144 = vld [vmem:[%s4] sm:$0x1]
  %v145 = vunpack.c.l.bf16 %v144
  %v146 = vlaneseq
  %v147 = vshrl.u32 %v146, 7
  %v148 = vsub.s32 0, %v147
  %v149 = vrot.slane %v145, %v148
  %v154 = vunpack.c.l.b16 %v140
  %v155 = vunpack.c.l.b16 %v141
  %v156 = vunpack.c.l.b16 %v142
  %v157 = vunpack.c.l.b16 %v143
  %v158 = vpack.c.b16 %v155, %v154
  %v159 = vpack.c.b16 %v157, %v156
  %vm162 = vcmask 261120
  %v164 = vsel %vm162, %v139, 0
  %166 = vmatprep.subr.bf16.mxu0 0
  %167 = vmatpush1.bf16.msra.mxu0 %v158
  %168 = vmatprep.subr.bf16.mxu0 0
  %169 = vmatpush1.bf16.msra.mxu0 %v159
  %170 = vmatprep.subr.bf16.mxu0 0
  %171 = vmatpush1.bf16.msra.mxu0 0
  %172 = vmatprep.subr.bf16.mxu0 0
  %173 = vmatpush1.bf16.msra.mxu0 0
  %174 = vmatprep.subr.bf16.mxu0 0
  %175 = vmatpush1.bf16.msra.mxu0 0
  %176 = vmatprep.subr.bf16.mxu0 0
  %177 = vmatpush1.bf16.msra.mxu0 0
  %178 = vmatprep.subr.bf16.mxu0 0
  %179 = vmatpush1.bf16.msra.mxu0 0
  %180 = vmatprep.subr.bf16.mxu0 0
  %181 = vmatpush1.bf16.msra.mxu0 0
  %182 = vmatprep.subr.bf16.mxu0 0
  %183 = vmatpush1.bf16.msra.mxu0 0
  %184 = vmatprep.subr.bf16.mxu0 0
  %185 = vmatpush1.bf16.msra.mxu0 0
  %186 = vmatprep.subr.bf16.mxu0 0
  %187 = vmatpush1.bf16.msra.mxu0 0
  %188 = vmatprep.subr.bf16.mxu0 0
  %189 = vmatpush1.bf16.msra.mxu0 0
  %190 = vmatprep.subr.bf16.mxu0 0
  %191 = vmatpush1.bf16.msra.mxu0 0
  %192 = vmatprep.subr.bf16.mxu0 0
  %193 = vmatpush1.bf16.msra.mxu0 0
  %194 = vmatprep.subr.bf16.mxu0 0
  %195 = vmatpush1.bf16.msra.mxu0 0
  %196 = vmatprep.subr.bf16.mxu0 0
  %197 = vmatpush1.bf16.msra.mxu0 0
  %198 = vmatprep.mubr.bf16.mxu0 0
  %199 = vmatmul.mubr.bf16.gmra.mrb[0].mxu0 %v164
  %v200 = vpop.f32.mrb[0].mxu0
  %v201 = vadd.f32 %v149, %v200
  %v202 = vpop.f32.mrb[0].mxu0
  %v203 = vpop.f32.mrb[0].mxu0
  %v204 = vpop.f32.mrb[0].mxu0
  %205 = vdwg.mxu0
  %v206 = vxor.u32 %v201, 2147483648
  %v207 = vmul.f32 %v206, 1.442695
  %v208 = vpow.pop %v207
  %v209 = vadd.f32 %v208, 1.0
  %v210 = vrcp.pop %v209
  %v211 = vmul.f32 1.0, %v210
  %v212 = vpack.c.bf16 %v211, %v211
  %213 = vst [vmem:[%s5] sm:$0x1] %v212
  // Predicated region
  $region22: #{efficientnet_forward.7} parent=0 // pred_check
    _
  $region23: #{efficientnet_forward.7} parent=0 // pred_check_branch
    %215 = sbr.rel (0) target = $region25
  $region24: #{efficientnet_forward.7} parent=0 // pred_region
    _
  $region25: #{efficientnet_forward.7} parent=0 // pred_fallthru
    _
  // Predicated region
  $region26: #{efficientnet_forward.7} parent=0 // pred_check
    _
  $region27: #{efficientnet_forward.7} parent=0 // pred_check_branch
    %217 = sbr.rel (0) target = $region29
  $region28: #{efficientnet_forward.7} parent=0 // pred_region
    _
  $region29: #{efficientnet_forward.7} parent=0 // pred_fallthru
    _

// kernel: efficientnet_forward.6
$region0: #{efficientnet_forward.6}
  #allocation0 [shape = 'u32[]', space=smem, size = 0x4, offset = 0x4, fixed_abs, tag = 'smem constant byte address 0x4 - core index']
  #allocation1 [shape = 'u32[144,128]{1,0:T(1,128)}', space=vmem, size = 0x12000, scoped, tag = 'internal scratch']
  %s0 = inlined_call_operand.vmem [shape: bf16[2,8,8,128], index: 0, kind: input, shape index: {}]
  %s1 = inlined_call_operand.vmem [shape: bf16[9,128], index: 1, kind: input, shape index: {}]
  %s2 = inlined_call_operand.vmem [shape: bf16[1,128], index: 2, kind: input, shape index: {}]
  %s3 = inlined_call_operand.vmem [shape: bf16[2,8,8,128], index: 3, kind: output, shape index: {0}]
  %s4 = inlined_call_operand.vmem [shape: bf16[2,1,128], index: 4, kind: output, shape index: {1}]
  %5 = xla_tuple %s3, %s4
  %s6 = sld [smem:[#allocation0]]
  $region53: #{efficientnet_forward.6} parent=0
    _
  %s8 = ssub.s32 1, %s6
  %s9 = scalar_select 0, %s8, %s6
  loop: start=0, step=1, limit=4
  $region2: #{efficientnet_forward.6} parent=0 // loop_pre_header
    _
  $region3: #{efficientnet_forward.6} parent=0 // loop_header
    %s11 = sphi 0, %s15
    %p12 = scmp.ge.s32.totalorder %s11, 4
    %s21 = sphi 0, %s23
    %s24 = sphi 0, %s21
    %s25 = sphi 0, %s24
    %s41 = sphi 0, %s25
    %s45 = sphi 0, %s45
    %s47 = sphi 0, %s45
    %s48 = sphi 0, %s47
    %s62 = sphi 0, %s48
    %s66 = sphi 0, %s66
    %s68 = sphi 0, %s66
    %s69 = sphi 0, %s68
    %s83 = sphi 0, %s69
    %s89 = sphi 0, %s91
    %s92 = sphi 0, %s89
    %s93 = sphi 0, %s92
    %s109 = sphi 0, %s93
    %s115 = sphi 0, %s117
    %s118 = sphi 0, %s115
    %s119 = sphi 0, %s118
    %s135 = sphi 0, %s119
  $region4: #{efficientnet_forward.6} parent=0 // loop_header_branch
    %14 = sbr.rel (%p12) target = $region8
  $region5: #{efficientnet_forward.6} parent=0 // loop_body
    %s16 = ssub.s32 %s11, 1
    %s17 = ssub.s32 %s11, 2
    %s18 = sadd.s32 %s11, 1
    %s19 = ssub.s32 %s11, %s18
    %p20 = scmp.eq.s32.totalorder %s19, 0
    %s22 = sadd.s32 %s21, 1
    %s23 = scalar_select %p20, %s21, %s22
    %p26 = pneg %p20
    %p27 = scmp.eq.s32.totalorder %s11, 1
    %p28 = por %p26, %p27
    %p29 = scmp.ne.s32.totalorder %s21, %s24
    %p30 = scmp.eq.s32.totalorder %s11, 0
    %p31 = por %p29, %p30
    %p32 = scmp.ne.s32.totalorder %s21, %s24
    %p33 = scmp.eq.s32.totalorder %s16, 1
    %p34 = por %p32, %p33
    %p35 = scmp.ne.s32.totalorder %s24, %s25
    %p36 = scmp.eq.s32.totalorder %s16, 0
    %p37 = por %p35, %p36
    %p38 = scmp.ne.s32.totalorder %s24, %s25
    %p39 = scmp.eq.s32.totalorder %s17, 1
    %p40 = por %p38, %p39
    %p42 = scmp.ne.s32.totalorder %s25, %s41
    %p43 = scmp.eq.s32.totalorder %s17, 0
    %p44 = por %p42, %p43
    %s46 = sadd.s32 %s45, 1
    %p49 = scmp.eq.s32.totalorder %s11, 1
    %p50 = scmp.ne.s32.totalorder %s45, %s47
    %p51 = scmp.eq.s32.totalorder %s11, 0
    %p52 = por %p50, %p51
    %p53 = scmp.ne.s32.totalorder %s45, %s47
    %p54 = scmp.eq.s32.totalorder %s16, 1
    %p55 = por %p53, %p54
    %p56 = scmp.ne.s32.totalorder %s47, %s48
    %p57 = scmp.eq.s32.totalorder %s16, 0
    %p58 = por %p56, %p57
    %p59 = scmp.ne.s32.totalorder %s47, %s48
    %p60 = scmp.eq.s32.totalorder %s17, 1
    %p61 = por %p59, %p60
    %p63 = scmp.ne.s32.totalorder %s48, %s62
    %p64 = scmp.eq.s32.totalorder %s17, 0
    %p65 = por %p63, %p64
    %s67 = sadd.s32 %s66, 1
    %p70 = scmp.eq.s32.totalorder %s11, 1
    %p71 = scmp.ne.s32.totalorder %s66, %s68
    %p72 = scmp.eq.s32.totalorder %s11, 0
    %p73 = por %p71, %p72
    %p74 = scmp.ne.s32.totalorder %s66, %s68
    %p75 = scmp.eq.s32.totalorder %s16, 1
    %p76 = por %p74, %p75
    %p77 = scmp.ne.s32.totalorder %s68, %s69
    %p78 = scmp.eq.s32.totalorder %s16, 0
    %p79 = por %p77, %p78
    %p80 = scmp.ne.s32.totalorder %s68, %s69
    %p81 = scmp.eq.s32.totalorder %s17, 1
    %p82 = por %p80, %p81
    %p84 = scmp.ne.s32.totalorder %s69, %s83
    %p85 = scmp.eq.s32.totalorder %s17, 0
    %p86 = por %p84, %p85
    %s87 = ssub.s32 %s11, %s18
    %p88 = scmp.eq.s32.totalorder %s87, 0
    %s90 = sadd.s32 %s89, 1
    %s91 = scalar_select %p88, %s89, %s90
    %p94 = pneg %p88
    %p95 = scmp.eq.s32.totalorder %s11, 1
    %p96 = por %p94, %p95
    %p97 = scmp.ne.s32.totalorder %s89, %s92
    %p98 = scmp.eq.s32.totalorder %s11, 0
    %p99 = por %p97, %p98
    %p100 = scmp.ne.s32.totalorder %s89, %s92
    %p101 = scmp.eq.s32.totalorder %s16, 1
    %p102 = por %p100, %p101
    %p103 = scmp.ne.s32.totalorder %s92, %s93
    %p104 = scmp.eq.s32.totalorder %s16, 0
    %p105 = por %p103, %p104
    %p106 = scmp.ne.s32.totalorder %s92, %s93
    %p107 = scmp.eq.s32.totalorder %s17, 1
    %p108 = por %p106, %p107
    %p110 = scmp.ne.s32.totalorder %s93, %s109
    %p111 = scmp.eq.s32.totalorder %s17, 0
    %p112 = por %p110, %p111
    %s113 = ssub.s32 %s11, %s18
    %p114 = scmp.eq.s32.totalorder %s113, 0
    %s116 = sadd.s32 %s115, 1
    %s117 = scalar_select %p114, %s115, %s116
    %p120 = pneg %p114
    %p121 = scmp.eq.s32.totalorder %s11, 1
    %p122 = por %p120, %p121
    %p123 = scmp.ne.s32.totalorder %s115, %s118
    %p124 = scmp.eq.s32.totalorder %s11, 0
    %p125 = por %p123, %p124
    %p126 = scmp.ne.s32.totalorder %s115, %s118
    %p127 = scmp.eq.s32.totalorder %s16, 1
    %p128 = por %p126, %p127
    %p129 = scmp.ne.s32.totalorder %s118, %s119
    %p130 = scmp.eq.s32.totalorder %s16, 0
    %p131 = por %p129, %p130
    %p132 = scmp.ne.s32.totalorder %s118, %s119
    %p133 = scmp.eq.s32.totalorder %s17, 1
    %p134 = por %p132, %p133
    %p136 = scmp.ne.s32.totalorder %s119, %s135
    %p137 = scmp.eq.s32.totalorder %s17, 0
    %p138 = por %p136, %p137
    %p139 = scmp.le.s32.totalorder 1, %s11
    %p140 = scmp.lt.s32.totalorder %s11, 3
    %p141 = pnand %p139, %p140
    %p142 = pneg %p141
    // Predicated region
    $region9: #{efficientnet_forward.6} parent=5 // pred_check
      _
    $region10: #{efficientnet_forward.6} parent=5 // pred_check_branch
      %144 = sbr.rel (%p141) target = $region12
    $region11: #{efficientnet_forward.6} parent=5 // pred_region
      %s145 = ssub.s32 %s11, 1
      // Predicated region
      $region13: #{efficientnet_forward.6} parent=11 // pred_check
        %p146 = pneg %p58
      $region14: #{efficientnet_forward.6} parent=11 // pred_check_branch
        %148 = sbr.rel (%p146) target = $region16
      $region15: #{efficientnet_forward.6} parent=11 // pred_region
        _
      $region16: #{efficientnet_forward.6} parent=11 // pred_fallthru
        _
      // Predicated region
      $region17: #{efficientnet_forward.6} parent=11 // pred_check
        %p149 = pneg %p79
      $region18: #{efficientnet_forward.6} parent=11 // pred_check_branch
        %151 = sbr.rel (%p149) target = $region20
      $region19: #{efficientnet_forward.6} parent=11 // pred_region
        _
      $region20: #{efficientnet_forward.6} parent=11 // pred_fallthru
        _
    $region12: #{efficientnet_forward.6} parent=5 // pred_fallthru
      _
    %p152 = scmp.lt.s32.totalorder %s11, 2
    // Predicated region
    $region21: #{efficientnet_forward.6} parent=5 // pred_check
      %p153 = pneg %p152
    $region22: #{efficientnet_forward.6} parent=5 // pred_check_branch
      %155 = sbr.rel (%p153) target = $region24
    $region23: #{efficientnet_forward.6} parent=5 // pred_region
      // Predicated region
      $region25: #{efficientnet_forward.6} parent=23 // pred_check
        %p156 = pneg %p31
      $region26: #{efficientnet_forward.6} parent=23 // pred_check_branch
        %158 = sbr.rel (%p156) target = $region28
      $region27: #{efficientnet_forward.6} parent=23 // pred_region
        %p159 = scmp.lt.s32.totalorder %s11, 1
        %s160 = scalar_select %p159, %s11, 1
        %s161 = smul.addr %s160, 8
        %s162 = smul.addr %s161, 4
        %s163 = scalar_lea.vmem %s0, %s162
      $region28: #{efficientnet_forward.6} parent=23 // pred_fallthru
        _
    $region24: #{efficientnet_forward.6} parent=5 // pred_fallthru
      _
    %p164 = scmp.le.s32.totalorder 1, %s11
    %p165 = scmp.lt.s32.totalorder %s11, 3
    %p166 = pnand %p164, %p165
    %p167 = pneg %p166
    // Predicated region
    $region29: #{efficientnet_forward.6} parent=5 // pred_check
      _
    $region30: #{efficientnet_forward.6} parent=5 // pred_check_branch
      %169 = sbr.rel (%p166) target = $region32
    $region31: #{efficientnet_forward.6} parent=5 // pred_region
      %s170 = ssub.s32 %s11, 1
      %p171 = scmp.lt.s32.totalorder %s16, 1
      %s172 = scalar_select %p171, %s16, 1
      %s173 = smul.addr %s172, 8
      %s174 = smul.addr %s173, 4
      %s175 = scalar_lea.vmem %s0, %s174
      %p176 = pneg %p37
      %p177 = pneg %p34
      %p178 = pneg %p58
      %p179 = pneg %p55
      %p180 = pneg %p79
      %p181 = pneg %p76
      %p182 = pneg %p105
      %p183 = pneg %p102
      %p184 = scmp.lt.s32.totalorder %s16, 1
      %s185 = scalar_select %p184, %s16, 1
      %s186 = smul.addr %s185, 8
      %s187 = smul.addr %s186, 4
      %s188 = scalar_lea.vmem %s3, %s187
      %p189 = pneg %p131
      %p190 = pneg %p128
      %p191 = scmp.lt.s32.totalorder %s16, 1
      %s192 = scalar_select %p191, %s16, 1
      %s193 = scalar_lea.vmem %s4, %s192
      %p194 = scmp.lt.s32.totalorder %s16, 1
      %s195 = scalar_select %p194, %s16, 1
      %s196 = smul.addr %s195, 8
      %s197 = smul.addr %s196, 4
      %s198 = scalar_lea.vmem %s0, %s197
      %p199 = scmp.lt.s32.totalorder %s16, 1
      %s200 = scalar_select %p199, %s16, 1
      %s201 = smul.addr %s200, 8
      %s202 = smul.addr %s201, 4
      %s203 = scalar_lea.vmem %s3, %s202
      %p204 = scmp.lt.s32.totalorder %s16, 1
      %s205 = scalar_select %p204, %s16, 1
      %s206 = scalar_lea.vmem %s4, %s205
      %v207 = vld [vmem:[%s198] sm:$0xf]
      %v208 = vld [vmem:[%s198 + $0x4] sm:$0xf]
      %v209 = vld [vmem:[%s198 + $0x8] sm:$0xf]
      %v210 = vld [vmem:[%s198 + $0xc] sm:$0xf]
      %v211 = vld [vmem:[%s198 + $0x10] sm:$0xf]
      %v212 = vld [vmem:[%s198 + $0x14] sm:$0xf]
      %v213 = vld [vmem:[%s198 + $0x18] sm:$0xf]
      %v214 = vld [vmem:[%s198 + $0x1c] sm:$0xf]
      %v215 = vunpack.c.l.bf16 %v207
      %v216 = vunpack.c.l.bf16 %v208
      %v217 = vunpack.c.l.bf16 %v209
      %v218 = vunpack.c.l.bf16 %v210
      %v219 = vunpack.c.l.bf16 %v211
      %v220 = vunpack.c.l.bf16 %v212
      %v221 = vunpack.c.l.bf16 %v213
      %v222 = vunpack.c.l.bf16 %v214
      %v223 = vlaneseq
      %v224 = vshrl.u32 %v223, 7
      %vm225 = vcmp.gt.s32.totalorder %v224, 0
      %v226 = vrot.slane %v215, 7
      %v227 = vrot.slane %v216, 7
      %v228 = vrot.slane %v217, 7
      %v229 = vrot.slane %v218, 7
      %v230 = vrot.slane %v219, 7
      %v231 = vrot.slane %v220, 7
      %v232 = vrot.slane %v221, 7
      %v233 = vrot.slane %v222, 7
      %v234 = vsel %vm225, %v226, 0.0
      %v235 = vsel %vm225, %v227, 0.0
      %v236 = vsel %vm225, %v228, 0.0
      %v237 = vsel %vm225, %v229, 0.0
      %v238 = vsel %vm225, %v230, 0.0
      %v239 = vsel %vm225, %v231, 0.0
      %v240 = vsel %vm225, %v232, 0.0
      %v241 = vsel %vm225, %v233, 0.0
      %vm242 = vcmp.lt.s32.totalorder %v224, 7
      %v243 = vrot.slane %v215, 1
      %v244 = vrot.slane %v216, 1
      %v245 = vrot.slane %v217, 1
      %v246 = vrot.slane %v218, 1
      %v247 = vrot.slane %v219, 1
      %v248 = vrot.slane %v220, 1
      %v249 = vrot.slane %v221, 1
      %v250 = vrot.slane %v222, 1
      %v251 = vsel %vm242, %v243, 0.0
      %v252 = vsel %vm242, %v244, 0.0
      %v253 = vsel %vm242, %v245, 0.0
      %v254 = vsel %vm242, %v246, 0.0
      %v255 = vsel %vm242, %v247, 0.0
      %v256 = vsel %vm242, %v248, 0.0
      %v257 = vsel %vm242, %v249, 0.0
      %v258 = vsel %vm242, %v250, 0.0
      %v259 = vld [vmem:[%s1] sm:$0x1]
      %v260 = vunpack.c.l.bf16 %v259
      %v261 = vlaneseq
      %v262 = vshrl.u32 %v261, 7
      %v263 = vsub.s32 0, %v262
      %v264 = vrot.slane %v260, %v263
      %v265 = vmul.f32 %v264, 0.0
      %v266 = vmul.f32 %v234, %v264
      %v267 = vmul.f32 %v235, %v264
      %v268 = vmul.f32 %v236, %v264
      %v269 = vmul.f32 %v237, %v264
      %v270 = vmul.f32 %v238, %v264
      %v271 = vmul.f32 %v239, %v264
      %v272 = vmul.f32 %v240, %v264
      %v273 = vadd.f32 %v265, 0.0
      %v274 = vadd.f32 %v266, 0.0
      %v275 = vadd.f32 %v267, 0.0
      %v276 = vadd.f32 %v268, 0.0
      %v277 = vadd.f32 %v269, 0.0
      %v278 = vadd.f32 %v270, 0.0
      %v279 = vadd.f32 %v271, 0.0
      %v280 = vadd.f32 %v272, 0.0
      %v281 = vlaneseq
      %v282 = vshrl.u32 %v281, 7
      %v283 = vsub.s32 1, %v282
      %v284 = vrot.slane %v260, %v283
      %v285 = vmul.f32 %v284, 0.0
      %v286 = vmul.f32 %v215, %v284
      %v287 = vmul.f32 %v216, %v284
      %v288 = vmul.f32 %v217, %v284
      %v289 = vmul.f32 %v218, %v284
      %v290 = vmul.f32 %v219, %v284
      %v291 = vmul.f32 %v220, %v284
      %v292 = vmul.f32 %v221, %v284
      %v293 = vadd.f32 %v273, %v285
      %v294 = vadd.f32 %v274, %v286
      %v295 = vadd.f32 %v275, %v287
      %v296 = vadd.f32 %v276, %v288
      %v297 = vadd.f32 %v277, %v289
      %v298 = vadd.f32 %v278, %v290
      %v299 = vadd.f32 %v279, %v291
      %v300 = vadd.f32 %v280, %v292
      %v301 = vld [vmem:[%s1] sm:$0x2]
      %v302 = vunpack.c.l.bf16 %v301
      %v303 = vlaneseq
      %v304 = vshrl.u32 %v303, 7
      %v305 = vsub.s32 2, %v304
      %v306 = vrot.slane %v302, %v305
      %v307 = vmul.f32 %v306, 0.0
      %v308 = vmul.f32 %v251, %v306
      %v309 = vmul.f32 %v252, %v306
      %v310 = vmul.f32 %v253, %v306
      %v311 = vmul.f32 %v254, %v306
      %v312 = vmul.f32 %v255, %v306
      %v313 = vmul.f32 %v256, %v306
      %v314 = vmul.f32 %v257, %v306
      %v315 = vadd.f32 %v293, %v307
      %v316 = vadd.f32 %v294, %v308
      %v317 = vadd.f32 %v295, %v309
      %v318 = vadd.f32 %v296, %v310
      %v319 = vadd.f32 %v297, %v311
      %v320 = vadd.f32 %v298, %v312
      %v321 = vadd.f32 %v299, %v313
      %v322 = vadd.f32 %v300, %v314
      %v323 = vlaneseq
      %v324 = vshrl.u32 %v323, 7
      %v325 = vsub.s32 3, %v324
      %v326 = vrot.slane %v302, %v325
      %v327 = vmul.f32 %v234, %v326
      %v328 = vmul.f32 %v235, %v326
      %v329 = vmul.f32 %v236, %v326
      %v330 = vmul.f32 %v237, %v326
      %v331 = vmul.f32 %v238, %v326
      %v332 = vmul.f32 %v239, %v326
      %v333 = vmul.f32 %v240, %v326
      %v334 = vmul.f32 %v241, %v326
      %v335 = vadd.f32 %v315, %v327
      %v336 = vadd.f32 %v316, %v328
      %v337 = vadd.f32 %v317, %v329
      %v338 = vadd.f32 %v318, %v330
      %v339 = vadd.f32 %v319, %v331
      %v340 = vadd.f32 %v320, %v332
      %v341 = vadd.f32 %v321, %v333
      %v342 = vadd.f32 %v322, %v334
      %v343 = vld [vmem:[%s1] sm:$0x4]
      %v344 = vunpack.c.l.bf16 %v343
      %v345 = vlaneseq
      %v346 = vshrl.u32 %v345, 7
      %v347 = vsub.s32 4, %v346
      %v348 = vrot.slane %v344, %v347
      %v349 = vmul.f32 %v215, %v348
      %v350 = vmul.f32 %v216, %v348
      %v351 = vmul.f32 %v217, %v348
      %v352 = vmul.f32 %v218, %v348
      %v353 = vmul.f32 %v219, %v348
      %v354 = vmul.f32 %v220, %v348
      %v355 = vmul.f32 %v221, %v348
      %v356 = vmul.f32 %v222, %v348
      %v357 = vadd.f32 %v335, %v349
      %v358 = vadd.f32 %v336, %v350
      %v359 = vadd.f32 %v337, %v351
      %v360 = vadd.f32 %v338, %v352
      %v361 = vadd.f32 %v339, %v353
      %v362 = vadd.f32 %v340, %v354
      %v363 = vadd.f32 %v341, %v355
      %v364 = vadd.f32 %v342, %v356
      %v365 = vlaneseq
      %v366 = vshrl.u32 %v365, 7
      %v367 = vsub.s32 5, %v366
      %v368 = vrot.slane %v344, %v367
      %v369 = vmul.f32 %v251, %v368
      %v370 = vmul.f32 %v252, %v368
      %v371 = vmul.f32 %v253, %v368
      %v372 = vmul.f32 %v254, %v368
      %v373 = vmul.f32 %v255, %v368
      %v374 = vmul.f32 %v256, %v368
      %v375 = vmul.f32 %v257, %v368
      %v376 = vmul.f32 %v258, %v368
      %v377 = vadd.f32 %v357, %v369
      %v378 = vadd.f32 %v358, %v370
      %v379 = vadd.f32 %v359, %v371
      %v380 = vadd.f32 %v360, %v372
      %v381 = vadd.f32 %v361, %v373
      %v382 = vadd.f32 %v362, %v374
      %v383 = vadd.f32 %v363, %v375
      %v384 = vadd.f32 %v364, %v376
      %v385 = vld [vmem:[%s1] sm:$0x8]
      %v386 = vunpack.c.l.bf16 %v385
      %v387 = vlaneseq
      %v388 = vshrl.u32 %v387, 7
      %v389 = vsub.s32 6, %v388
      %v390 = vrot.slane %v386, %v389
      %v391 = vmul.f32 %v235, %v390
      %v392 = vmul.f32 %v236, %v390
      %v393 = vmul.f32 %v237, %v390
      %v394 = vmul.f32 %v238, %v390
      %v395 = vmul.f32 %v239, %v390
      %v396 = vmul.f32 %v240, %v390
      %v397 = vmul.f32 %v241, %v390
      %v398 = vmul.f32 %v390, 0.0
      %v399 = vadd.f32 %v377, %v391
      %v400 = vadd.f32 %v378, %v392
      %v401 = vadd.f32 %v379, %v393
      %v402 = vadd.f32 %v380, %v394
      %v403 = vadd.f32 %v381, %v395
      %v404 = vadd.f32 %v382, %v396
      %v405 = vadd.f32 %v383, %v397
      %v406 = vadd.f32 %v384, %v398
      %v407 = vlaneseq
      %v408 = vshrl.u32 %v407, 7
      %v409 = vsub.s32 7, %v408
      %v410 = vrot.slane %v386, %v409
      %v411 = vmul.f32 %v216, %v410
      %v412 = vmul.f32 %v217, %v410
      %v413 = vmul.f32 %v218, %v410
      %v414 = vmul.f32 %v219, %v410
      %v415 = vmul.f32 %v220, %v410
      %v416 = vmul.f32 %v221, %v410
      %v417 = vmul.f32 %v222, %v410
      %v418 = vmul.f32 %v410, 0.0
      %v419 = vadd.f32 %v399, %v411
      %v420 = vadd.f32 %v400, %v412
      %v421 = vadd.f32 %v401, %v413
      %v422 = vadd.f32 %v402, %v414
      %v423 = vadd.f32 %v403, %v415
      %v424 = vadd.f32 %v404, %v416
      %v425 = vadd.f32 %v405, %v417
      %v426 = vadd.f32 %v406, %v418
      %v427 = vld [vmem:[%s1 + $0x4] sm:$0x1]
      %v428 = vunpack.c.l.bf16 %v427
      %v429 = vlaneseq
      %v430 = vshrl.u32 %v429, 7
      %v431 = vsub.s32 0, %v430
      %v432 = vrot.slane %v428, %v431
      %v433 = vmul.f32 %v252, %v432
      %v434 = vmul.f32 %v253, %v432
      %v435 = vmul.f32 %v254, %v432
      %v436 = vmul.f32 %v255, %v432
      %v437 = vmul.f32 %v256, %v432
      %v438 = vmul.f32 %v257, %v432
      %v439 = vmul.f32 %v258, %v432
      %v440 = vmul.f32 %v432, 0.0
      %v441 = vadd.f32 %v419, %v433
      %v442 = vadd.f32 %v420, %v434
      %v443 = vadd.f32 %v421, %v435
      %v444 = vadd.f32 %v422, %v436
      %v445 = vadd.f32 %v423, %v437
      %v446 = vadd.f32 %v424, %v438
      %v447 = vadd.f32 %v425, %v439
      %v448 = vadd.f32 %v426, %v440
      %v449 = vld [vmem:[%s2] sm:$0x1]
      %v450 = vunpack.c.l.bf16 %v449
      %v451 = vlaneseq
      %v452 = vshrl.u32 %v451, 7
      %v453 = vsub.s32 0, %v452
      %v454 = vrot.slane %v450, %v453
      %v455 = vadd.f32 %v441, %v454
      %v456 = vadd.f32 %v442, %v454
      %v457 = vadd.f32 %v443, %v454
      %v458 = vadd.f32 %v444, %v454
      %v459 = vadd.f32 %v445, %v454
      %v460 = vadd.f32 %v446, %v454
      %v461 = vadd.f32 %v447, %v454
      %v462 = vadd.f32 %v448, %v454
      %v463 = vxor.u32 %v455, 2147483648
      %v464 = vxor.u32 %v456, 2147483648
      %v465 = vxor.u32 %v457, 2147483648
      %v466 = vxor.u32 %v458, 2147483648
      %v467 = vxor.u32 %v459, 2147483648
      %v468 = vxor.u32 %v460, 2147483648
      %v469 = vxor.u32 %v461, 2147483648
      %v470 = vxor.u32 %v462, 2147483648
      %v471 = vmul.f32 %v463, 1.442695
      %v472 = vpow.pop %v471
      %v473 = vmul.f32 %v464, 1.442695
      %v474 = vpow.pop %v473
      %v475 = vmul.f32 %v465, 1.442695
      %v476 = vpow.pop %v475
      %v477 = vmul.f32 %v466, 1.442695
      %v478 = vpow.pop %v477
      %v479 = vmul.f32 %v467, 1.442695
      %v480 = vpow.pop %v479
      %v481 = vmul.f32 %v468, 1.442695
      %v482 = vpow.pop %v481
      %v483 = vmul.f32 %v469, 1.442695
      %v484 = vpow.pop %v483
      %v485 = vmul.f32 %v470, 1.442695
      %v486 = vpow.pop %v485
      %v487 = vadd.f32 %v472, 1.0
      %v488 = vadd.f32 %v474, 1.0
      %v489 = vadd.f32 %v476, 1.0
      %v490 = vadd.f32 %v478, 1.0
      %v491 = vadd.f32 %v480, 1.0
      %v492 = vadd.f32 %v482, 1.0
      %v493 = vadd.f32 %v484, 1.0
      %v494 = vadd.f32 %v486, 1.0
      %v495 = vrcp.pop %v487
      %v496 = vmul.f32 1.0, %v495
      %v497 = vrcp.pop %v488
      %v498 = vmul.f32 1.0, %v497
      %v499 = vrcp.pop %v489
      %v500 = vmul.f32 1.0, %v499
      %v501 = vrcp.pop %v490
      %v502 = vmul.f32 1.0, %v501
      %v503 = vrcp.pop %v491
      %v504 = vmul.f32 1.0, %v503
      %v505 = vrcp.pop %v492
      %v506 = vmul.f32 1.0, %v505
      %v507 = vrcp.pop %v493
      %v508 = vmul.f32 1.0, %v507
      %v509 = vrcp.pop %v494
      %v510 = vmul.f32 1.0, %v509
      %v511 = vmul.f32 %v455, %v496
      %v512 = vmul.f32 %v456, %v498
      %v513 = vmul.f32 %v457, %v500
      %v514 = vmul.f32 %v458, %v502
      %v515 = vmul.f32 %v459, %v504
      %v516 = vmul.f32 %v460, %v506
      %v517 = vmul.f32 %v461, %v508
      %v518 = vmul.f32 %v462, %v510
      %v519 = vpack.c.bf16 %v511, %v511
      %v520 = vpack.c.bf16 %v512, %v512
      %v521 = vpack.c.bf16 %v513, %v513
      %v522 = vpack.c.bf16 %v514, %v514
      %v523 = vpack.c.bf16 %v515, %v515
      %v524 = vpack.c.bf16 %v516, %v516
      %v525 = vpack.c.bf16 %v517, %v517
      %v526 = vpack.c.bf16 %v518, %v518
      %527 = vst [vmem:[%s203] sm:$0xf] %v519
      %528 = vst [vmem:[%s203 + $0x4] sm:$0xf] %v520
      %529 = vst [vmem:[%s203 + $0x8] sm:$0xf] %v521
      %530 = vst [vmem:[%s203 + $0xc] sm:$0xf] %v522
      %531 = vst [vmem:[%s203 + $0x10] sm:$0xf] %v523
      %532 = vst [vmem:[%s203 + $0x14] sm:$0xf] %v524
      %533 = vst [vmem:[%s203 + $0x18] sm:$0xf] %v525
      %534 = vst [vmem:[%s203 + $0x1c] sm:$0xf] %v526
      %v535 = vadd.f32 %v511, %v512
      %v536 = vadd.f32 %v535, %v513
      %v537 = vadd.f32 %v536, %v514
      %v538 = vadd.f32 %v537, %v515
      %v539 = vadd.f32 %v538, %v516
      %v540 = vadd.f32 %v539, %v517
      %v541 = vadd.f32 %v540, %v518
      %v542 = vrot.slane %v541, 4
      %v543 = vadd.f32 %v541, %v542
      %v544 = vrot.slane %v543, 2
      %v545 = vadd.f32 %v543, %v544
      %v546 = vrot.slane %v545, 1
      %v547 = vadd.f32 %v545, %v546
      %v548 = vrcp.pop 64.0
      %v549 = vmul.f32 %v547, %v548
      %v550 = vpack.c.bf16 %v549, %v549
      %vm551 = vcmask 1040384
      %vm552 = vsmask.f32 256
      %vm553 = vmand %vm551, %vm552
      %v554 = vld [vmem:[%s206] sm:$0x1]
      %v555 = vsel %vm553, %v550, %v554
      %556 = vst [vmem:[%s206] sm:$0x1] %v555
      %p557 = scmp.lt.s32.totalorder %s16, 1
      %s558 = scalar_select %p557, %s16, 1
      %s559 = smul.addr %s558, 8
      %s560 = smul.addr %s559, 4
      %s561 = scalar_lea.vmem %s3, %s560
      %p562 = scmp.lt.s32.totalorder %s16, 1
      %s563 = scalar_select %p562, %s16, 1
      %s564 = scalar_lea.vmem %s4, %s563
      // Predicated region
      $region33: #{efficientnet_forward.6} parent=31 // pred_check
        %p565 = pneg %p102
      $region34: #{efficientnet_forward.6} parent=31 // pred_check_branch
        %567 = sbr.rel (%p565) target = $region36
      $region35: #{efficientnet_forward.6} parent=31 // pred_region
        _
      $region36: #{efficientnet_forward.6} parent=31 // pred_fallthru
        _
      // Predicated region
      $region37: #{efficientnet_forward.6} parent=31 // pred_check
        %p568 = pneg %p128
      $region38: #{efficientnet_forward.6} parent=31 // pred_check_branch
        %570 = sbr.rel (%p568) target = $region40
      $region39: #{efficientnet_forward.6} parent=31 // pred_region
        _
      $region40: #{efficientnet_forward.6} parent=31 // pred_fallthru
        _
    $region32: #{efficientnet_forward.6} parent=5 // pred_fallthru
      _
    %p571 = scmp.le.s32.totalorder 2, %s11
    // Predicated region
    $region41: #{efficientnet_forward.6} parent=5 // pred_check
      %p572 = pneg %p571
    $region42: #{efficientnet_forward.6} parent=5 // pred_check_branch
      %574 = sbr.rel (%p572) target = $region44
    $region43: #{efficientnet_forward.6} parent=5 // pred_region
      %s575 = ssub.s32 %s11, 2
      // Predicated region
      $region45: #{efficientnet_forward.6} parent=43 // pred_check
        %p576 = pneg %p108
      $region46: #{efficientnet_forward.6} parent=43 // pred_check_branch
        %578 = sbr.rel (%p576) target = $region48
      $region47: #{efficientnet_forward.6} parent=43 // pred_region
        %p579 = scmp.lt.s32.totalorder %s17, 1
        %s580 = scalar_select %p579, %s17, 1
        %s581 = smul.addr %s580, 8
        %s582 = smul.addr %s581, 4
        %s583 = scalar_lea.vmem %s3, %s582
      $region48: #{efficientnet_forward.6} parent=43 // pred_fallthru
        _
      // Predicated region
      $region49: #{efficientnet_forward.6} parent=43 // pred_check
        %p584 = pneg %p134
      $region50: #{efficientnet_forward.6} parent=43 // pred_check_branch
        %586 = sbr.rel (%p584) target = $region52
      $region51: #{efficientnet_forward.6} parent=43 // pred_region
        %p587 = scmp.lt.s32.totalorder %s17, 1
        %s588 = scalar_select %p587, %s17, 1
        %s589 = scalar_lea.vmem %s4, %s588
      $region52: #{efficientnet_forward.6} parent=43 // pred_fallthru
        _
    $region44: #{efficientnet_forward.6} parent=5 // pred_fallthru
      _
  $region6: #{efficientnet_forward.6} parent=0 // loop_footer
    %s15 = sadd.s32 1, %s11
  $region7: #{efficientnet_forward.6} parent=0 // loop_footer_branch
    %10 = sbr.rel target = $region3
  $region8: #{efficientnet_forward.6} parent=0 // loop_exit
    _

// kernel: efficientnet_forward.5
$region0: #{efficientnet_forward.5}
  #allocation0 [shape = 'u32[]', space=smem, size = 0x4, offset = 0x4, fixed_abs, tag = 'smem constant byte address 0x4 - core index']
  #allocation1 [shape = 'u32[144,128]{1,0:T(1,128)}', space=vmem, size = 0x12000, scoped, tag = 'internal scratch']
  %s0 = inlined_call_operand.vmem [shape: bf16[128,32], index: 0, kind: input, shape index: {}]
  %s1 = inlined_call_operand.vmem [shape: bf16[32,32], index: 1, kind: input, shape index: {}]
  %s2 = inlined_call_operand.vmem [shape: bf16[1,32], index: 2, kind: input, shape index: {}]
  %s3 = inlined_call_operand.vmem [shape: bf16[32,128], index: 3, kind: input, shape index: {}]
  %s4 = inlined_call_operand.vmem [shape: bf16[1,128], index: 4, kind: input, shape index: {}]
  %s5 = inlined_call_operand.vmem [shape: bf16[128,128], index: 5, kind: output, shape index: {0}]
  %s6 = inlined_call_operand.vmem [shape: bf16[128,32], index: 6, kind: output, shape index: {1}]
  %7 = xla_tuple %s5, %s6
  %s8 = sld [smem:[#allocation0]]
  $region38: #{efficientnet_forward.5} parent=0
    _
  %s10 = ssub.s32 1, %s8
  %s11 = scalar_select 0, %s10, %s8
  // Predicated region
  $region2: #{efficientnet_forward.5} parent=0 // pred_check
    _
  $region3: #{efficientnet_forward.5} parent=0 // pred_check_branch
    %13 = sbr.rel (0) target = $region5
  $region4: #{efficientnet_forward.5} parent=0 // pred_region
    _
  $region5: #{efficientnet_forward.5} parent=0 // pred_fallthru
    _
  // Predicated region
  $region6: #{efficientnet_forward.5} parent=0 // pred_check
    _
  $region7: #{efficientnet_forward.5} parent=0 // pred_check_branch
    %15 = sbr.rel (0) target = $region9
  $region8: #{efficientnet_forward.5} parent=0 // pred_region
    _
  $region9: #{efficientnet_forward.5} parent=0 // pred_fallthru
    _
  // Predicated region
  $region10: #{efficientnet_forward.5} parent=0 // pred_check
    _
  $region11: #{efficientnet_forward.5} parent=0 // pred_check_branch
    %17 = sbr.rel (0) target = $region13
  $region12: #{efficientnet_forward.5} parent=0 // pred_region
    _
  $region13: #{efficientnet_forward.5} parent=0 // pred_fallthru
    _
  // Predicated region
  $region14: #{efficientnet_forward.5} parent=0 // pred_check
    _
  $region15: #{efficientnet_forward.5} parent=0 // pred_check_branch
    %19 = sbr.rel (0) target = $region17
  $region16: #{efficientnet_forward.5} parent=0 // pred_region
    _
  $region17: #{efficientnet_forward.5} parent=0 // pred_fallthru
    _
  // Predicated region
  $region18: #{efficientnet_forward.5} parent=0 // pred_check
    _
  $region19: #{efficientnet_forward.5} parent=0 // pred_check_branch
    %21 = sbr.rel (0) target = $region21
  $region20: #{efficientnet_forward.5} parent=0 // pred_region
    _
  $region21: #{efficientnet_forward.5} parent=0 // pred_fallthru
    _
  %v23 = vld [vmem:[%s0] sm:$0xf]
  %v24 = vld [vmem:[%s0 + $0x4] sm:$0xf]
  %v25 = vld [vmem:[%s0 + $0x8] sm:$0xf]
  %v26 = vld [vmem:[%s0 + $0xc] sm:$0xf]
  %v27 = vld [vmem:[%s0 + $0x10] sm:$0xf]
  %v28 = vld [vmem:[%s0 + $0x14] sm:$0xf]
  %v29 = vld [vmem:[%s0 + $0x18] sm:$0xf]
  %v30 = vld [vmem:[%s0 + $0x1c] sm:$0xf]
  %v31 = vld [vmem:[%s0 + $0x20] sm:$0xf]
  %v32 = vld [vmem:[%s0 + $0x24] sm:$0xf]
  %v33 = vld [vmem:[%s0 + $0x28] sm:$0xf]
  %v34 = vld [vmem:[%s0 + $0x2c] sm:$0xf]
  %v35 = vld [vmem:[%s0 + $0x30] sm:$0xf]
  %v36 = vld [vmem:[%s0 + $0x34] sm:$0xf]
  %v37 = vld [vmem:[%s0 + $0x38] sm:$0xf]
  %v38 = vld [vmem:[%s0 + $0x3c] sm:$0xf]
  %v39 = vld [vmem:[%s1] sm:$0xf]
  %v40 = vld [vmem:[%s1 + $0x4] sm:$0xf]
  %v41 = vld [vmem:[%s1 + $0x8] sm:$0xf]
  %v42 = vld [vmem:[%s1 + $0xc] sm:$0xf]
  %v43 = vld [vmem:[%s2] sm:$0x1]
  %v44 = vunpack.c.l.bf16 %v43
  %v45 = vlaneseq
  %v46 = vshrl.u32 %v45, 7
  %v47 = vsub.s32 0, %v46
  %v48 = vrot.slane %v44, %v47
  %v65 = vunpack.c.l.b16 %v23
  %v66 = vunpack.c.l.b16 %v24
  %v67 = vunpack.c.l.b16 %v25
  %v68 = vunpack.c.l.b16 %v26
  %v69 = vunpack.c.l.b16 %v27
  %v70 = vunpack.c.l.b16 %v28
  %v71 = vunpack.c.l.b16 %v29
  %v72 = vunpack.c.l.b16 %v30
  %v73 = vunpack.c.l.b16 %v31
  %v74 = vunpack.c.l.b16 %v32
  %v75 = vunpack.c.l.b16 %v33
  %v76 = vunpack.c.l.b16 %v34
  %v77 = vunpack.c.l.b16 %v35
  %v78 = vunpack.c.l.b16 %v36
  %v79 = vunpack.c.l.b16 %v37
  %v80 = vunpack.c.l.b16 %v38
  %v81 = vpack.c.b16 %v66, %v65
  %v82 = vpack.c.b16 %v68, %v67
  %v83 = vpack.c.b16 %v70, %v69
  %v84 = vpack.c.b16 %v72, %v71
  %v85 = vpack.c.b16 %v74, %v73
  %v86 = vpack.c.b16 %v76, %v75
  %v87 = vpack.c.b16 %v78, %v77
  %v88 = vpack.c.b16 %v80, %v79
  %v93 = vunpack.c.l.b16 %v39
  %v94 = vunpack.c.l.b16 %v40
  %v95 = vunpack.c.l.b16 %v41
  %v96 = vunpack.c.l.b16 %v42
  %v97 = vpack.c.b16 %v94, %v93
  %v98 = vpack.c.b16 %v96, %v95
  %vm101 = vcmask 261120
  %v103 = vsel %vm101, %v81, 0
  %v106 = vsel %vm101, %v82, 0
  %v109 = vsel %vm101, %v83, 0
  %v112 = vsel %vm101, %v84, 0
  %v115 = vsel %vm101, %v85, 0
  %v118 = vsel %vm101, %v86, 0
  %v121 = vsel %vm101, %v87, 0
  %v124 = vsel %vm101, %v88, 0
  %126 = vmatprep.subr.bf16.mxu0 0
  %127 = vmatpush1.bf16.msra.mxu0 %v97
  %128 = vmatprep.subr.bf16.mxu0 0
  %129 = vmatpush1.bf16.msra.mxu0 %v98
  %130 = vmatprep.subr.bf16.mxu0 0
  %131 = vmatpush1.bf16.msra.mxu0 0
  %132 = vmatprep.subr.bf16.mxu0 0
  %133 = vmatpush1.bf16.msra.mxu0 0
  %134 = vmatprep.subr.bf16.mxu0 0
  %135 = vmatpush1.bf16.msra.mxu0 0
  %136 = vmatprep.subr.bf16.mxu0 0
  %137 = vmatpush1.bf16.msra.mxu0 0
  %138 = vmatprep.subr.bf16.mxu0 0
  %139 = vmatpush1.bf16.msra.mxu0 0
  %140 = vmatprep.subr.bf16.mxu0 0
  %141 = vmatpush1.bf16.msra.mxu0 0
  %142 = vmatprep.subr.bf16.mxu0 0
  %143 = vmatpush1.bf16.msra.mxu0 0
  %144 = vmatprep.subr.bf16.mxu0 0
  %145 = vmatpush1.bf16.msra.mxu0 0
  %146 = vmatprep.subr.bf16.mxu0 0
  %147 = vmatpush1.bf16.msra.mxu0 0
  %148 = vmatprep.subr.bf16.mxu0 0
  %149 = vmatpush1.bf16.msra.mxu0 0
  %150 = vmatprep.subr.bf16.mxu0 0
  %151 = vmatpush1.bf16.msra.mxu0 0
  %152 = vmatprep.subr.bf16.mxu0 0
  %153 = vmatpush1.bf16.msra.mxu0 0
  %154 = vmatprep.subr.bf16.mxu0 0
  %155 = vmatpush1.bf16.msra.mxu0 0
  %156 = vmatprep.subr.bf16.mxu0 0
  %157 = vmatpush1.bf16.msra.mxu0 0
  %158 = vmatprep.mubr.bf16.mxu0 0
  %159 = vmatmul.mubr.bf16.gmra.mrb[0].mxu0 %v103
  %v160 = vpop.f32.mrb[0].mxu0
  %v161 = vadd.f32 %v48, %v160
  %v162 = vpop.f32.mrb[0].mxu0
  %v163 = vpop.f32.mrb[0].mxu0
  %v164 = vadd.f32 %v48, %v163
  %v165 = vpop.f32.mrb[0].mxu0
  %166 = vmatprep.mubr.bf16.mxu0 0
  %167 = vmatmul.mubr.bf16.gmra.mrb[0].mxu0 %v106
  %v168 = vpop.f32.mrb[0].mxu0
  %v169 = vadd.f32 %v48, %v168
  %v170 = vpop.f32.mrb[0].mxu0
  %v171 = vpop.f32.mrb[0].mxu0
  %v172 = vadd.f32 %v48, %v171
  %v173 = vpop.f32.mrb[0].mxu0
  %174 = vmatprep.mubr.bf16.mxu0 0
  %175 = vmatmul.mubr.bf16.gmra.mrb[0].mxu0 %v109
  %v176 = vpop.f32.mrb[0].mxu0
  %v177 = vadd.f32 %v48, %v176
  %v178 = vpop.f32.mrb[0].mxu0
  %v179 = vpop.f32.mrb[0].mxu0
  %v180 = vadd.f32 %v48, %v179
  %v181 = vpop.f32.mrb[0].mxu0
  %182 = vmatprep.mubr.bf16.mxu0 0
  %183 = vmatmul.mubr.bf16.gmra.mrb[0].mxu0 %v112
  %v184 = vpop.f32.mrb[0].mxu0
  %v185 = vadd.f32 %v48, %v184
  %v186 = vpop.f32.mrb[0].mxu0
  %v187 = vpop.f32.mrb[0].mxu0
  %v188 = vadd.f32 %v48, %v187
  %v189 = vpop.f32.mrb[0].mxu0
  %190 = vmatprep.mubr.bf16.mxu0 0
  %191 = vmatmul.mubr.bf16.gmra.mrb[0].mxu0 %v115
  %v192 = vpop.f32.mrb[0].mxu0
  %v193 = vadd.f32 %v48, %v192
  %v194 = vpop.f32.mrb[0].mxu0
  %v195 = vpop.f32.mrb[0].mxu0
  %v196 = vadd.f32 %v48, %v195
  %v197 = vpop.f32.mrb[0].mxu0
  %198 = vmatprep.mubr.bf16.mxu0 0
  %199 = vmatmul.mubr.bf16.gmra.mrb[0].mxu0 %v118
  %v200 = vpop.f32.mrb[0].mxu0
  %v201 = vadd.f32 %v48, %v200
  %v202 = vpop.f32.mrb[0].mxu0
  %v203 = vpop.f32.mrb[0].mxu0
  %v204 = vadd.f32 %v48, %v203
  %v205 = vpop.f32.mrb[0].mxu0
  %206 = vmatprep.mubr.bf16.mxu0 0
  %207 = vmatmul.mubr.bf16.gmra.mrb[0].mxu0 %v121
  %v208 = vpop.f32.mrb[0].mxu0
  %v209 = vadd.f32 %v48, %v208
  %v210 = vpop.f32.mrb[0].mxu0
  %v211 = vpop.f32.mrb[0].mxu0
  %v212 = vadd.f32 %v48, %v211
  %v213 = vpop.f32.mrb[0].mxu0
  %214 = vmatprep.mubr.bf16.mxu0 0
  %215 = vmatmul.mubr.bf16.gmra.mrb[0].mxu0 %v124
  %v216 = vpop.f32.mrb[0].mxu0
  %v217 = vadd.f32 %v48, %v216
  %v218 = vpop.f32.mrb[0].mxu0
  %v219 = vpop.f32.mrb[0].mxu0
  %v220 = vadd.f32 %v48, %v219
  %v221 = vpop.f32.mrb[0].mxu0
  %222 = vdwg.mxu0
  %v223 = vxor.u32 %v161, 2147483648
  %v224 = vxor.u32 %v164, 2147483648
  %v225 = vxor.u32 %v169, 2147483648
  %v226 = vxor.u32 %v172, 2147483648
  %v227 = vxor.u32 %v177, 2147483648
  %v228 = vxor.u32 %v180, 2147483648
  %v229 = vxor.u32 %v185, 2147483648
  %v230 = vxor.u32 %v188, 2147483648
  %v231 = vxor.u32 %v193, 2147483648
  %v232 = vxor.u32 %v196, 2147483648
  %v233 = vxor.u32 %v201, 2147483648
  %v234 = vxor.u32 %v204, 2147483648
  %v235 = vxor.u32 %v209, 2147483648
  %v236 = vxor.u32 %v212, 2147483648
  %v237 = vxor.u32 %v217, 2147483648
  %v238 = vxor.u32 %v220, 2147483648
  %v239 = vmul.f32 %v223, 1.442695
  %v240 = vpow.pop %v239
  %v241 = vmul.f32 %v224, 1.442695
  %v242 = vpow.pop %v241
  %v243 = vmul.f32 %v225, 1.442695
  %v244 = vpow.pop %v243
  %v245 = vmul.f32 %v226, 1.442695
  %v246 = vpow.pop %v245
  %v247 = vmul.f32 %v227, 1.442695
  %v248 = vpow.pop %v247
  %v249 = vmul.f32 %v228, 1.442695
  %v250 = vpow.pop %v249
  %v251 = vmul.f32 %v229, 1.442695
  %v252 = vpow.pop %v251
  %v253 = vmul.f32 %v230, 1.442695
  %v254 = vpow.pop %v253
  %v255 = vmul.f32 %v231, 1.442695
  %v256 = vpow.pop %v255
  %v257 = vmul.f32 %v232, 1.442695
  %v258 = vpow.pop %v257
  %v259 = vmul.f32 %v233, 1.442695
  %v260 = vpow.pop %v259
  %v261 = vmul.f32 %v234, 1.442695
  %v262 = vpow.pop %v261
  %v263 = vmul.f32 %v235, 1.442695
  %v264 = vpow.pop %v263
  %v265 = vmul.f32 %v236, 1.442695
  %v266 = vpow.pop %v265
  %v267 = vmul.f32 %v237, 1.442695
  %v268 = vpow.pop %v267
  %v269 = vmul.f32 %v238, 1.442695
  %v270 = vpow.pop %v269
  %v271 = vadd.f32 %v240, 1.0
  %v272 = vadd.f32 %v242, 1.0
  %v273 = vadd.f32 %v244, 1.0
  %v274 = vadd.f32 %v246, 1.0
  %v275 = vadd.f32 %v248, 1.0
  %v276 = vadd.f32 %v250, 1.0
  %v277 = vadd.f32 %v252, 1.0
  %v278 = vadd.f32 %v254, 1.0
  %v279 = vadd.f32 %v256, 1.0
  %v280 = vadd.f32 %v258, 1.0
  %v281 = vadd.f32 %v260, 1.0
  %v282 = vadd.f32 %v262, 1.0
  %v283 = vadd.f32 %v264, 1.0
  %v284 = vadd.f32 %v266, 1.0
  %v285 = vadd.f32 %v268, 1.0
  %v286 = vadd.f32 %v270, 1.0
  %v287 = vrcp.pop %v271
  %v288 = vmul.f32 1.0, %v287
  %v289 = vrcp.pop %v272
  %v290 = vmul.f32 1.0, %v289
  %v291 = vrcp.pop %v273
  %v292 = vmul.f32 1.0, %v291
  %v293 = vrcp.pop %v274
  %v294 = vmul.f32 1.0, %v293
  %v295 = vrcp.pop %v275
  %v296 = vmul.f32 1.0, %v295
  %v297 = vrcp.pop %v276
  %v298 = vmul.f32 1.0, %v297
  %v299 = vrcp.pop %v277
  %v300 = vmul.f32 1.0, %v299
  %v301 = vrcp.pop %v278
  %v302 = vmul.f32 1.0, %v301
  %v303 = vrcp.pop %v279
  %v304 = vmul.f32 1.0, %v303
  %v305 = vrcp.pop %v280
  %v306 = vmul.f32 1.0, %v305
  %v307 = vrcp.pop %v281
  %v308 = vmul.f32 1.0, %v307
  %v309 = vrcp.pop %v282
  %v310 = vmul.f32 1.0, %v309
  %v311 = vrcp.pop %v283
  %v312 = vmul.f32 1.0, %v311
  %v313 = vrcp.pop %v284
  %v314 = vmul.f32 1.0, %v313
  %v315 = vrcp.pop %v285
  %v316 = vmul.f32 1.0, %v315
  %v317 = vrcp.pop %v286
  %v318 = vmul.f32 1.0, %v317
  %v319 = vmul.f32 %v161, %v288
  %v320 = vmul.f32 %v164, %v290
  %v321 = vmul.f32 %v169, %v292
  %v322 = vmul.f32 %v172, %v294
  %v323 = vmul.f32 %v177, %v296
  %v324 = vmul.f32 %v180, %v298
  %v325 = vmul.f32 %v185, %v300
  %v326 = vmul.f32 %v188, %v302
  %v327 = vmul.f32 %v193, %v304
  %v328 = vmul.f32 %v196, %v306
  %v329 = vmul.f32 %v201, %v308
  %v330 = vmul.f32 %v204, %v310
  %v331 = vmul.f32 %v209, %v312
  %v332 = vmul.f32 %v212, %v314
  %v333 = vmul.f32 %v217, %v316
  %v334 = vmul.f32 %v220, %v318
  %v335 = vpack.c.bf16 %v320, %v319
  %v336 = vpack.c.bf16 %v322, %v321
  %v337 = vpack.c.bf16 %v324, %v323
  %v338 = vpack.c.bf16 %v326, %v325
  %v339 = vpack.c.bf16 %v328, %v327
  %v340 = vpack.c.bf16 %v330, %v329
  %v341 = vpack.c.bf16 %v332, %v331
  %v342 = vpack.c.bf16 %v334, %v333
  %v351 = vunpack.c.l.b16 %v335
  %v352 = vunpack.c.h.b16 %v335
  %v353 = vunpack.c.l.b16 %v336
  %v354 = vunpack.c.h.b16 %v336
  %v355 = vunpack.c.l.b16 %v337
  %v356 = vunpack.c.h.b16 %v337
  %v357 = vunpack.c.l.b16 %v338
  %v358 = vunpack.c.h.b16 %v338
  %v359 = vunpack.c.l.b16 %v339
  %v360 = vunpack.c.h.b16 %v339
  %v361 = vunpack.c.l.b16 %v340
  %v362 = vunpack.c.h.b16 %v340
  %v363 = vunpack.c.l.b16 %v341
  %v364 = vunpack.c.h.b16 %v341
  %v365 = vunpack.c.l.b16 %v342
  %v366 = vunpack.c.h.b16 %v342
  %v367 = vpack.c.b16 %v351, %v351
  %v368 = vpack.c.b16 %v352, %v352
  %v369 = vpack.c.b16 %v353, %v353
  %v370 = vpack.c.b16 %v354, %v354
  %v371 = vpack.c.b16 %v355, %v355
  %v372 = vpack.c.b16 %v356, %v356
  %v373 = vpack.c.b16 %v357, %v357
  %v374 = vpack.c.b16 %v358, %v358
  %v375 = vpack.c.b16 %v359, %v359
  %v376 = vpack.c.b16 %v360, %v360
  %v377 = vpack.c.b16 %v361, %v361
  %v378 = vpack.c.b16 %v362, %v362
  %v379 = vpack.c.b16 %v363, %v363
  %v380 = vpack.c.b16 %v364, %v364
  %v381 = vpack.c.b16 %v365, %v365
  %v382 = vpack.c.b16 %v366, %v366
  %vm399 = vcmask 257024
  %400 = vst.msk [vmem:[%s6] sm:$0xf] %vm399, %v367
  %401 = vst.msk [vmem:[%s6 + $0x4] sm:$0xf] %vm399, %v368
  %402 = vst.msk [vmem:[%s6 + $0x8] sm:$0xf] %vm399, %v369
  %403 = vst.msk [vmem:[%s6 + $0xc] sm:$0xf] %vm399, %v370
  %404 = vst.msk [vmem:[%s6 + $0x10] sm:$0xf] %vm399, %v371
  %405 = vst.msk [vmem:[%s6 + $0x14] sm:$0xf] %vm399, %v372
  %406 = vst.msk [vmem:[%s6 + $0x18] sm:$0xf] %vm399, %v373
  %407 = vst.msk [vmem:[%s6 + $0x1c] sm:$0xf] %vm399, %v374
  %408 = vst.msk [vmem:[%s6 + $0x20] sm:$0xf] %vm399, %v375
  %409 = vst.msk [vmem:[%s6 + $0x24] sm:$0xf] %vm399, %v376
  %410 = vst.msk [vmem:[%s6 + $0x28] sm:$0xf] %vm399, %v377
  %411 = vst.msk [vmem:[%s6 + $0x2c] sm:$0xf] %vm399, %v378
  %412 = vst.msk [vmem:[%s6 + $0x30] sm:$0xf] %vm399, %v379
  %413 = vst.msk [vmem:[%s6 + $0x34] sm:$0xf] %vm399, %v380
  %414 = vst.msk [vmem:[%s6 + $0x38] sm:$0xf] %vm399, %v381
  %415 = vst.msk [vmem:[%s6 + $0x3c] sm:$0xf] %vm399, %v382
  %v416 = vld [vmem:[%s3] sm:$0xf]
  %v417 = vld [vmem:[%s3 + $0x4] sm:$0xf]
  %v418 = vld [vmem:[%s3 + $0x8] sm:$0xf]
  %v419 = vld [vmem:[%s3 + $0xc] sm:$0xf]
  %v420 = vld [vmem:[%s4] sm:$0x1]
  %v421 = vunpack.c.l.bf16 %v420
  %v422 = vlaneseq
  %v423 = vshrl.u32 %v422, 7
  %v424 = vsub.s32 0, %v423
  %v425 = vrot.slane %v421, %v424
  %v430 = vunpack.c.l.b16 %v416
  %v431 = vunpack.c.l.b16 %v417
  %v432 = vunpack.c.l.b16 %v418
  %v433 = vunpack.c.l.b16 %v419
  %v434 = vpack.c.b16 %v431, %v430
  %v435 = vpack.c.b16 %v433, %v432
  %v439 = vsel %vm101, %v335, 0
  %v442 = vsel %vm101, %v336, 0
  %v445 = vsel %vm101, %v337, 0
  %v448 = vsel %vm101, %v338, 0
  %v451 = vsel %vm101, %v339, 0
  %v454 = vsel %vm101, %v340, 0
  %v457 = vsel %vm101, %v341, 0
  %v460 = vsel %vm101, %v342, 0
  %462 = vmatprep.subr.bf16.mxu0 0
  %463 = vmatpush1.bf16.msra.mxu0 %v434
  %464 = vmatprep.subr.bf16.mxu0 0
  %465 = vmatpush1.bf16.msra.mxu0 %v435
  %466 = vmatprep.subr.bf16.mxu0 0
  %467 = vmatpush1.bf16.msra.mxu0 0
  %468 = vmatprep.subr.bf16.mxu0 0
  %469 = vmatpush1.bf16.msra.mxu0 0
  %470 = vmatprep.subr.bf16.mxu0 0
  %471 = vmatpush1.bf16.msra.mxu0 0
  %472 = vmatprep.subr.bf16.mxu0 0
  %473 = vmatpush1.bf16.msra.mxu0 0
  %474 = vmatprep.subr.bf16.mxu0 0
  %475 = vmatpush1.bf16.msra.mxu0 0
  %476 = vmatprep.subr.bf16.mxu0 0
  %477 = vmatpush1.bf16.msra.mxu0 0
  %478 = vmatprep.subr.bf16.mxu0 0
  %479 = vmatpush1.bf16.msra.mxu0 0
  %480 = vmatprep.subr.bf16.mxu0 0
  %481 = vmatpush1.bf16.msra.mxu0 0
  %482 = vmatprep.subr.bf16.mxu0 0
  %483 = vmatpush1.bf16.msra.mxu0 0
  %484 = vmatprep.subr.bf16.mxu0 0
  %485 = vmatpush1.bf16.msra.mxu0 0
  %486 = vmatprep.subr.bf16.mxu0 0
  %487 = vmatpush1.bf16.msra.mxu0 0
  %488 = vmatprep.subr.bf16.mxu0 0
  %489 = vmatpush1.bf16.msra.mxu0 0
  %490 = vmatprep.subr.bf16.mxu0 0
  %491 = vmatpush1.bf16.msra.mxu0 0
  %492 = vmatprep.subr.bf16.mxu0 0
  %493 = vmatpush1.bf16.msra.mxu0 0
  %494 = vmatprep.mubr.bf16.mxu0 0
  %495 = vmatmul.mubr.bf16.gmra.mrb[0].mxu0 %v439
  %v496 = vpop.f32.mrb[0].mxu0
  %v497 = vadd.f32 %v425, %v496
  %v498 = vpop.f32.mrb[0].mxu0
  %v499 = vpop.f32.mrb[0].mxu0
  %v500 = vadd.f32 %v425, %v499
  %v501 = vpop.f32.mrb[0].mxu0
  %502 = vmatprep.mubr.bf16.mxu0 0
  %503 = vmatmul.mubr.bf16.gmra.mrb[0].mxu0 %v442
  %v504 = vpop.f32.mrb[0].mxu0
  %v505 = vadd.f32 %v425, %v504
  %v506 = vpop.f32.mrb[0].mxu0
  %v507 = vpop.f32.mrb[0].mxu0
  %v508 = vadd.f32 %v425, %v507
  %v509 = vpop.f32.mrb[0].mxu0
  %510 = vmatprep.mubr.bf16.mxu0 0
  %511 = vmatmul.mubr.bf16.gmra.mrb[0].mxu0 %v445
  %v512 = vpop.f32.mrb[0].mxu0
  %v513 = vadd.f32 %v425, %v512
  %v514 = vpop.f32.mrb[0].mxu0
  %v515 = vpop.f32.mrb[0].mxu0
  %v516 = vadd.f32 %v425, %v515
  %v517 = vpop.f32.mrb[0].mxu0
  %518 = vmatprep.mubr.bf16.mxu0 0
  %519 = vmatmul.mubr.bf16.gmra.mrb[0].mxu0 %v448
  %v520 = vpop.f32.mrb[0].mxu0
  %v521 = vadd.f32 %v425, %v520
  %v522 = vpop.f32.mrb[0].mxu0
  %v523 = vpop.f32.mrb[0].mxu0
  %v524 = vadd.f32 %v425, %v523
  %v525 = vpop.f32.mrb[0].mxu0
  %526 = vmatprep.mubr.bf16.mxu0 0
  %527 = vmatmul.mubr.bf16.gmra.mrb[0].mxu0 %v451
  %v528 = vpop.f32.mrb[0].mxu0
  %v529 = vadd.f32 %v425, %v528
  %v530 = vpop.f32.mrb[0].mxu0
  %v531 = vpop.f32.mrb[0].mxu0
  %v532 = vadd.f32 %v425, %v531
  %v533 = vpop.f32.mrb[0].mxu0
  %534 = vmatprep.mubr.bf16.mxu0 0
  %535 = vmatmul.mubr.bf16.gmra.mrb[0].mxu0 %v454
  %v536 = vpop.f32.mrb[0].mxu0
  %v537 = vadd.f32 %v425, %v536
  %v538 = vpop.f32.mrb[0].mxu0
  %v539 = vpop.f32.mrb[0].mxu0
  %v540 = vadd.f32 %v425, %v539
  %v541 = vpop.f32.mrb[0].mxu0
  %542 = vmatprep.mubr.bf16.mxu0 0
  %543 = vmatmul.mubr.bf16.gmra.mrb[0].mxu0 %v457
  %v544 = vpop.f32.mrb[0].mxu0
  %v545 = vadd.f32 %v425, %v544
  %v546 = vpop.f32.mrb[0].mxu0
  %v547 = vpop.f32.mrb[0].mxu0
  %v548 = vadd.f32 %v425, %v547
  %v549 = vpop.f32.mrb[0].mxu0
  %550 = vmatprep.mubr.bf16.mxu0 0
  %551 = vmatmul.mubr.bf16.gmra.mrb[0].mxu0 %v460
  %v552 = vpop.f32.mrb[0].mxu0
  %v553 = vadd.f32 %v425, %v552
  %v554 = vpop.f32.mrb[0].mxu0
  %v555 = vpop.f32.mrb[0].mxu0
  %v556 = vadd.f32 %v425, %v555
  %v557 = vpop.f32.mrb[0].mxu0
  %558 = vdwg.mxu0
  %v559 = vxor.u32 %v497, 2147483648
  %v560 = vxor.u32 %v500, 2147483648
  %v561 = vxor.u32 %v505, 2147483648
  %v562 = vxor.u32 %v508, 2147483648
  %v563 = vxor.u32 %v513, 2147483648
  %v564 = vxor.u32 %v516, 2147483648
  %v565 = vxor.u32 %v521, 2147483648
  %v566 = vxor.u32 %v524, 2147483648
  %v567 = vxor.u32 %v529, 2147483648
  %v568 = vxor.u32 %v532, 2147483648
  %v569 = vxor.u32 %v537, 2147483648
  %v570 = vxor.u32 %v540, 2147483648
  %v571 = vxor.u32 %v545, 2147483648
  %v572 = vxor.u32 %v548, 2147483648
  %v573 = vxor.u32 %v553, 2147483648
  %v574 = vxor.u32 %v556, 2147483648
  %v575 = vmul.f32 %v559, 1.442695
  %v576 = vpow.pop %v575
  %v577 = vmul.f32 %v560, 1.442695
  %v578 = vpow.pop %v577
  %v579 = vmul.f32 %v561, 1.442695
  %v580 = vpow.pop %v579
  %v581 = vmul.f32 %v562, 1.442695
  %v582 = vpow.pop %v581
  %v583 = vmul.f32 %v563, 1.442695
  %v584 = vpow.pop %v583
  %v585 = vmul.f32 %v564, 1.442695
  %v586 = vpow.pop %v585
  %v587 = vmul.f32 %v565, 1.442695
  %v588 = vpow.pop %v587
  %v589 = vmul.f32 %v566, 1.442695
  %v590 = vpow.pop %v589
  %v591 = vmul.f32 %v567, 1.442695
  %v592 = vpow.pop %v591
  %v593 = vmul.f32 %v568, 1.442695
  %v594 = vpow.pop %v593
  %v595 = vmul.f32 %v569, 1.442695
  %v596 = vpow.pop %v595
  %v597 = vmul.f32 %v570, 1.442695
  %v598 = vpow.pop %v597
  %v599 = vmul.f32 %v571, 1.442695
  %v600 = vpow.pop %v599
  %v601 = vmul.f32 %v572, 1.442695
  %v602 = vpow.pop %v601
  %v603 = vmul.f32 %v573, 1.442695
  %v604 = vpow.pop %v603
  %v605 = vmul.f32 %v574, 1.442695
  %v606 = vpow.pop %v605
  %v607 = vadd.f32 %v576, 1.0
  %v608 = vadd.f32 %v578, 1.0
  %v609 = vadd.f32 %v580, 1.0
  %v610 = vadd.f32 %v582, 1.0
  %v611 = vadd.f32 %v584, 1.0
  %v612 = vadd.f32 %v586, 1.0
  %v613 = vadd.f32 %v588, 1.0
  %v614 = vadd.f32 %v590, 1.0
  %v615 = vadd.f32 %v592, 1.0
  %v616 = vadd.f32 %v594, 1.0
  %v617 = vadd.f32 %v596, 1.0
  %v618 = vadd.f32 %v598, 1.0
  %v619 = vadd.f32 %v600, 1.0
  %v620 = vadd.f32 %v602, 1.0
  %v621 = vadd.f32 %v604, 1.0
  %v622 = vadd.f32 %v606, 1.0
  %v623 = vrcp.pop %v607
  %v624 = vmul.f32 1.0, %v623
  %v625 = vrcp.pop %v608
  %v626 = vmul.f32 1.0, %v625
  %v627 = vrcp.pop %v609
  %v628 = vmul.f32 1.0, %v627
  %v629 = vrcp.pop %v610
  %v630 = vmul.f32 1.0, %v629
  %v631 = vrcp.pop %v611
  %v632 = vmul.f32 1.0, %v631
  %v633 = vrcp.pop %v612
  %v634 = vmul.f32 1.0, %v633
  %v635 = vrcp.pop %v613
  %v636 = vmul.f32 1.0, %v635
  %v637 = vrcp.pop %v614
  %v638 = vmul.f32 1.0, %v637
  %v639 = vrcp.pop %v615
  %v640 = vmul.f32 1.0, %v639
  %v641 = vrcp.pop %v616
  %v642 = vmul.f32 1.0, %v641
  %v643 = vrcp.pop %v617
  %v644 = vmul.f32 1.0, %v643
  %v645 = vrcp.pop %v618
  %v646 = vmul.f32 1.0, %v645
  %v647 = vrcp.pop %v619
  %v648 = vmul.f32 1.0, %v647
  %v649 = vrcp.pop %v620
  %v650 = vmul.f32 1.0, %v649
  %v651 = vrcp.pop %v621
  %v652 = vmul.f32 1.0, %v651
  %v653 = vrcp.pop %v622
  %v654 = vmul.f32 1.0, %v653
  %v655 = vmul.f32 %v497, %v624
  %v656 = vmul.f32 %v500, %v626
  %v657 = vmul.f32 %v505, %v628
  %v658 = vmul.f32 %v508, %v630
  %v659 = vmul.f32 %v513, %v632
  %v660 = vmul.f32 %v516, %v634
  %v661 = vmul.f32 %v521, %v636
  %v662 = vmul.f32 %v524, %v638
  %v663 = vmul.f32 %v529, %v640
  %v664 = vmul.f32 %v532, %v642
  %v665 = vmul.f32 %v537, %v644
  %v666 = vmul.f32 %v540, %v646
  %v667 = vmul.f32 %v545, %v648
  %v668 = vmul.f32 %v548, %v650
  %v669 = vmul.f32 %v553, %v652
  %v670 = vmul.f32 %v556, %v654
  %v671 = vpack.c.bf16 %v656, %v655
  %v672 = vpack.c.bf16 %v658, %v657
  %v673 = vpack.c.bf16 %v660, %v659
  %v674 = vpack.c.bf16 %v662, %v661
  %v675 = vpack.c.bf16 %v664, %v663
  %v676 = vpack.c.bf16 %v666, %v665
  %v677 = vpack.c.bf16 %v668, %v667
  %v678 = vpack.c.bf16 %v670, %v669
  %v687 = vunpack.c.l.b16 %v671
  %v688 = vunpack.c.h.b16 %v671
  %v689 = vunpack.c.l.b16 %v672
  %v690 = vunpack.c.h.b16 %v672
  %v691 = vunpack.c.l.b16 %v673
  %v692 = vunpack.c.h.b16 %v673
  %v693 = vunpack.c.l.b16 %v674
  %v694 = vunpack.c.h.b16 %v674
  %v695 = vunpack.c.l.b16 %v675
  %v696 = vunpack.c.h.b16 %v675
  %v697 = vunpack.c.l.b16 %v676
  %v698 = vunpack.c.h.b16 %v676
  %v699 = vunpack.c.l.b16 %v677
  %v700 = vunpack.c.h.b16 %v677
  %v701 = vunpack.c.l.b16 %v678
  %v702 = vunpack.c.h.b16 %v678
  %v703 = vpack.c.b16 %v687, %v687
  %v704 = vpack.c.b16 %v688, %v688
  %v705 = vpack.c.b16 %v689, %v689
  %v706 = vpack.c.b16 %v690, %v690
  %v707 = vpack.c.b16 %v691, %v691
  %v708 = vpack.c.b16 %v692, %v692
  %v709 = vpack.c.b16 %v693, %v693
  %v710 = vpack.c.b16 %v694, %v694
  %v711 = vpack.c.b16 %v695, %v695
  %v712 = vpack.c.b16 %v696, %v696
  %v713 = vpack.c.b16 %v697, %v697
  %v714 = vpack.c.b16 %v698, %v698
  %v715 = vpack.c.b16 %v699, %v699
  %v716 = vpack.c.b16 %v700, %v700
  %v717 = vpack.c.b16 %v701, %v701
  %v718 = vpack.c.b16 %v702, %v702
  %735 = vst [vmem:[%s5] sm:$0xf] %v703
  %736 = vst [vmem:[%s5 + $0x4] sm:$0xf] %v704
  %737 = vst [vmem:[%s5 + $0x8] sm:$0xf] %v705
  %738 = vst [vmem:[%s5 + $0xc] sm:$0xf] %v706
  %739 = vst [vmem:[%s5 + $0x10] sm:$0xf] %v707
  %740 = vst [vmem:[%s5 + $0x14] sm:$0xf] %v708
  %741 = vst [vmem:[%s5 + $0x18] sm:$0xf] %v709
  %742 = vst [vmem:[%s5 + $0x1c] sm:$0xf] %v710
  %743 = vst [vmem:[%s5 + $0x20] sm:$0xf] %v711
  %744 = vst [vmem:[%s5 + $0x24] sm:$0xf] %v712
  %745 = vst [vmem:[%s5 + $0x28] sm:$0xf] %v713
  %746 = vst [vmem:[%s5 + $0x2c] sm:$0xf] %v714
  %747 = vst [vmem:[%s5 + $0x30] sm:$0xf] %v715
  %748 = vst [vmem:[%s5 + $0x34] sm:$0xf] %v716
  %749 = vst [vmem:[%s5 + $0x38] sm:$0xf] %v717
  %750 = vst [vmem:[%s5 + $0x3c] sm:$0xf] %v718
  // Predicated region
  $region22: #{efficientnet_forward.5} parent=0 // pred_check
    _
  $region23: #{efficientnet_forward.5} parent=0 // pred_check_branch
    %752 = sbr.rel (0) target = $region25
  $region24: #{efficientnet_forward.5} parent=0 // pred_region
    _
  $region25: #{efficientnet_forward.5} parent=0 // pred_fallthru
    _
  // Predicated region
  $region26: #{efficientnet_forward.5} parent=0 // pred_check
    _
  $region27: #{efficientnet_forward.5} parent=0 // pred_check_branch
    %754 = sbr.rel (0) target = $region29
  $region28: #{efficientnet_forward.5} parent=0 // pred_region
    _
  $region29: #{efficientnet_forward.5} parent=0 // pred_fallthru
    _
  // Predicated region
  $region30: #{efficientnet_forward.5} parent=0 // pred_check
    _
  $region31: #{efficientnet_forward.5} parent=0 // pred_check_branch
    %756 = sbr.rel (0) target = $region33
  $region32: #{efficientnet_forward.5} parent=0 // pred_region
    _
  $region33: #{efficientnet_forward.5} parent=0 // pred_fallthru
    _
  // Predicated region
  $region34: #{efficientnet_forward.5} parent=0 // pred_check
    _
  $region35: #{efficientnet_forward.5} parent=0 // pred_check_branch
    %758 = sbr.rel (0) target = $region37
  $region36: #{efficientnet_forward.5} parent=0 // pred_region
    _
  $region37: #{efficientnet_forward.5} parent=0 // pred_fallthru
    _

// kernel: efficientnet_forward.8
$region0: #{efficientnet_forward.8}
  #allocation0 [shape = 'u32[]', space=smem, size = 0x4, offset = 0x4, fixed_abs, tag = 'smem constant byte address 0x4 - core index']
  #allocation1 [shape = 'u32[144,128]{1,0:T(1,128)}', space=vmem, size = 0x12000, scoped, tag = 'internal scratch']
  #allocation2 [shape = 'f32[1,1280]{1,0:T(1,128)}', space=vmem, size = 0x1400, scoped, tag = 'scratch operand']
  %s0 = inlined_call_operand.vmem [shape: bf16[2,64,128], index: 0, kind: input, shape index: {}]
  %s1 = inlined_call_operand.vmem [shape: bf16[2,1,128], index: 1, kind: input, shape index: {}]
  %s2 = inlined_call_operand.vmem [shape: bf16[128,32], index: 2, kind: input, shape index: {}]
  %s3 = inlined_call_operand.vmem [shape: bf16[1,32], index: 3, kind: input, shape index: {}]
  %s4 = inlined_call_operand.vmem [shape: bf16[2,64,32], index: 4, kind: input, shape index: {}]
  %s5 = inlined_call_operand.vmem [shape: bf16[32,1280], index: 5, kind: input, shape index: {}]
  %s6 = inlined_call_operand.vmem [shape: bf16[1,1280], index: 6, kind: input, shape index: {}]
  %s7 = inlined_call_operand.vmem [shape: bf16[2,1,1280], index: 7, kind: output, shape index: {}]
  %s8 = sld [smem:[#allocation0]]
  $region69: #{efficientnet_forward.8} parent=0
    _
  %s10 = ssub.s32 1, %s8
  %s11 = scalar_select 0, %s10, %s8
  loop: start=0, step=1, limit=4
  $region2: #{efficientnet_forward.8} parent=0 // loop_pre_header
    _
  $region3: #{efficientnet_forward.8} parent=0 // loop_header
    %s13 = sphi 0, %s17
    %p14 = scmp.ge.s32.totalorder %s13, 4
    %s20 = sphi 0, %s32
    %s21 = sphi 0, %s28
    %s22 = sphi 0, %s20
    %s23 = sphi 0, %s21
    %s24 = sphi 0, %s22
    %s25 = sphi 0, %s23
    %s37 = sphi 0, %s39
    %s40 = sphi 0, %s37
    %s41 = sphi 0, %s40
    %s57 = sphi 0, %s41
    %s63 = sphi 0, %s65
    %s66 = sphi 0, %s63
    %s67 = sphi 0, %s66
    %s83 = sphi 0, %s67
    %s87 = sphi 0, %s87
    %s89 = sphi 0, %s87
    %s90 = sphi 0, %s89
    %s104 = sphi 0, %s90
    %s108 = sphi 0, %s108
    %s110 = sphi 0, %s108
    %s111 = sphi 0, %s110
    %s125 = sphi 0, %s111
    %s133 = sphi 0, %s135
    %s136 = sphi 0, %s133
    %s137 = sphi 0, %s136
    %s153 = sphi 0, %s137
    %s157 = sphi 0, %s157
    %s159 = sphi 0, %s157
    %s160 = sphi 0, %s159
    %s174 = sphi 0, %s160
    %s178 = sphi 0, %s178
    %s180 = sphi 0, %s178
    %s181 = sphi 0, %s180
    %s195 = sphi 0, %s181
    %s201 = sphi 0, %s203
    %s204 = sphi 0, %s201
    %s205 = sphi 0, %s204
    %s221 = sphi 0, %s205
  $region4: #{efficientnet_forward.8} parent=0 // loop_header_branch
    %16 = sbr.rel (%p14) target = $region8
  $region5: #{efficientnet_forward.8} parent=0 // loop_body
    %s18 = ssub.s32 %s13, 1
    %s19 = ssub.s32 %s13, 2
    %s26 = sadd.s32 1, %s21
    %p27 = scmp.ge.s32.totalorder %s26, 1
    %s28 = scalar_select %p27, 0, %s26
    %s29 = sadd.s32 1, %s20
    %s30 = scalar_select %p27, %s29, %s20
    %p31 = scmp.ge.s32.totalorder %s30, 2
    %s32 = scalar_select %p31, 0, %s30
    %s33 = ssub.s32 %s20, %s32
    %s34 = ssub.s32 %s21, %s28
    %s35 = sor.u32 %s33, %s34
    %p36 = scmp.eq.s32.totalorder %s35, 0
    %s38 = sadd.s32 %s37, 1
    %s39 = scalar_select %p36, %s37, %s38
    %p42 = pneg %p36
    %p43 = scmp.eq.s32.totalorder %s13, 1
    %p44 = por %p42, %p43
    %p45 = scmp.ne.s32.totalorder %s37, %s40
    %p46 = scmp.eq.s32.totalorder %s13, 0
    %p47 = por %p45, %p46
    %p48 = scmp.ne.s32.totalorder %s37, %s40
    %p49 = scmp.eq.s32.totalorder %s18, 1
    %p50 = por %p48, %p49
    %p51 = scmp.ne.s32.totalorder %s40, %s41
    %p52 = scmp.eq.s32.totalorder %s18, 0
    %p53 = por %p51, %p52
    %p54 = scmp.ne.s32.totalorder %s40, %s41
    %p55 = scmp.eq.s32.totalorder %s19, 1
    %p56 = por %p54, %p55
    %p58 = scmp.ne.s32.totalorder %s41, %s57
    %p59 = scmp.eq.s32.totalorder %s19, 0
    %p60 = por %p58, %p59
    %s61 = ssub.s32 %s20, %s32
    %p62 = scmp.eq.s32.totalorder %s61, 0
    %s64 = sadd.s32 %s63, 1
    %s65 = scalar_select %p62, %s63, %s64
    %p68 = pneg %p62
    %p69 = scmp.eq.s32.totalorder %s13, 1
    %p70 = por %p68, %p69
    %p71 = scmp.ne.s32.totalorder %s63, %s66
    %p72 = scmp.eq.s32.totalorder %s13, 0
    %p73 = por %p71, %p72
    %p74 = scmp.ne.s32.totalorder %s63, %s66
    %p75 = scmp.eq.s32.totalorder %s18, 1
    %p76 = por %p74, %p75
    %p77 = scmp.ne.s32.totalorder %s66, %s67
    %p78 = scmp.eq.s32.totalorder %s18, 0
    %p79 = por %p77, %p78
    %p80 = scmp.ne.s32.totalorder %s66, %s67
    %p81 = scmp.eq.s32.totalorder %s19, 1
    %p82 = por %p80, %p81
    %p84 = scmp.ne.s32.totalorder %s67, %s83
    %p85 = scmp.eq.s32.totalorder %s19, 0
    %p86 = por %p84, %p85
    %s88 = sadd.s32 %s87, 1
    %p91 = scmp.eq.s32.totalorder %s13, 1
    %p92 = scmp.ne.s32.totalorder %s87, %s89
    %p93 = scmp.eq.s32.totalorder %s13, 0
    %p94 = por %p92, %p93
    %p95 = scmp.ne.s32.totalorder %s87, %s89
    %p96 = scmp.eq.s32.totalorder %s18, 1
    %p97 = por %p95, %p96
    %p98 = scmp.ne.s32.totalorder %s89, %s90
    %p99 = scmp.eq.s32.totalorder %s18, 0
    %p100 = por %p98, %p99
    %p101 = scmp.ne.s32.totalorder %s89, %s90
    %p102 = scmp.eq.s32.totalorder %s19, 1
    %p103 = por %p101, %p102
    %p105 = scmp.ne.s32.totalorder %s90, %s104
    %p106 = scmp.eq.s32.totalorder %s19, 0
    %p107 = por %p105, %p106
    %s109 = sadd.s32 %s108, 1
    %p112 = scmp.eq.s32.totalorder %s13, 1
    %p113 = scmp.ne.s32.totalorder %s108, %s110
    %p114 = scmp.eq.s32.totalorder %s13, 0
    %p115 = por %p113, %p114
    %p116 = scmp.ne.s32.totalorder %s108, %s110
    %p117 = scmp.eq.s32.totalorder %s18, 1
    %p118 = por %p116, %p117
    %p119 = scmp.ne.s32.totalorder %s110, %s111
    %p120 = scmp.eq.s32.totalorder %s18, 0
    %p121 = por %p119, %p120
    %p122 = scmp.ne.s32.totalorder %s110, %s111
    %p123 = scmp.eq.s32.totalorder %s19, 1
    %p124 = por %p122, %p123
    %p126 = scmp.ne.s32.totalorder %s111, %s125
    %p127 = scmp.eq.s32.totalorder %s19, 0
    %p128 = por %p126, %p127
    %s129 = ssub.s32 %s20, %s32
    %s130 = ssub.s32 %s21, %s28
    %s131 = sor.u32 %s129, %s130
    %p132 = scmp.eq.s32.totalorder %s131, 0
    %s134 = sadd.s32 %s133, 1
    %s135 = scalar_select %p132, %s133, %s134
    %p138 = pneg %p132
    %p139 = scmp.eq.s32.totalorder %s13, 1
    %p140 = por %p138, %p139
    %p141 = scmp.ne.s32.totalorder %s133, %s136
    %p142 = scmp.eq.s32.totalorder %s13, 0
    %p143 = por %p141, %p142
    %p144 = scmp.ne.s32.totalorder %s133, %s136
    %p145 = scmp.eq.s32.totalorder %s18, 1
    %p146 = por %p144, %p145
    %p147 = scmp.ne.s32.totalorder %s136, %s137
    %p148 = scmp.eq.s32.totalorder %s18, 0
    %p149 = por %p147, %p148
    %p150 = scmp.ne.s32.totalorder %s136, %s137
    %p151 = scmp.eq.s32.totalorder %s19, 1
    %p152 = por %p150, %p151
    %p154 = scmp.ne.s32.totalorder %s137, %s153
    %p155 = scmp.eq.s32.totalorder %s19, 0
    %p156 = por %p154, %p155
    %s158 = sadd.s32 %s157, 1
    %p161 = scmp.eq.s32.totalorder %s13, 1
    %p162 = scmp.ne.s32.totalorder %s157, %s159
    %p163 = scmp.eq.s32.totalorder %s13, 0
    %p164 = por %p162, %p163
    %p165 = scmp.ne.s32.totalorder %s157, %s159
    %p166 = scmp.eq.s32.totalorder %s18, 1
    %p167 = por %p165, %p166
    %p168 = scmp.ne.s32.totalorder %s159, %s160
    %p169 = scmp.eq.s32.totalorder %s18, 0
    %p170 = por %p168, %p169
    %p171 = scmp.ne.s32.totalorder %s159, %s160
    %p172 = scmp.eq.s32.totalorder %s19, 1
    %p173 = por %p171, %p172
    %p175 = scmp.ne.s32.totalorder %s160, %s174
    %p176 = scmp.eq.s32.totalorder %s19, 0
    %p177 = por %p175, %p176
    %s179 = sadd.s32 %s178, 1
    %p182 = scmp.eq.s32.totalorder %s13, 1
    %p183 = scmp.ne.s32.totalorder %s178, %s180
    %p184 = scmp.eq.s32.totalorder %s13, 0
    %p185 = por %p183, %p184
    %p186 = scmp.ne.s32.totalorder %s178, %s180
    %p187 = scmp.eq.s32.totalorder %s18, 1
    %p188 = por %p186, %p187
    %p189 = scmp.ne.s32.totalorder %s180, %s181
    %p190 = scmp.eq.s32.totalorder %s18, 0
    %p191 = por %p189, %p190
    %p192 = scmp.ne.s32.totalorder %s180, %s181
    %p193 = scmp.eq.s32.totalorder %s19, 1
    %p194 = por %p192, %p193
    %p196 = scmp.ne.s32.totalorder %s181, %s195
    %p197 = scmp.eq.s32.totalorder %s19, 0
    %p198 = por %p196, %p197
    %s199 = ssub.s32 %s20, %s32
    %p200 = scmp.eq.s32.totalorder %s199, 0
    %s202 = sadd.s32 %s201, 1
    %s203 = scalar_select %p200, %s201, %s202
    %p206 = pneg %p200
    %p207 = scmp.eq.s32.totalorder %s13, 1
    %p208 = por %p206, %p207
    %p209 = scmp.ne.s32.totalorder %s201, %s204
    %p210 = scmp.eq.s32.totalorder %s13, 0
    %p211 = por %p209, %p210
    %p212 = scmp.ne.s32.totalorder %s201, %s204
    %p213 = scmp.eq.s32.totalorder %s18, 1
    %p214 = por %p212, %p213
    %p215 = scmp.ne.s32.totalorder %s204, %s205
    %p216 = scmp.eq.s32.totalorder %s18, 0
    %p217 = por %p215, %p216
    %p218 = scmp.ne.s32.totalorder %s204, %s205
    %p219 = scmp.eq.s32.totalorder %s19, 1
    %p220 = por %p218, %p219
    %p222 = scmp.ne.s32.totalorder %s205, %s221
    %p223 = scmp.eq.s32.totalorder %s19, 0
    %p224 = por %p222, %p223
    %p225 = scmp.le.s32.totalorder 1, %s13
    %p226 = scmp.lt.s32.totalorder %s13, 3
    %p227 = pnand %p225, %p226
    %p228 = pneg %p227
    // Predicated region
    $region9: #{efficientnet_forward.8} parent=5 // pred_check
      _
    $region10: #{efficientnet_forward.8} parent=5 // pred_check_branch
      %230 = sbr.rel (%p227) target = $region12
    $region11: #{efficientnet_forward.8} parent=5 // pred_region
      %s231 = ssub.s32 %s13, 1
      // Predicated region
      $region13: #{efficientnet_forward.8} parent=11 // pred_check
        %p232 = pneg %p100
      $region14: #{efficientnet_forward.8} parent=11 // pred_check_branch
        %234 = sbr.rel (%p232) target = $region16
      $region15: #{efficientnet_forward.8} parent=11 // pred_region
        _
      $region16: #{efficientnet_forward.8} parent=11 // pred_fallthru
        _
      // Predicated region
      $region17: #{efficientnet_forward.8} parent=11 // pred_check
        %p235 = pneg %p121
      $region18: #{efficientnet_forward.8} parent=11 // pred_check_branch
        %237 = sbr.rel (%p235) target = $region20
      $region19: #{efficientnet_forward.8} parent=11 // pred_region
        _
      $region20: #{efficientnet_forward.8} parent=11 // pred_fallthru
        _
      // Predicated region
      $region21: #{efficientnet_forward.8} parent=11 // pred_check
        %p238 = pneg %p170
      $region22: #{efficientnet_forward.8} parent=11 // pred_check_branch
        %240 = sbr.rel (%p238) target = $region24
      $region23: #{efficientnet_forward.8} parent=11 // pred_region
        _
      $region24: #{efficientnet_forward.8} parent=11 // pred_fallthru
        _
      // Predicated region
      $region25: #{efficientnet_forward.8} parent=11 // pred_check
        %p241 = pneg %p191
      $region26: #{efficientnet_forward.8} parent=11 // pred_check_branch
        %243 = sbr.rel (%p241) target = $region28
      $region27: #{efficientnet_forward.8} parent=11 // pred_region
        _
      $region28: #{efficientnet_forward.8} parent=11 // pred_fallthru
        _
    $region12: #{efficientnet_forward.8} parent=5 // pred_fallthru
      _
    %p244 = scmp.lt.s32.totalorder %s13, 2
    // Predicated region
    $region29: #{efficientnet_forward.8} parent=5 // pred_check
      %p245 = pneg %p244
    $region30: #{efficientnet_forward.8} parent=5 // pred_check_branch
      %247 = sbr.rel (%p245) target = $region32
    $region31: #{efficientnet_forward.8} parent=5 // pred_region
      // Predicated region
      $region33: #{efficientnet_forward.8} parent=31 // pred_check
        %p248 = pneg %p47
      $region34: #{efficientnet_forward.8} parent=31 // pred_check_branch
        %250 = sbr.rel (%p248) target = $region36
      $region35: #{efficientnet_forward.8} parent=31 // pred_region
        %s251 = smul.u32 8, %s21
        %p252 = scmp.lt.s32.totalorder %s20, 1
        %s253 = scalar_select %p252, %s20, 1
        %p254 = scmp.lt.s32.totalorder %s251, 7
        %s255 = scalar_select %p254, %s251, 7
        %s256 = smul.addr %s253, 8
        %s257 = sadd.s32 %s255, %s256
        %s258 = smul.addr %s257, 4
        %s259 = scalar_lea.vmem %s0, %s258
        %s260 = smul.u32 8, %s21
      $region36: #{efficientnet_forward.8} parent=31 // pred_fallthru
        _
      // Predicated region
      $region37: #{efficientnet_forward.8} parent=31 // pred_check
        %p261 = pneg %p73
      $region38: #{efficientnet_forward.8} parent=31 // pred_check_branch
        %263 = sbr.rel (%p261) target = $region40
      $region39: #{efficientnet_forward.8} parent=31 // pred_region
        %p264 = scmp.lt.s32.totalorder %s20, 1
        %s265 = scalar_select %p264, %s20, 1
        %s266 = scalar_lea.vmem %s1, %s265
      $region40: #{efficientnet_forward.8} parent=31 // pred_fallthru
        _
      // Predicated region
      $region41: #{efficientnet_forward.8} parent=31 // pred_check
        %p267 = pneg %p143
      $region42: #{efficientnet_forward.8} parent=31 // pred_check_branch
        %269 = sbr.rel (%p267) target = $region44
      $region43: #{efficientnet_forward.8} parent=31 // pred_region
        %s270 = smul.u32 8, %s21
        %p271 = scmp.lt.s32.totalorder %s20, 1
        %s272 = scalar_select %p271, %s20, 1
        %p273 = scmp.lt.s32.totalorder %s270, 7
        %s274 = scalar_select %p273, %s270, 7
        %s275 = smul.addr %s272, 8
        %s276 = sadd.s32 %s274, %s275
        %s277 = smul.addr %s276, 4
        %s278 = scalar_lea.vmem %s4, %s277
        %s279 = smul.u32 8, %s21
      $region44: #{efficientnet_forward.8} parent=31 // pred_fallthru
        _
    $region32: #{efficientnet_forward.8} parent=5 // pred_fallthru
      _
    %p280 = scmp.le.s32.totalorder 1, %s13
    %p281 = scmp.lt.s32.totalorder %s13, 3
    %p282 = pnand %p280, %p281
    %p283 = pneg %p282
    // Predicated region
    $region45: #{efficientnet_forward.8} parent=5 // pred_check
      _
    $region46: #{efficientnet_forward.8} parent=5 // pred_check_branch
      %285 = sbr.rel (%p282) target = $region48
    $region47: #{efficientnet_forward.8} parent=5 // pred_region
      %s286 = ssub.s32 %s13, 1
      %s287 = smul.u32 8, %s23
      %p288 = scmp.lt.s32.totalorder %s22, 1
      %s289 = scalar_select %p288, %s22, 1
      %p290 = scmp.lt.s32.totalorder %s287, 7
      %s291 = scalar_select %p290, %s287, 7
      %s292 = smul.addr %s289, 8
      %s293 = sadd.s32 %s291, %s292
      %s294 = smul.addr %s293, 4
      %s295 = scalar_lea.vmem %s0, %s294
      %p296 = pneg %p53
      %p297 = pneg %p50
      %p298 = scmp.lt.s32.totalorder %s22, 1
      %s299 = scalar_select %p298, %s22, 1
      %s300 = scalar_lea.vmem %s1, %s299
      %p301 = pneg %p79
      %p302 = pneg %p76
      %p303 = pneg %p100
      %p304 = pneg %p97
      %p305 = pneg %p121
      %p306 = pneg %p118
      %s307 = smul.u32 8, %s23
      %p308 = scmp.lt.s32.totalorder %s22, 1
      %s309 = scalar_select %p308, %s22, 1
      %p310 = scmp.lt.s32.totalorder %s307, 7
      %s311 = scalar_select %p310, %s307, 7
      %s312 = smul.addr %s309, 8
      %s313 = sadd.s32 %s311, %s312
      %s314 = smul.addr %s313, 4
      %s315 = scalar_lea.vmem %s4, %s314
      %p316 = pneg %p149
      %p317 = pneg %p146
      %p318 = pneg %p170
      %p319 = pneg %p167
      %p320 = pneg %p191
      %p321 = pneg %p188
      %p322 = pneg %p217
      %p323 = pneg %p214
      %p324 = scmp.lt.s32.totalorder %s22, 1
      %s325 = scalar_select %p324, %s22, 1
      %s326 = smul.addr %s325, 10
      %s327 = scalar_lea.vmem %s7, %s326
      %s328 = smul.u32 8, %s23
      %p329 = scmp.lt.s32.totalorder %s22, 1
      %s330 = scalar_select %p329, %s22, 1
      %p331 = scmp.lt.s32.totalorder %s328, 7
      %s332 = scalar_select %p331, %s328, 7
      %s333 = smul.addr %s330, 8
      %s334 = sadd.s32 %s332, %s333
      %s335 = smul.addr %s334, 4
      %s336 = scalar_lea.vmem %s0, %s335
      %s337 = smul.u32 8, %s23
      %p338 = scmp.lt.s32.totalorder %s22, 1
      %s339 = scalar_select %p338, %s22, 1
      %s340 = scalar_lea.vmem %s1, %s339
      %s341 = smul.u32 8, %s23
      %p342 = scmp.lt.s32.totalorder %s22, 1
      %s343 = scalar_select %p342, %s22, 1
      %p344 = scmp.lt.s32.totalorder %s341, 7
      %s345 = scalar_select %p344, %s341, 7
      %s346 = smul.addr %s343, 8
      %s347 = sadd.s32 %s345, %s346
      %s348 = smul.addr %s347, 4
      %s349 = scalar_lea.vmem %s4, %s348
      %s350 = smul.u32 8, %s23
      %p351 = scmp.lt.s32.totalorder %s22, 1
      %s352 = scalar_select %p351, %s22, 1
      %s353 = smul.addr %s352, 10
      %s354 = scalar_lea.vmem %s7, %s353
      %p356 = scmp.eq.s32.totalorder %s23, 0
      // Predicated region
      $region49: #{efficientnet_forward.8} parent=47 // pred_check
        %p357 = pneg %p356
      $region50: #{efficientnet_forward.8} parent=47 // pred_check_branch
        %359 = sbr.rel (%p357) target = $region52
      $region51: #{efficientnet_forward.8} parent=47 // pred_region
        %360 = vst [vmem:[#allocation2] sm:$0xff] 0.0
        %v361 = vlaneseq
        %vm362 = vcmp.ge.s32.totalorder %v361, 0
        %vm363 = vcmp.lt.s32.totalorder %v361, 256
        %vm364 = vmand %vm362, %vm363
        %365 = vst.msk [vmem:[#allocation2 + $0x8] sm:$0x3] %vm364, 0.0
      $region52: #{efficientnet_forward.8} parent=47 // pred_fallthru
        _
      %v366 = vld [vmem:[%s336] sm:$0xf]
      %v367 = vld [vmem:[%s336 + $0x4] sm:$0xf]
      %v368 = vld [vmem:[%s336 + $0x8] sm:$0xf]
      %v369 = vld [vmem:[%s336 + $0xc] sm:$0xf]
      %v370 = vld [vmem:[%s336 + $0x10] sm:$0xf]
      %v371 = vld [vmem:[%s336 + $0x14] sm:$0xf]
      %v372 = vld [vmem:[%s336 + $0x18] sm:$0xf]
      %v373 = vld [vmem:[%s336 + $0x1c] sm:$0xf]
      %v374 = vunpack.c.l.bf16 %v366
      %v375 = vunpack.c.l.bf16 %v367
      %v376 = vunpack.c.l.bf16 %v368
      %v377 = vunpack.c.l.bf16 %v369
      %v378 = vunpack.c.l.bf16 %v370
      %v379 = vunpack.c.l.bf16 %v371
      %v380 = vunpack.c.l.bf16 %v372
      %v381 = vunpack.c.l.bf16 %v373
      %v382 = vld [vmem:[%s340] sm:$0x1]
      %v383 = vunpack.c.l.bf16 %v382
      %v384 = vlaneseq
      %v385 = vshrl.u32 %v384, 7
      %v386 = vsub.s32 0, %v385
      %v387 = vrot.slane %v383, %v386
      %v388 = vmul.f32 %v374, %v387
      %v389 = vmul.f32 %v375, %v387
      %v390 = vmul.f32 %v376, %v387
      %v391 = vmul.f32 %v377, %v387
      %v392 = vmul.f32 %v378, %v387
      %v393 = vmul.f32 %v379, %v387
      %v394 = vmul.f32 %v380, %v387
      %v395 = vmul.f32 %v381, %v387
      %v396 = vpack.c.bf16 %v389, %v388
      %v397 = vpack.c.bf16 %v391, %v390
      %v398 = vpack.c.bf16 %v393, %v392
      %v399 = vpack.c.bf16 %v395, %v394
      %v400 = vld [vmem:[%s2] sm:$0xf]
      %v401 = vld [vmem:[%s2 + $0x4] sm:$0xf]
      %v402 = vld [vmem:[%s2 + $0x8] sm:$0xf]
      %v403 = vld [vmem:[%s2 + $0xc] sm:$0xf]
      %v404 = vld [vmem:[%s2 + $0x10] sm:$0xf]
      %v405 = vld [vmem:[%s2 + $0x14] sm:$0xf]
      %v406 = vld [vmem:[%s2 + $0x18] sm:$0xf]
      %v407 = vld [vmem:[%s2 + $0x1c] sm:$0xf]
      %v408 = vld [vmem:[%s2 + $0x20] sm:$0xf]
      %v409 = vld [vmem:[%s2 + $0x24] sm:$0xf]
      %v410 = vld [vmem:[%s2 + $0x28] sm:$0xf]
      %v411 = vld [vmem:[%s2 + $0x2c] sm:$0xf]
      %v412 = vld [vmem:[%s2 + $0x30] sm:$0xf]
      %v413 = vld [vmem:[%s2 + $0x34] sm:$0xf]
      %v414 = vld [vmem:[%s2 + $0x38] sm:$0xf]
      %v415 = vld [vmem:[%s2 + $0x3c] sm:$0xf]
      %v416 = vld [vmem:[%s3] sm:$0x1]
      %v417 = vunpack.c.l.bf16 %v416
      %v418 = vlaneseq
      %v419 = vshrl.u32 %v418, 7
      %v420 = vsub.s32 0, %v419
      %v421 = vrot.slane %v417, %v420
      %v438 = vunpack.c.l.b16 %v400
      %v439 = vunpack.c.l.b16 %v401
      %v440 = vunpack.c.l.b16 %v402
      %v441 = vunpack.c.l.b16 %v403
      %v442 = vunpack.c.l.b16 %v404
      %v443 = vunpack.c.l.b16 %v405
      %v444 = vunpack.c.l.b16 %v406
      %v445 = vunpack.c.l.b16 %v407
      %v446 = vunpack.c.l.b16 %v408
      %v447 = vunpack.c.l.b16 %v409
      %v448 = vunpack.c.l.b16 %v410
      %v449 = vunpack.c.l.b16 %v411
      %v450 = vunpack.c.l.b16 %v412
      %v451 = vunpack.c.l.b16 %v413
      %v452 = vunpack.c.l.b16 %v414
      %v453 = vunpack.c.l.b16 %v415
      %v454 = vpack.c.b16 %v439, %v438
      %v455 = vpack.c.b16 %v441, %v440
      %v456 = vpack.c.b16 %v443, %v442
      %v457 = vpack.c.b16 %v445, %v444
      %v458 = vpack.c.b16 %v447, %v446
      %v459 = vpack.c.b16 %v449, %v448
      %v460 = vpack.c.b16 %v451, %v450
      %v461 = vpack.c.b16 %v453, %v452
      %470 = vmatprep.subr.bf16.mxu0 0
      %471 = vmatpush1.bf16.msra.mxu0 %v454
      %472 = vmatprep.subr.bf16.mxu0 0
      %473 = vmatpush1.bf16.msra.mxu0 %v455
      %474 = vmatprep.subr.bf16.mxu0 0
      %475 = vmatpush1.bf16.msra.mxu0 %v456
      %476 = vmatprep.subr.bf16.mxu0 0
      %477 = vmatpush1.bf16.msra.mxu0 %v457
      %478 = vmatprep.subr.bf16.mxu0 0
      %479 = vmatpush1.bf16.msra.mxu0 %v458
      %480 = vmatprep.subr.bf16.mxu0 0
      %481 = vmatpush1.bf16.msra.mxu0 %v459
      %482 = vmatprep.subr.bf16.mxu0 0
      %483 = vmatpush1.bf16.msra.mxu0 %v460
      %484 = vmatprep.subr.bf16.mxu0 0
      %485 = vmatpush1.bf16.msra.mxu0 %v461
      %486 = vmatprep.subr.bf16.mxu0 0
      %487 = vmatpush1.bf16.msra.mxu0 0
      %488 = vmatprep.subr.bf16.mxu0 0
      %489 = vmatpush1.bf16.msra.mxu0 0
      %490 = vmatprep.subr.bf16.mxu0 0
      %491 = vmatpush1.bf16.msra.mxu0 0
      %492 = vmatprep.subr.bf16.mxu0 0
      %493 = vmatpush1.bf16.msra.mxu0 0
      %494 = vmatprep.subr.bf16.mxu0 0
      %495 = vmatpush1.bf16.msra.mxu0 0
      %496 = vmatprep.subr.bf16.mxu0 0
      %497 = vmatpush1.bf16.msra.mxu0 0
      %498 = vmatprep.subr.bf16.mxu0 0
      %499 = vmatpush1.bf16.msra.mxu0 0
      %500 = vmatprep.subr.bf16.mxu0 0
      %501 = vmatpush1.bf16.msra.mxu0 0
      %502 = vmatprep.mubr.bf16.mxu0 0
      %503 = vmatmul.mubr.bf16.gmra.mrb[0].mxu0 %v396
      %v504 = vpop.f32.mrb[0].mxu0
      %v505 = vadd.f32 %v421, %v504
      %v506 = vpop.f32.mrb[0].mxu0
      %v507 = vpop.f32.mrb[0].mxu0
      %v508 = vadd.f32 %v421, %v507
      %v509 = vpop.f32.mrb[0].mxu0
      %510 = vmatprep.mubr.bf16.mxu0 0
      %511 = vmatmul.mubr.bf16.gmra.mrb[0].mxu0 %v397
      %v512 = vpop.f32.mrb[0].mxu0
      %v513 = vadd.f32 %v421, %v512
      %v514 = vpop.f32.mrb[0].mxu0
      %v515 = vpop.f32.mrb[0].mxu0
      %v516 = vadd.f32 %v421, %v515
      %v517 = vpop.f32.mrb[0].mxu0
      %518 = vmatprep.mubr.bf16.mxu0 0
      %519 = vmatmul.mubr.bf16.gmra.mrb[0].mxu0 %v398
      %v520 = vpop.f32.mrb[0].mxu0
      %v521 = vadd.f32 %v421, %v520
      %v522 = vpop.f32.mrb[0].mxu0
      %v523 = vpop.f32.mrb[0].mxu0
      %v524 = vadd.f32 %v421, %v523
      %v525 = vpop.f32.mrb[0].mxu0
      %526 = vmatprep.mubr.bf16.mxu0 0
      %527 = vmatmul.mubr.bf16.gmra.mrb[0].mxu0 %v399
      %v528 = vpop.f32.mrb[0].mxu0
      %v529 = vadd.f32 %v421, %v528
      %v530 = vpop.f32.mrb[0].mxu0
      %v531 = vpop.f32.mrb[0].mxu0
      %v532 = vadd.f32 %v421, %v531
      %v533 = vpop.f32.mrb[0].mxu0
      %534 = vdwg.mxu0
      %v535 = vld [vmem:[%s349] sm:$0xf]
      %v536 = vld [vmem:[%s349 + $0x4] sm:$0xf]
      %v537 = vld [vmem:[%s349 + $0x8] sm:$0xf]
      %v538 = vld [vmem:[%s349 + $0xc] sm:$0xf]
      %v539 = vld [vmem:[%s349 + $0x10] sm:$0xf]
      %v540 = vld [vmem:[%s349 + $0x14] sm:$0xf]
      %v541 = vld [vmem:[%s349 + $0x18] sm:$0xf]
      %v542 = vld [vmem:[%s349 + $0x1c] sm:$0xf]
      %v543 = vunpack.c.l.bf16 %v535
      %v544 = vunpack.c.l.bf16 %v536
      %v545 = vunpack.c.l.bf16 %v537
      %v546 = vunpack.c.l.bf16 %v538
      %v547 = vunpack.c.l.bf16 %v539
      %v548 = vunpack.c.l.bf16 %v540
      %v549 = vunpack.c.l.bf16 %v541
      %v550 = vunpack.c.l.bf16 %v542
      %v551 = vadd.f32 %v505, %v543
      %v552 = vadd.f32 %v508, %v544
      %v553 = vadd.f32 %v513, %v545
      %v554 = vadd.f32 %v516, %v546
      %v555 = vadd.f32 %v521, %v547
      %v556 = vadd.f32 %v524, %v548
      %v557 = vadd.f32 %v529, %v549
      %v558 = vadd.f32 %v532, %v550
      %v559 = vpack.c.bf16 %v552, %v551
      %v560 = vpack.c.bf16 %v554, %v553
      %v561 = vpack.c.bf16 %v556, %v555
      %v562 = vpack.c.bf16 %v558, %v557
      %v563 = vld [vmem:[%s5] sm:$0xff]
      %v564 = vld [vmem:[%s5 + $0x8] sm:$0xff]
      %v565 = vld [vmem:[%s5 + $0x10] sm:$0xff]
      %v566 = vld [vmem:[%s5 + $0x18] sm:$0xff]
      %v567 = vld [vmem:[%s5 + $0x20] sm:$0xff]
      %v568 = vld [vmem:[%s5 + $0x28] sm:$0xff]
      %v569 = vld [vmem:[%s5 + $0x30] sm:$0xff]
      %v570 = vld [vmem:[%s5 + $0x38] sm:$0xff]
      %v571 = vld [vmem:[%s5 + $0x40] sm:$0xff]
      %v572 = vld [vmem:[%s5 + $0x48] sm:$0xff]
      %v573 = vld [vmem:[%s5 + $0x50] sm:$0xff]
      %v574 = vld [vmem:[%s5 + $0x58] sm:$0xff]
      %v575 = vld [vmem:[%s5 + $0x60] sm:$0xff]
      %v576 = vld [vmem:[%s5 + $0x68] sm:$0xff]
      %v577 = vld [vmem:[%s5 + $0x70] sm:$0xff]
      %v578 = vld [vmem:[%s5 + $0x78] sm:$0xff]
      %v579 = vld [vmem:[%s5 + $0x80] sm:$0xff]
      %v580 = vld [vmem:[%s5 + $0x88] sm:$0xff]
      %v581 = vld [vmem:[%s5 + $0x90] sm:$0xff]
      %v582 = vld [vmem:[%s5 + $0x98] sm:$0xff]
      %v583 = vld [vmem:[%s6] sm:$0xff]
      %v584 = vld [vmem:[%s6 + $0x8] sm:$0x3]
      %v585 = vunpack.c.l.bf16 %v583
      %v586 = vunpack.c.h.bf16 %v583
      %v587 = vunpack.c.l.bf16 %v584
      %v591 = vlaneseq
      %v592 = vshrl.u32 %v591, 7
      %v593 = vsub.s32 0, %v592
      %v594 = vrot.slane %v585, %v593
      %v595 = vlaneseq
      %v596 = vshrl.u32 %v595, 7
      %v597 = vsub.s32 2, %v596
      %v598 = vrot.slane %v585, %v597
      %v599 = vlaneseq
      %v600 = vshrl.u32 %v599, 7
      %v601 = vsub.s32 4, %v600
      %v602 = vrot.slane %v585, %v601
      %v603 = vlaneseq
      %v604 = vshrl.u32 %v603, 7
      %v605 = vsub.s32 6, %v604
      %v606 = vrot.slane %v585, %v605
      %v607 = vlaneseq
      %v608 = vshrl.u32 %v607, 7
      %v609 = vsub.s32 0, %v608
      %v610 = vrot.slane %v586, %v609
      %v611 = vlaneseq
      %v612 = vshrl.u32 %v611, 7
      %v613 = vsub.s32 2, %v612
      %v614 = vrot.slane %v586, %v613
      %v615 = vlaneseq
      %v616 = vshrl.u32 %v615, 7
      %v617 = vsub.s32 4, %v616
      %v618 = vrot.slane %v586, %v617
      %v619 = vlaneseq
      %v620 = vshrl.u32 %v619, 7
      %v621 = vsub.s32 6, %v620
      %v622 = vrot.slane %v586, %v621
      %v623 = vlaneseq
      %v624 = vshrl.u32 %v623, 7
      %v625 = vsub.s32 0, %v624
      %v626 = vrot.slane %v587, %v625
      %v627 = vlaneseq
      %v628 = vshrl.u32 %v627, 7
      %v629 = vsub.s32 2, %v628
      %v630 = vrot.slane %v587, %v629
      %v641 = vlaneseq
      %v642 = vshrl.u32 %v641, 7
      %v643 = vsub.s32 0, %v642
      %v644 = vrot.slane %v594, %v643
      %v645 = vlaneseq
      %v646 = vshrl.u32 %v645, 7
      %v647 = vsub.s32 0, %v646
      %v648 = vrot.slane %v598, %v647
      %v649 = vlaneseq
      %v650 = vshrl.u32 %v649, 7
      %v651 = vsub.s32 0, %v650
      %v652 = vrot.slane %v602, %v651
      %v653 = vlaneseq
      %v654 = vshrl.u32 %v653, 7
      %v655 = vsub.s32 0, %v654
      %v656 = vrot.slane %v606, %v655
      %v657 = vlaneseq
      %v658 = vshrl.u32 %v657, 7
      %v659 = vsub.s32 0, %v658
      %v660 = vrot.slane %v610, %v659
      %v661 = vlaneseq
      %v662 = vshrl.u32 %v661, 7
      %v663 = vsub.s32 0, %v662
      %v664 = vrot.slane %v614, %v663
      %v665 = vlaneseq
      %v666 = vshrl.u32 %v665, 7
      %v667 = vsub.s32 0, %v666
      %v668 = vrot.slane %v618, %v667
      %v669 = vlaneseq
      %v670 = vshrl.u32 %v669, 7
      %v671 = vsub.s32 0, %v670
      %v672 = vrot.slane %v622, %v671
      %v673 = vlaneseq
      %v674 = vshrl.u32 %v673, 7
      %v675 = vsub.s32 0, %v674
      %v676 = vrot.slane %v626, %v675
      %v677 = vlaneseq
      %v678 = vshrl.u32 %v677, 7
      %v679 = vsub.s32 0, %v678
      %v680 = vrot.slane %v630, %v679
      %v701 = vunpack.c.l.b16 %v563
      %v702 = vunpack.c.h.b16 %v563
      %v703 = vunpack.c.l.b16 %v564
      %v704 = vunpack.c.h.b16 %v564
      %v705 = vunpack.c.l.b16 %v565
      %v706 = vunpack.c.h.b16 %v565
      %v707 = vunpack.c.l.b16 %v566
      %v708 = vunpack.c.h.b16 %v566
      %v709 = vunpack.c.l.b16 %v567
      %v710 = vunpack.c.h.b16 %v567
      %v711 = vunpack.c.l.b16 %v568
      %v712 = vunpack.c.h.b16 %v568
      %v713 = vunpack.c.l.b16 %v569
      %v714 = vunpack.c.h.b16 %v569
      %v715 = vunpack.c.l.b16 %v570
      %v716 = vunpack.c.h.b16 %v570
      %v717 = vunpack.c.l.b16 %v571
      %v718 = vunpack.c.h.b16 %v571
      %v719 = vunpack.c.l.b16 %v572
      %v720 = vunpack.c.h.b16 %v572
      %v721 = vunpack.c.l.b16 %v573
      %v722 = vunpack.c.h.b16 %v573
      %v723 = vunpack.c.l.b16 %v574
      %v724 = vunpack.c.h.b16 %v574
      %v725 = vunpack.c.l.b16 %v575
      %v726 = vunpack.c.h.b16 %v575
      %v727 = vunpack.c.l.b16 %v576
      %v728 = vunpack.c.h.b16 %v576
      %v729 = vunpack.c.l.b16 %v577
      %v730 = vunpack.c.h.b16 %v577
      %v731 = vunpack.c.l.b16 %v578
      %v732 = vunpack.c.h.b16 %v578
      %v733 = vunpack.c.l.b16 %v579
      %v734 = vunpack.c.h.b16 %v579
      %v735 = vunpack.c.l.b16 %v580
      %v736 = vunpack.c.h.b16 %v580
      %v737 = vunpack.c.l.b16 %v581
      %v738 = vunpack.c.h.b16 %v581
      %v739 = vunpack.c.l.b16 %v582
      %v740 = vunpack.c.h.b16 %v582
      %v741 = vpack.c.b16 %v711, %v701
      %v742 = vpack.c.b16 %v712, %v702
      %v743 = vpack.c.b16 %v713, %v703
      %v744 = vpack.c.b16 %v714, %v704
      %v745 = vpack.c.b16 %v715, %v705
      %v746 = vpack.c.b16 %v716, %v706
      %v747 = vpack.c.b16 %v717, %v707
      %v748 = vpack.c.b16 %v718, %v708
      %v749 = vpack.c.b16 %v719, %v709
      %v750 = vpack.c.b16 %v720, %v710
      %v751 = vpack.c.b16 %v731, %v721
      %v752 = vpack.c.b16 %v732, %v722
      %v753 = vpack.c.b16 %v733, %v723
      %v754 = vpack.c.b16 %v734, %v724
      %v755 = vpack.c.b16 %v735, %v725
      %v756 = vpack.c.b16 %v736, %v726
      %v757 = vpack.c.b16 %v737, %v727
      %v758 = vpack.c.b16 %v738, %v728
      %v759 = vpack.c.b16 %v739, %v729
      %v760 = vpack.c.b16 %v740, %v730
      %vm781 = vcmask 261120
      %v783 = vsel %vm781, %v559, 0
      %v786 = vsel %vm781, %v560, 0
      %v789 = vsel %vm781, %v561, 0
      %v792 = vsel %vm781, %v562, 0
      %794 = vmatprep.subr.bf16.mxu0 %v742
      %795 = vmatpush1.bf16.msra.mxu0 %v741
      %796 = vmatprep.subr.bf16.mxu0 %v752
      %797 = vmatpush1.bf16.msra.mxu0 %v751
      %798 = vmatprep.subr.bf16.mxu0 0
      %799 = vmatpush1.bf16.msra.mxu0 0
      %800 = vmatprep.subr.bf16.mxu0 0
      %801 = vmatpush1.bf16.msra.mxu0 0
      %802 = vmatprep.subr.bf16.mxu0 0
      %803 = vmatpush1.bf16.msra.mxu0 0
      %804 = vmatprep.subr.bf16.mxu0 0
      %805 = vmatpush1.bf16.msra.mxu0 0
      %806 = vmatprep.subr.bf16.mxu0 0
      %807 = vmatpush1.bf16.msra.mxu0 0
      %808 = vmatprep.subr.bf16.mxu0 0
      %809 = vmatpush1.bf16.msra.mxu0 0
      %810 = vmatprep.subr.bf16.mxu0 0
      %811 = vmatpush1.bf16.msra.mxu0 0
      %812 = vmatprep.subr.bf16.mxu0 0
      %813 = vmatpush1.bf16.msra.mxu0 0
      %814 = vmatprep.subr.bf16.mxu0 0
      %815 = vmatpush1.bf16.msra.mxu0 0
      %816 = vmatprep.subr.bf16.mxu0 0
      %817 = vmatpush1.bf16.msra.mxu0 0
      %818 = vmatprep.subr.bf16.mxu0 0
      %819 = vmatpush1.bf16.msra.mxu0 0
      %820 = vmatprep.subr.bf16.mxu0 0
      %821 = vmatpush1.bf16.msra.mxu0 0
      %822 = vmatprep.subr.bf16.mxu0 0
      %823 = vmatpush1.bf16.msra.mxu0 0
      %824 = vmatprep.subr.bf16.mxu0 0
      %825 = vmatpush1.bf16.msra.mxu0 0
      %826 = vmatprep.mubr.bf16.mxu0 0
      %827 = vmatmul.mubr.bf16.gmra.mrb[0].mxu0 %v783
      %v828 = vpop.f32.mrb[0].mxu0
      %v829 = vadd.f32 %v644, %v828
      %v830 = vpop.f32.mrb[0].mxu0
      %v831 = vadd.f32 %v648, %v830
      %v832 = vpop.f32.mrb[0].mxu0
      %v833 = vadd.f32 %v644, %v832
      %v834 = vpop.f32.mrb[0].mxu0
      %v835 = vadd.f32 %v648, %v834
      %836 = vmatprep.mubr.bf16.mxu0 0
      %837 = vmatmul.mubr.bf16.gmra.mrb[0].mxu0 %v786
      %v838 = vpop.f32.mrb[0].mxu0
      %v839 = vadd.f32 %v644, %v838
      %v840 = vpop.f32.mrb[0].mxu0
      %v841 = vadd.f32 %v648, %v840
      %v842 = vpop.f32.mrb[0].mxu0
      %v843 = vadd.f32 %v644, %v842
      %v844 = vpop.f32.mrb[0].mxu0
      %v845 = vadd.f32 %v648, %v844
      %846 = vmatprep.mubr.bf16.mxu0 0
      %847 = vmatmul.mubr.bf16.gmra.mrb[0].mxu0 %v789
      %v848 = vpop.f32.mrb[0].mxu0
      %v849 = vadd.f32 %v644, %v848
      %v850 = vpop.f32.mrb[0].mxu0
      %v851 = vadd.f32 %v648, %v850
      %v852 = vpop.f32.mrb[0].mxu0
      %v853 = vadd.f32 %v644, %v852
      %v854 = vpop.f32.mrb[0].mxu0
      %v855 = vadd.f32 %v648, %v854
      %856 = vmatprep.mubr.bf16.mxu0 0
      %857 = vmatmul.mubr.bf16.gmra.mrb[0].mxu0 %v792
      %v858 = vpop.f32.mrb[0].mxu0
      %v859 = vadd.f32 %v644, %v858
      %v860 = vpop.f32.mrb[0].mxu0
      %v861 = vadd.f32 %v648, %v860
      %v862 = vpop.f32.mrb[0].mxu0
      %v863 = vadd.f32 %v644, %v862
      %v864 = vpop.f32.mrb[0].mxu0
      %v865 = vadd.f32 %v648, %v864
      %866 = vdwg.mxu0
      %867 = vmatprep.subr.bf16.mxu0 %v744
      %868 = vmatpush1.bf16.msra.mxu0 %v743
      %869 = vmatprep.subr.bf16.mxu0 %v754
      %870 = vmatpush1.bf16.msra.mxu0 %v753
      %871 = vmatprep.subr.bf16.mxu0 0
      %872 = vmatpush1.bf16.msra.mxu0 0
      %873 = vmatprep.subr.bf16.mxu0 0
      %874 = vmatpush1.bf16.msra.mxu0 0
      %875 = vmatprep.subr.bf16.mxu0 0
      %876 = vmatpush1.bf16.msra.mxu0 0
      %877 = vmatprep.subr.bf16.mxu0 0
      %878 = vmatpush1.bf16.msra.mxu0 0
      %879 = vmatprep.subr.bf16.mxu0 0
      %880 = vmatpush1.bf16.msra.mxu0 0
      %881 = vmatprep.subr.bf16.mxu0 0
      %882 = vmatpush1.bf16.msra.mxu0 0
      %883 = vmatprep.subr.bf16.mxu0 0
      %884 = vmatpush1.bf16.msra.mxu0 0
      %885 = vmatprep.subr.bf16.mxu0 0
      %886 = vmatpush1.bf16.msra.mxu0 0
      %887 = vmatprep.subr.bf16.mxu0 0
      %888 = vmatpush1.bf16.msra.mxu0 0
      %889 = vmatprep.subr.bf16.mxu0 0
      %890 = vmatpush1.bf16.msra.mxu0 0
      %891 = vmatprep.subr.bf16.mxu0 0
      %892 = vmatpush1.bf16.msra.mxu0 0
      %893 = vmatprep.subr.bf16.mxu0 0
      %894 = vmatpush1.bf16.msra.mxu0 0
      %895 = vmatprep.subr.bf16.mxu0 0
      %896 = vmatpush1.bf16.msra.mxu0 0
      %897 = vmatprep.subr.bf16.mxu0 0
      %898 = vmatpush1.bf16.msra.mxu0 0
      %899 = vmatprep.mubr.bf16.mxu0 0
      %900 = vmatmul.mubr.bf16.gmra.mrb[0].mxu0 %v783
      %v901 = vpop.f32.mrb[0].mxu0
      %v902 = vadd.f32 %v652, %v901
      %v903 = vpop.f32.mrb[0].mxu0
      %v904 = vadd.f32 %v656, %v903
      %v905 = vpop.f32.mrb[0].mxu0
      %v906 = vadd.f32 %v652, %v905
      %v907 = vpop.f32.mrb[0].mxu0
      %v908 = vadd.f32 %v656, %v907
      %909 = vmatprep.mubr.bf16.mxu0 0
      %910 = vmatmul.mubr.bf16.gmra.mrb[0].mxu0 %v786
      %v911 = vpop.f32.mrb[0].mxu0
      %v912 = vadd.f32 %v652, %v911
      %v913 = vpop.f32.mrb[0].mxu0
      %v914 = vadd.f32 %v656, %v913
      %v915 = vpop.f32.mrb[0].mxu0
      %v916 = vadd.f32 %v652, %v915
      %v917 = vpop.f32.mrb[0].mxu0
      %v918 = vadd.f32 %v656, %v917
      %919 = vmatprep.mubr.bf16.mxu0 0
      %920 = vmatmul.mubr.bf16.gmra.mrb[0].mxu0 %v789
      %v921 = vpop.f32.mrb[0].mxu0
      %v922 = vadd.f32 %v652, %v921
      %v923 = vpop.f32.mrb[0].mxu0
      %v924 = vadd.f32 %v656, %v923
      %v925 = vpop.f32.mrb[0].mxu0
      %v926 = vadd.f32 %v652, %v925
      %v927 = vpop.f32.mrb[0].mxu0
      %v928 = vadd.f32 %v656, %v927
      %929 = vmatprep.mubr.bf16.mxu0 0
      %930 = vmatmul.mubr.bf16.gmra.mrb[0].mxu0 %v792
      %v931 = vpop.f32.mrb[0].mxu0
      %v932 = vadd.f32 %v652, %v931
      %v933 = vpop.f32.mrb[0].mxu0
      %v934 = vadd.f32 %v656, %v933
      %v935 = vpop.f32.mrb[0].mxu0
      %v936 = vadd.f32 %v652, %v935
      %v937 = vpop.f32.mrb[0].mxu0
      %v938 = vadd.f32 %v656, %v937
      %939 = vdwg.mxu0
      %940 = vmatprep.subr.bf16.mxu0 %v746
      %941 = vmatpush1.bf16.msra.mxu0 %v745
      %942 = vmatprep.subr.bf16.mxu0 %v756
      %943 = vmatpush1.bf16.msra.mxu0 %v755
      %944 = vmatprep.subr.bf16.mxu0 0
      %945 = vmatpush1.bf16.msra.mxu0 0
      %946 = vmatprep.subr.bf16.mxu0 0
      %947 = vmatpush1.bf16.msra.mxu0 0
      %948 = vmatprep.subr.bf16.mxu0 0
      %949 = vmatpush1.bf16.msra.mxu0 0
      %950 = vmatprep.subr.bf16.mxu0 0
      %951 = vmatpush1.bf16.msra.mxu0 0
      %952 = vmatprep.subr.bf16.mxu0 0
      %953 = vmatpush1.bf16.msra.mxu0 0
      %954 = vmatprep.subr.bf16.mxu0 0
      %955 = vmatpush1.bf16.msra.mxu0 0
      %956 = vmatprep.subr.bf16.mxu0 0
      %957 = vmatpush1.bf16.msra.mxu0 0
      %958 = vmatprep.subr.bf16.mxu0 0
      %959 = vmatpush1.bf16.msra.mxu0 0
      %960 = vmatprep.subr.bf16.mxu0 0
      %961 = vmatpush1.bf16.msra.mxu0 0
      %962 = vmatprep.subr.bf16.mxu0 0
      %963 = vmatpush1.bf16.msra.mxu0 0
      %964 = vmatprep.subr.bf16.mxu0 0
      %965 = vmatpush1.bf16.msra.mxu0 0
      %966 = vmatprep.subr.bf16.mxu0 0
      %967 = vmatpush1.bf16.msra.mxu0 0
      %968 = vmatprep.subr.bf16.mxu0 0
      %969 = vmatpush1.bf16.msra.mxu0 0
      %970 = vmatprep.subr.bf16.mxu0 0
      %971 = vmatpush1.bf16.msra.mxu0 0
      %972 = vmatprep.mubr.bf16.mxu0 0
      %973 = vmatmul.mubr.bf16.gmra.mrb[0].mxu0 %v783
      %v974 = vpop.f32.mrb[0].mxu0
      %v975 = vadd.f32 %v660, %v974
      %v976 = vpop.f32.mrb[0].mxu0
      %v977 = vadd.f32 %v664, %v976
      %v978 = vpop.f32.mrb[0].mxu0
      %v979 = vadd.f32 %v660, %v978
      %v980 = vpop.f32.mrb[0].mxu0
      %v981 = vadd.f32 %v664, %v980
      %982 = vmatprep.mubr.bf16.mxu0 0
      %983 = vmatmul.mubr.bf16.gmra.mrb[0].mxu0 %v786
      %v984 = vpop.f32.mrb[0].mxu0
      %v985 = vadd.f32 %v660, %v984
      %v986 = vpop.f32.mrb[0].mxu0
      %v987 = vadd.f32 %v664, %v986
      %v988 = vpop.f32.mrb[0].mxu0
      %v989 = vadd.f32 %v660, %v988
      %v990 = vpop.f32.mrb[0].mxu0
      %v991 = vadd.f32 %v664, %v990
      %992 = vmatprep.mubr.bf16.mxu0 0
      %993 = vmatmul.mubr.bf16.gmra.mrb[0].mxu0 %v789
      %v994 = vpop.f32.mrb[0].mxu0
      %v995 = vadd.f32 %v660, %v994
      %v996 = vpop.f32.mrb[0].mxu0
      %v997 = vadd.f32 %v664, %v996
      %v998 = vpop.f32.mrb[0].mxu0
      %v999 = vadd.f32 %v660, %v998
      %v1000 = vpop.f32.mrb[0].mxu0
      %v1001 = vadd.f32 %v664, %v1000
      %1002 = vmatprep.mubr.bf16.mxu0 0
      %1003 = vmatmul.mubr.bf16.gmra.mrb[0].mxu0 %v792
      %v1004 = vpop.f32.mrb[0].mxu0
      %v1005 = vadd.f32 %v660, %v1004
      %v1006 = vpop.f32.mrb[0].mxu0
      %v1007 = vadd.f32 %v664, %v1006
      %v1008 = vpop.f32.mrb[0].mxu0
      %v1009 = vadd.f32 %v660, %v1008
      %v1010 = vpop.f32.mrb[0].mxu0
      %v1011 = vadd.f32 %v664, %v1010
      %1012 = vdwg.mxu0
      %1013 = vmatprep.subr.bf16.mxu0 %v748
      %1014 = vmatpush1.bf16.msra.mxu0 %v747
      %1015 = vmatprep.subr.bf16.mxu0 %v758
      %1016 = vmatpush1.bf16.msra.mxu0 %v757
      %1017 = vmatprep.subr.bf16.mxu0 0
      %1018 = vmatpush1.bf16.msra.mxu0 0
      %1019 = vmatprep.subr.bf16.mxu0 0
      %1020 = vmatpush1.bf16.msra.mxu0 0
      %1021 = vmatprep.subr.bf16.mxu0 0
      %1022 = vmatpush1.bf16.msra.mxu0 0
      %1023 = vmatprep.subr.bf16.mxu0 0
      %1024 = vmatpush1.bf16.msra.mxu0 0
      %1025 = vmatprep.subr.bf16.mxu0 0
      %1026 = vmatpush1.bf16.msra.mxu0 0
      %1027 = vmatprep.subr.bf16.mxu0 0
      %1028 = vmatpush1.bf16.msra.mxu0 0
      %1029 = vmatprep.subr.bf16.mxu0 0
      %1030 = vmatpush1.bf16.msra.mxu0 0
      %1031 = vmatprep.subr.bf16.mxu0 0
      %1032 = vmatpush1.bf16.msra.mxu0 0
      %1033 = vmatprep.subr.bf16.mxu0 0
      %1034 = vmatpush1.bf16.msra.mxu0 0
      %1035 = vmatprep.subr.bf16.mxu0 0
      %1036 = vmatpush1.bf16.msra.mxu0 0
      %1037 = vmatprep.subr.bf16.mxu0 0
      %1038 = vmatpush1.bf16.msra.mxu0 0
      %1039 = vmatprep.subr.bf16.mxu0 0
      %1040 = vmatpush1.bf16.msra.mxu0 0
      %1041 = vmatprep.subr.bf16.mxu0 0
      %1042 = vmatpush1.bf16.msra.mxu0 0
      %1043 = vmatprep.subr.bf16.mxu0 0
      %1044 = vmatpush1.bf16.msra.mxu0 0
      %1045 = vmatprep.mubr.bf16.mxu0 0
      %1046 = vmatmul.mubr.bf16.gmra.mrb[0].mxu0 %v783
      %v1047 = vpop.f32.mrb[0].mxu0
      %v1048 = vadd.f32 %v668, %v1047
      %v1049 = vpop.f32.mrb[0].mxu0
      %v1050 = vadd.f32 %v672, %v1049
      %v1051 = vpop.f32.mrb[0].mxu0
      %v1052 = vadd.f32 %v668, %v1051
      %v1053 = vpop.f32.mrb[0].mxu0
      %v1054 = vadd.f32 %v672, %v1053
      %1055 = vmatprep.mubr.bf16.mxu0 0
      %1056 = vmatmul.mubr.bf16.gmra.mrb[0].mxu0 %v786
      %v1057 = vpop.f32.mrb[0].mxu0
      %v1058 = vadd.f32 %v668, %v1057
      %v1059 = vpop.f32.mrb[0].mxu0
      %v1060 = vadd.f32 %v672, %v1059
      %v1061 = vpop.f32.mrb[0].mxu0
      %v1062 = vadd.f32 %v668, %v1061
      %v1063 = vpop.f32.mrb[0].mxu0
      %v1064 = vadd.f32 %v672, %v1063
      %1065 = vmatprep.mubr.bf16.mxu0 0
      %1066 = vmatmul.mubr.bf16.gmra.mrb[0].mxu0 %v789
      %v1067 = vpop.f32.mrb[0].mxu0
      %v1068 = vadd.f32 %v668, %v1067
      %v1069 = vpop.f32.mrb[0].mxu0
      %v1070 = vadd.f32 %v672, %v1069
      %v1071 = vpop.f32.mrb[0].mxu0
      %v1072 = vadd.f32 %v668, %v1071
      %v1073 = vpop.f32.mrb[0].mxu0
      %v1074 = vadd.f32 %v672, %v1073
      %1075 = vmatprep.mubr.bf16.mxu0 0
      %1076 = vmatmul.mubr.bf16.gmra.mrb[0].mxu0 %v792
      %v1077 = vpop.f32.mrb[0].mxu0
      %v1078 = vadd.f32 %v668, %v1077
      %v1079 = vpop.f32.mrb[0].mxu0
      %v1080 = vadd.f32 %v672, %v1079
      %v1081 = vpop.f32.mrb[0].mxu0
      %v1082 = vadd.f32 %v668, %v1081
      %v1083 = vpop.f32.mrb[0].mxu0
      %v1084 = vadd.f32 %v672, %v1083
      %1085 = vdwg.mxu0
      %1086 = vmatprep.subr.bf16.mxu0 %v750
      %1087 = vmatpush1.bf16.msra.mxu0 %v749
      %1088 = vmatprep.subr.bf16.mxu0 %v760
      %1089 = vmatpush1.bf16.msra.mxu0 %v759
      %1090 = vmatprep.subr.bf16.mxu0 0
      %1091 = vmatpush1.bf16.msra.mxu0 0
      %1092 = vmatprep.subr.bf16.mxu0 0
      %1093 = vmatpush1.bf16.msra.mxu0 0
      %1094 = vmatprep.subr.bf16.mxu0 0
      %1095 = vmatpush1.bf16.msra.mxu0 0
      %1096 = vmatprep.subr.bf16.mxu0 0
      %1097 = vmatpush1.bf16.msra.mxu0 0
      %1098 = vmatprep.subr.bf16.mxu0 0
      %1099 = vmatpush1.bf16.msra.mxu0 0
      %1100 = vmatprep.subr.bf16.mxu0 0
      %1101 = vmatpush1.bf16.msra.mxu0 0
      %1102 = vmatprep.subr.bf16.mxu0 0
      %1103 = vmatpush1.bf16.msra.mxu0 0
      %1104 = vmatprep.subr.bf16.mxu0 0
      %1105 = vmatpush1.bf16.msra.mxu0 0
      %1106 = vmatprep.subr.bf16.mxu0 0
      %1107 = vmatpush1.bf16.msra.mxu0 0
      %1108 = vmatprep.subr.bf16.mxu0 0
      %1109 = vmatpush1.bf16.msra.mxu0 0
      %1110 = vmatprep.subr.bf16.mxu0 0
      %1111 = vmatpush1.bf16.msra.mxu0 0
      %1112 = vmatprep.subr.bf16.mxu0 0
      %1113 = vmatpush1.bf16.msra.mxu0 0
      %1114 = vmatprep.subr.bf16.mxu0 0
      %1115 = vmatpush1.bf16.msra.mxu0 0
      %1116 = vmatprep.subr.bf16.mxu0 0
      %1117 = vmatpush1.bf16.msra.mxu0 0
      %1118 = vmatprep.mubr.bf16.mxu0 0
      %1119 = vmatmul.mubr.bf16.gmra.mrb[0].mxu0 %v783
      %v1120 = vpop.f32.mrb[0].mxu0
      %v1121 = vadd.f32 %v676, %v1120
      %v1122 = vpop.f32.mrb[0].mxu0
      %v1123 = vadd.f32 %v680, %v1122
      %v1124 = vpop.f32.mrb[0].mxu0
      %v1125 = vadd.f32 %v676, %v1124
      %v1126 = vpop.f32.mrb[0].mxu0
      %v1127 = vadd.f32 %v680, %v1126
      %1128 = vmatprep.mubr.bf16.mxu0 0
      %1129 = vmatmul.mubr.bf16.gmra.mrb[0].mxu0 %v786
      %v1130 = vpop.f32.mrb[0].mxu0
      %v1131 = vadd.f32 %v676, %v1130
      %v1132 = vpop.f32.mrb[0].mxu0
      %v1133 = vadd.f32 %v680, %v1132
      %v1134 = vpop.f32.mrb[0].mxu0
      %v1135 = vadd.f32 %v676, %v1134
      %v1136 = vpop.f32.mrb[0].mxu0
      %v1137 = vadd.f32 %v680, %v1136
      %1138 = vmatprep.mubr.bf16.mxu0 0
      %1139 = vmatmul.mubr.bf16.gmra.mrb[0].mxu0 %v789
      %v1140 = vpop.f32.mrb[0].mxu0
      %v1141 = vadd.f32 %v676, %v1140
      %v1142 = vpop.f32.mrb[0].mxu0
      %v1143 = vadd.f32 %v680, %v1142
      %v1144 = vpop.f32.mrb[0].mxu0
      %v1145 = vadd.f32 %v676, %v1144
      %v1146 = vpop.f32.mrb[0].mxu0
      %v1147 = vadd.f32 %v680, %v1146
      %1148 = vmatprep.mubr.bf16.mxu0 0
      %1149 = vmatmul.mubr.bf16.gmra.mrb[0].mxu0 %v792
      %v1150 = vpop.f32.mrb[0].mxu0
      %v1151 = vadd.f32 %v676, %v1150
      %v1152 = vpop.f32.mrb[0].mxu0
      %v1153 = vadd.f32 %v680, %v1152
      %v1154 = vpop.f32.mrb[0].mxu0
      %v1155 = vadd.f32 %v676, %v1154
      %v1156 = vpop.f32.mrb[0].mxu0
      %v1157 = vadd.f32 %v680, %v1156
      %1158 = vdwg.mxu0
      %v1159 = vxor.u32 %v829, 2147483648
      %v1160 = vxor.u32 %v831, 2147483648
      %v1161 = vxor.u32 %v902, 2147483648
      %v1162 = vxor.u32 %v904, 2147483648
      %v1163 = vxor.u32 %v975, 2147483648
      %v1164 = vxor.u32 %v977, 2147483648
      %v1165 = vxor.u32 %v1048, 2147483648
      %v1166 = vxor.u32 %v1050, 2147483648
      %v1167 = vxor.u32 %v1121, 2147483648
      %v1168 = vxor.u32 %v1123, 2147483648
      %v1169 = vxor.u32 %v833, 2147483648
      %v1170 = vxor.u32 %v835, 2147483648
      %v1171 = vxor.u32 %v906, 2147483648
      %v1172 = vxor.u32 %v908, 2147483648
      %v1173 = vxor.u32 %v979, 2147483648
      %v1174 = vxor.u32 %v981, 2147483648
      %v1175 = vxor.u32 %v1052, 2147483648
      %v1176 = vxor.u32 %v1054, 2147483648
      %v1177 = vxor.u32 %v1125, 2147483648
      %v1178 = vxor.u32 %v1127, 2147483648
      %v1179 = vxor.u32 %v839, 2147483648
      %v1180 = vxor.u32 %v841, 2147483648
      %v1181 = vxor.u32 %v912, 2147483648
      %v1182 = vxor.u32 %v914, 2147483648
      %v1183 = vxor.u32 %v985, 2147483648
      %v1184 = vxor.u32 %v987, 2147483648
      %v1185 = vxor.u32 %v1058, 2147483648
      %v1186 = vxor.u32 %v1060, 2147483648
      %v1187 = vxor.u32 %v1131, 2147483648
      %v1188 = vxor.u32 %v1133, 2147483648
      %v1189 = vxor.u32 %v843, 2147483648
      %v1190 = vxor.u32 %v845, 2147483648
      %v1191 = vxor.u32 %v916, 2147483648
      %v1192 = vxor.u32 %v918, 2147483648
      %v1193 = vxor.u32 %v989, 2147483648
      %v1194 = vxor.u32 %v991, 2147483648
      %v1195 = vxor.u32 %v1062, 2147483648
      %v1196 = vxor.u32 %v1064, 2147483648
      %v1197 = vxor.u32 %v1135, 2147483648
      %v1198 = vxor.u32 %v1137, 2147483648
      %v1199 = vxor.u32 %v849, 2147483648
      %v1200 = vxor.u32 %v851, 2147483648
      %v1201 = vxor.u32 %v922, 2147483648
      %v1202 = vxor.u32 %v924, 2147483648
      %v1203 = vxor.u32 %v995, 2147483648
      %v1204 = vxor.u32 %v997, 2147483648
      %v1205 = vxor.u32 %v1068, 2147483648
      %v1206 = vxor.u32 %v1070, 2147483648
      %v1207 = vxor.u32 %v1141, 2147483648
      %v1208 = vxor.u32 %v1143, 2147483648
      %v1209 = vxor.u32 %v853, 2147483648
      %v1210 = vxor.u32 %v855, 2147483648
      %v1211 = vxor.u32 %v926, 2147483648
      %v1212 = vxor.u32 %v928, 2147483648
      %v1213 = vxor.u32 %v999, 2147483648
      %v1214 = vxor.u32 %v1001, 2147483648
      %v1215 = vxor.u32 %v1072, 2147483648
      %v1216 = vxor.u32 %v1074, 2147483648
      %v1217 = vxor.u32 %v1145, 2147483648
      %v1218 = vxor.u32 %v1147, 2147483648
      %v1219 = vxor.u32 %v859, 2147483648
      %v1220 = vxor.u32 %v861, 2147483648
      %v1221 = vxor.u32 %v932, 2147483648
      %v1222 = vxor.u32 %v934, 2147483648
      %v1223 = vxor.u32 %v1005, 2147483648
      %v1224 = vxor.u32 %v1007, 2147483648
      %v1225 = vxor.u32 %v1078, 2147483648
      %v1226 = vxor.u32 %v1080, 2147483648
      %v1227 = vxor.u32 %v1151, 2147483648
      %v1228 = vxor.u32 %v1153, 2147483648
      %v1229 = vxor.u32 %v863, 2147483648
      %v1230 = vxor.u32 %v865, 2147483648
      %v1231 = vxor.u32 %v936, 2147483648
      %v1232 = vxor.u32 %v938, 2147483648
      %v1233 = vxor.u32 %v1009, 2147483648
      %v1234 = vxor.u32 %v1011, 2147483648
      %v1235 = vxor.u32 %v1082, 2147483648
      %v1236 = vxor.u32 %v1084, 2147483648
      %v1237 = vxor.u32 %v1155, 2147483648
      %v1238 = vxor.u32 %v1157, 2147483648
      %v1239 = vmul.f32 %v1159, 1.442695
      %v1240 = vpow.pop %v1239
      %v1241 = vmul.f32 %v1160, 1.442695
      %v1242 = vpow.pop %v1241
      %v1243 = vmul.f32 %v1161, 1.442695
      %v1244 = vpow.pop %v1243
      %v1245 = vmul.f32 %v1162, 1.442695
      %v1246 = vpow.pop %v1245
      %v1247 = vmul.f32 %v1163, 1.442695
      %v1248 = vpow.pop %v1247
      %v1249 = vmul.f32 %v1164, 1.442695
      %v1250 = vpow.pop %v1249
      %v1251 = vmul.f32 %v1165, 1.442695
      %v1252 = vpow.pop %v1251
      %v1253 = vmul.f32 %v1166, 1.442695
      %v1254 = vpow.pop %v1253
      %v1255 = vmul.f32 %v1167, 1.442695
      %v1256 = vpow.pop %v1255
      %v1257 = vmul.f32 %v1168, 1.442695
      %v1258 = vpow.pop %v1257
      %v1259 = vmul.f32 %v1169, 1.442695
      %v1260 = vpow.pop %v1259
      %v1261 = vmul.f32 %v1170, 1.442695
      %v1262 = vpow.pop %v1261
      %v1263 = vmul.f32 %v1171, 1.442695
      %v1264 = vpow.pop %v1263
      %v1265 = vmul.f32 %v1172, 1.442695
      %v1266 = vpow.pop %v1265
      %v1267 = vmul.f32 %v1173, 1.442695
      %v1268 = vpow.pop %v1267
      %v1269 = vmul.f32 %v1174, 1.442695
      %v1270 = vpow.pop %v1269
      %v1271 = vmul.f32 %v1175, 1.442695
      %v1272 = vpow.pop %v1271
      %v1273 = vmul.f32 %v1176, 1.442695
      %v1274 = vpow.pop %v1273
      %v1275 = vmul.f32 %v1177, 1.442695
      %v1276 = vpow.pop %v1275
      %v1277 = vmul.f32 %v1178, 1.442695
      %v1278 = vpow.pop %v1277
      %v1279 = vmul.f32 %v1179, 1.442695
      %v1280 = vpow.pop %v1279
      %v1281 = vmul.f32 %v1180, 1.442695
      %v1282 = vpow.pop %v1281
      %v1283 = vmul.f32 %v1181, 1.442695
      %v1284 = vpow.pop %v1283
      %v1285 = vmul.f32 %v1182, 1.442695
      %v1286 = vpow.pop %v1285
      %v1287 = vmul.f32 %v1183, 1.442695
      %v1288 = vpow.pop %v1287
      %v1289 = vmul.f32 %v1184, 1.442695
      %v1290 = vpow.pop %v1289
      %v1291 = vmul.f32 %v1185, 1.442695
      %v1292 = vpow.pop %v1291
      %v1293 = vmul.f32 %v1186, 1.442695
      %v1294 = vpow.pop %v1293
      %v1295 = vmul.f32 %v1187, 1.442695
      %v1296 = vpow.pop %v1295
      %v1297 = vmul.f32 %v1188, 1.442695
      %v1298 = vpow.pop %v1297
      %v1299 = vmul.f32 %v1189, 1.442695
      %v1300 = vpow.pop %v1299
      %v1301 = vmul.f32 %v1190, 1.442695
      %v1302 = vpow.pop %v1301
      %v1303 = vmul.f32 %v1191, 1.442695
      %v1304 = vpow.pop %v1303
      %v1305 = vmul.f32 %v1192, 1.442695
      %v1306 = vpow.pop %v1305
      %v1307 = vmul.f32 %v1193, 1.442695
      %v1308 = vpow.pop %v1307
      %v1309 = vmul.f32 %v1194, 1.442695
      %v1310 = vpow.pop %v1309
      %v1311 = vmul.f32 %v1195, 1.442695
      %v1312 = vpow.pop %v1311
      %v1313 = vmul.f32 %v1196, 1.442695
      %v1314 = vpow.pop %v1313
      %v1315 = vmul.f32 %v1197, 1.442695
      %v1316 = vpow.pop %v1315
      %v1317 = vmul.f32 %v1198, 1.442695
      %v1318 = vpow.pop %v1317
      %v1319 = vmul.f32 %v1199, 1.442695
      %v1320 = vpow.pop %v1319
      %v1321 = vmul.f32 %v1200, 1.442695
      %v1322 = vpow.pop %v1321
      %v1323 = vmul.f32 %v1201, 1.442695
      %v1324 = vpow.pop %v1323
      %v1325 = vmul.f32 %v1202, 1.442695
      %v1326 = vpow.pop %v1325
      %v1327 = vmul.f32 %v1203, 1.442695
      %v1328 = vpow.pop %v1327
      %v1329 = vmul.f32 %v1204, 1.442695
      %v1330 = vpow.pop %v1329
      %v1331 = vmul.f32 %v1205, 1.442695
      %v1332 = vpow.pop %v1331
      %v1333 = vmul.f32 %v1206, 1.442695
      %v1334 = vpow.pop %v1333
      %v1335 = vmul.f32 %v1207, 1.442695
      %v1336 = vpow.pop %v1335
      %v1337 = vmul.f32 %v1208, 1.442695
      %v1338 = vpow.pop %v1337
      %v1339 = vmul.f32 %v1209, 1.442695
      %v1340 = vpow.pop %v1339
      %v1341 = vmul.f32 %v1210, 1.442695
      %v1342 = vpow.pop %v1341
      %v1343 = vmul.f32 %v1211, 1.442695
      %v1344 = vpow.pop %v1343
      %v1345 = vmul.f32 %v1212, 1.442695
      %v1346 = vpow.pop %v1345
      %v1347 = vmul.f32 %v1213, 1.442695
      %v1348 = vpow.pop %v1347
      %v1349 = vmul.f32 %v1214, 1.442695
      %v1350 = vpow.pop %v1349
      %v1351 = vmul.f32 %v1215, 1.442695
      %v1352 = vpow.pop %v1351
      %v1353 = vmul.f32 %v1216, 1.442695
      %v1354 = vpow.pop %v1353
      %v1355 = vmul.f32 %v1217, 1.442695
      %v1356 = vpow.pop %v1355
      %v1357 = vmul.f32 %v1218, 1.442695
      %v1358 = vpow.pop %v1357
      %v1359 = vmul.f32 %v1219, 1.442695
      %v1360 = vpow.pop %v1359
      %v1361 = vmul.f32 %v1220, 1.442695
      %v1362 = vpow.pop %v1361
      %v1363 = vmul.f32 %v1221, 1.442695
      %v1364 = vpow.pop %v1363
      %v1365 = vmul.f32 %v1222, 1.442695
      %v1366 = vpow.pop %v1365
      %v1367 = vmul.f32 %v1223, 1.442695
      %v1368 = vpow.pop %v1367
      %v1369 = vmul.f32 %v1224, 1.442695
      %v1370 = vpow.pop %v1369
      %v1371 = vmul.f32 %v1225, 1.442695
      %v1372 = vpow.pop %v1371
      %v1373 = vmul.f32 %v1226, 1.442695
      %v1374 = vpow.pop %v1373
      %v1375 = vmul.f32 %v1227, 1.442695
      %v1376 = vpow.pop %v1375
      %v1377 = vmul.f32 %v1228, 1.442695
      %v1378 = vpow.pop %v1377
      %v1379 = vmul.f32 %v1229, 1.442695
      %v1380 = vpow.pop %v1379
      %v1381 = vmul.f32 %v1230, 1.442695
      %v1382 = vpow.pop %v1381
      %v1383 = vmul.f32 %v1231, 1.442695
      %v1384 = vpow.pop %v1383
      %v1385 = vmul.f32 %v1232, 1.442695
      %v1386 = vpow.pop %v1385
      %v1387 = vmul.f32 %v1233, 1.442695
      %v1388 = vpow.pop %v1387
      %v1389 = vmul.f32 %v1234, 1.442695
      %v1390 = vpow.pop %v1389
      %v1391 = vmul.f32 %v1235, 1.442695
      %v1392 = vpow.pop %v1391
      %v1393 = vmul.f32 %v1236, 1.442695
      %v1394 = vpow.pop %v1393
      %v1395 = vmul.f32 %v1237, 1.442695
      %v1396 = vpow.pop %v1395
      %v1397 = vmul.f32 %v1238, 1.442695
      %v1398 = vpow.pop %v1397
      %v1399 = vadd.f32 %v1240, 1.0
      %v1400 = vadd.f32 %v1242, 1.0
      %v1401 = vadd.f32 %v1244, 1.0
      %v1402 = vadd.f32 %v1246, 1.0
      %v1403 = vadd.f32 %v1248, 1.0
      %v1404 = vadd.f32 %v1250, 1.0
      %v1405 = vadd.f32 %v1252, 1.0
      %v1406 = vadd.f32 %v1254, 1.0
      %v1407 = vadd.f32 %v1256, 1.0
      %v1408 = vadd.f32 %v1258, 1.0
      %v1409 = vadd.f32 %v1260, 1.0
      %v1410 = vadd.f32 %v1262, 1.0
      %v1411 = vadd.f32 %v1264, 1.0
      %v1412 = vadd.f32 %v1266, 1.0
      %v1413 = vadd.f32 %v1268, 1.0
      %v1414 = vadd.f32 %v1270, 1.0
      %v1415 = vadd.f32 %v1272, 1.0
      %v1416 = vadd.f32 %v1274, 1.0
      %v1417 = vadd.f32 %v1276, 1.0
      %v1418 = vadd.f32 %v1278, 1.0
      %v1419 = vadd.f32 %v1280, 1.0
      %v1420 = vadd.f32 %v1282, 1.0
      %v1421 = vadd.f32 %v1284, 1.0
      %v1422 = vadd.f32 %v1286, 1.0
      %v1423 = vadd.f32 %v1288, 1.0
      %v1424 = vadd.f32 %v1290, 1.0
      %v1425 = vadd.f32 %v1292, 1.0
      %v1426 = vadd.f32 %v1294, 1.0
      %v1427 = vadd.f32 %v1296, 1.0
      %v1428 = vadd.f32 %v1298, 1.0
      %v1429 = vadd.f32 %v1300, 1.0
      %v1430 = vadd.f32 %v1302, 1.0
      %v1431 = vadd.f32 %v1304, 1.0
      %v1432 = vadd.f32 %v1306, 1.0
      %v1433 = vadd.f32 %v1308, 1.0
      %v1434 = vadd.f32 %v1310, 1.0
      %v1435 = vadd.f32 %v1312, 1.0
      %v1436 = vadd.f32 %v1314, 1.0
      %v1437 = vadd.f32 %v1316, 1.0
      %v1438 = vadd.f32 %v1318, 1.0
      %v1439 = vadd.f32 %v1320, 1.0
      %v1440 = vadd.f32 %v1322, 1.0
      %v1441 = vadd.f32 %v1324, 1.0
      %v1442 = vadd.f32 %v1326, 1.0
      %v1443 = vadd.f32 %v1328, 1.0
      %v1444 = vadd.f32 %v1330, 1.0
      %v1445 = vadd.f32 %v1332, 1.0
      %v1446 = vadd.f32 %v1334, 1.0
      %v1447 = vadd.f32 %v1336, 1.0
      %v1448 = vadd.f32 %v1338, 1.0
      %v1449 = vadd.f32 %v1340, 1.0
      %v1450 = vadd.f32 %v1342, 1.0
      %v1451 = vadd.f32 %v1344, 1.0
      %v1452 = vadd.f32 %v1346, 1.0
      %v1453 = vadd.f32 %v1348, 1.0
      %v1454 = vadd.f32 %v1350, 1.0
      %v1455 = vadd.f32 %v1352, 1.0
      %v1456 = vadd.f32 %v1354, 1.0
      %v1457 = vadd.f32 %v1356, 1.0
      %v1458 = vadd.f32 %v1358, 1.0
      %v1459 = vadd.f32 %v1360, 1.0
      %v1460 = vadd.f32 %v1362, 1.0
      %v1461 = vadd.f32 %v1364, 1.0
      %v1462 = vadd.f32 %v1366, 1.0
      %v1463 = vadd.f32 %v1368, 1.0
      %v1464 = vadd.f32 %v1370, 1.0
      %v1465 = vadd.f32 %v1372, 1.0
      %v1466 = vadd.f32 %v1374, 1.0
      %v1467 = vadd.f32 %v1376, 1.0
      %v1468 = vadd.f32 %v1378, 1.0
      %v1469 = vadd.f32 %v1380, 1.0
      %v1470 = vadd.f32 %v1382, 1.0
      %v1471 = vadd.f32 %v1384, 1.0
      %v1472 = vadd.f32 %v1386, 1.0
      %v1473 = vadd.f32 %v1388, 1.0
      %v1474 = vadd.f32 %v1390, 1.0
      %v1475 = vadd.f32 %v1392, 1.0
      %v1476 = vadd.f32 %v1394, 1.0
      %v1477 = vadd.f32 %v1396, 1.0
      %v1478 = vadd.f32 %v1398, 1.0
      %v1479 = vrcp.pop %v1399
      %v1480 = vmul.f32 1.0, %v1479
      %v1481 = vrcp.pop %v1400
      %v1482 = vmul.f32 1.0, %v1481
      %v1483 = vrcp.pop %v1401
      %v1484 = vmul.f32 1.0, %v1483
      %v1485 = vrcp.pop %v1402
      %v1486 = vmul.f32 1.0, %v1485
      %v1487 = vrcp.pop %v1403
      %v1488 = vmul.f32 1.0, %v1487
      %v1489 = vrcp.pop %v1404
      %v1490 = vmul.f32 1.0, %v1489
      %v1491 = vrcp.pop %v1405
      %v1492 = vmul.f32 1.0, %v1491
      %v1493 = vrcp.pop %v1406
      %v1494 = vmul.f32 1.0, %v1493
      %v1495 = vrcp.pop %v1407
      %v1496 = vmul.f32 1.0, %v1495
      %v1497 = vrcp.pop %v1408
      %v1498 = vmul.f32 1.0, %v1497
      %v1499 = vrcp.pop %v1409
      %v1500 = vmul.f32 1.0, %v1499
      %v1501 = vrcp.pop %v1410
      %v1502 = vmul.f32 1.0, %v1501
      %v1503 = vrcp.pop %v1411
      %v1504 = vmul.f32 1.0, %v1503
      %v1505 = vrcp.pop %v1412
      %v1506 = vmul.f32 1.0, %v1505
      %v1507 = vrcp.pop %v1413
      %v1508 = vmul.f32 1.0, %v1507
      %v1509 = vrcp.pop %v1414
      %v1510 = vmul.f32 1.0, %v1509
      %v1511 = vrcp.pop %v1415
      %v1512 = vmul.f32 1.0, %v1511
      %v1513 = vrcp.pop %v1416
      %v1514 = vmul.f32 1.0, %v1513
      %v1515 = vrcp.pop %v1417
      %v1516 = vmul.f32 1.0, %v1515
      %v1517 = vrcp.pop %v1418
      %v1518 = vmul.f32 1.0, %v1517
      %v1519 = vrcp.pop %v1419
      %v1520 = vmul.f32 1.0, %v1519
      %v1521 = vrcp.pop %v1420
      %v1522 = vmul.f32 1.0, %v1521
      %v1523 = vrcp.pop %v1421
      %v1524 = vmul.f32 1.0, %v1523
      %v1525 = vrcp.pop %v1422
      %v1526 = vmul.f32 1.0, %v1525
      %v1527 = vrcp.pop %v1423
      %v1528 = vmul.f32 1.0, %v1527
      %v1529 = vrcp.pop %v1424
      %v1530 = vmul.f32 1.0, %v1529
      %v1531 = vrcp.pop %v1425
      %v1532 = vmul.f32 1.0, %v1531
      %v1533 = vrcp.pop %v1426
      %v1534 = vmul.f32 1.0, %v1533
      %v1535 = vrcp.pop %v1427
      %v1536 = vmul.f32 1.0, %v1535
      %v1537 = vrcp.pop %v1428
      %v1538 = vmul.f32 1.0, %v1537
      %v1539 = vrcp.pop %v1429
      %v1540 = vmul.f32 1.0, %v1539
      %v1541 = vrcp.pop %v1430
      %v1542 = vmul.f32 1.0, %v1541
      %v1543 = vrcp.pop %v1431
      %v1544 = vmul.f32 1.0, %v1543
      %v1545 = vrcp.pop %v1432
      %v1546 = vmul.f32 1.0, %v1545
      %v1547 = vrcp.pop %v1433
      %v1548 = vmul.f32 1.0, %v1547
      %v1549 = vrcp.pop %v1434
      %v1550 = vmul.f32 1.0, %v1549
      %v1551 = vrcp.pop %v1435
      %v1552 = vmul.f32 1.0, %v1551
      %v1553 = vrcp.pop %v1436
      %v1554 = vmul.f32 1.0, %v1553
      %v1555 = vrcp.pop %v1437
      %v1556 = vmul.f32 1.0, %v1555
      %v1557 = vrcp.pop %v1438
      %v1558 = vmul.f32 1.0, %v1557
      %v1559 = vrcp.pop %v1439
      %v1560 = vmul.f32 1.0, %v1559
      %v1561 = vrcp.pop %v1440
      %v1562 = vmul.f32 1.0, %v1561
      %v1563 = vrcp.pop %v1441
      %v1564 = vmul.f32 1.0, %v1563
      %v1565 = vrcp.pop %v1442
      %v1566 = vmul.f32 1.0, %v1565
      %v1567 = vrcp.pop %v1443
      %v1568 = vmul.f32 1.0, %v1567
      %v1569 = vrcp.pop %v1444
      %v1570 = vmul.f32 1.0, %v1569
      %v1571 = vrcp.pop %v1445
      %v1572 = vmul.f32 1.0, %v1571
      %v1573 = vrcp.pop %v1446
      %v1574 = vmul.f32 1.0, %v1573
      %v1575 = vrcp.pop %v1447
      %v1576 = vmul.f32 1.0, %v1575
      %v1577 = vrcp.pop %v1448
      %v1578 = vmul.f32 1.0, %v1577
      %v1579 = vrcp.pop %v1449
      %v1580 = vmul.f32 1.0, %v1579
      %v1581 = vrcp.pop %v1450
      %v1582 = vmul.f32 1.0, %v1581
      %v1583 = vrcp.pop %v1451
      %v1584 = vmul.f32 1.0, %v1583
      %v1585 = vrcp.pop %v1452
      %v1586 = vmul.f32 1.0, %v1585
      %v1587 = vrcp.pop %v1453
      %v1588 = vmul.f32 1.0, %v1587
      %v1589 = vrcp.pop %v1454
      %v1590 = vmul.f32 1.0, %v1589
      %v1591 = vrcp.pop %v1455
      %v1592 = vmul.f32 1.0, %v1591
      %v1593 = vrcp.pop %v1456
      %v1594 = vmul.f32 1.0, %v1593
      %v1595 = vrcp.pop %v1457
      %v1596 = vmul.f32 1.0, %v1595
      %v1597 = vrcp.pop %v1458
      %v1598 = vmul.f32 1.0, %v1597
      %v1599 = vrcp.pop %v1459
      %v1600 = vmul.f32 1.0, %v1599
      %v1601 = vrcp.pop %v1460
      %v1602 = vmul.f32 1.0, %v1601
      %v1603 = vrcp.pop %v1461
      %v1604 = vmul.f32 1.0, %v1603
      %v1605 = vrcp.pop %v1462
      %v1606 = vmul.f32 1.0, %v1605
      %v1607 = vrcp.pop %v1463
      %v1608 = vmul.f32 1.0, %v1607
      %v1609 = vrcp.pop %v1464
      %v1610 = vmul.f32 1.0, %v1609
      %v1611 = vrcp.pop %v1465
      %v1612 = vmul.f32 1.0, %v1611
      %v1613 = vrcp.pop %v1466
      %v1614 = vmul.f32 1.0, %v1613
      %v1615 = vrcp.pop %v1467
      %v1616 = vmul.f32 1.0, %v1615
      %v1617 = vrcp.pop %v1468
      %v1618 = vmul.f32 1.0, %v1617
      %v1619 = vrcp.pop %v1469
      %v1620 = vmul.f32 1.0, %v1619
      %v1621 = vrcp.pop %v1470
      %v1622 = vmul.f32 1.0, %v1621
      %v1623 = vrcp.pop %v1471
      %v1624 = vmul.f32 1.0, %v1623
      %v1625 = vrcp.pop %v1472
      %v1626 = vmul.f32 1.0, %v1625
      %v1627 = vrcp.pop %v1473
      %v1628 = vmul.f32 1.0, %v1627
      %v1629 = vrcp.pop %v1474
      %v1630 = vmul.f32 1.0, %v1629
      %v1631 = vrcp.pop %v1475
      %v1632 = vmul.f32 1.0, %v1631
      %v1633 = vrcp.pop %v1476
      %v1634 = vmul.f32 1.0, %v1633
      %v1635 = vrcp.pop %v1477
      %v1636 = vmul.f32 1.0, %v1635
      %v1637 = vrcp.pop %v1478
      %v1638 = vmul.f32 1.0, %v1637
      %v1639 = vmul.f32 %v829, %v1480
      %v1640 = vmul.f32 %v831, %v1482
      %v1641 = vmul.f32 %v902, %v1484
      %v1642 = vmul.f32 %v904, %v1486
      %v1643 = vmul.f32 %v975, %v1488
      %v1644 = vmul.f32 %v977, %v1490
      %v1645 = vmul.f32 %v1048, %v1492
      %v1646 = vmul.f32 %v1050, %v1494
      %v1647 = vmul.f32 %v1121, %v1496
      %v1648 = vmul.f32 %v1123, %v1498
      %v1649 = vmul.f32 %v833, %v1500
      %v1650 = vmul.f32 %v835, %v1502
      %v1651 = vmul.f32 %v906, %v1504
      %v1652 = vmul.f32 %v908, %v1506
      %v1653 = vmul.f32 %v979, %v1508
      %v1654 = vmul.f32 %v981, %v1510
      %v1655 = vmul.f32 %v1052, %v1512
      %v1656 = vmul.f32 %v1054, %v1514
      %v1657 = vmul.f32 %v1125, %v1516
      %v1658 = vmul.f32 %v1127, %v1518
      %v1659 = vmul.f32 %v839, %v1520
      %v1660 = vmul.f32 %v841, %v1522
      %v1661 = vmul.f32 %v912, %v1524
      %v1662 = vmul.f32 %v914, %v1526
      %v1663 = vmul.f32 %v985, %v1528
      %v1664 = vmul.f32 %v987, %v1530
      %v1665 = vmul.f32 %v1058, %v1532
      %v1666 = vmul.f32 %v1060, %v1534
      %v1667 = vmul.f32 %v1131, %v1536
      %v1668 = vmul.f32 %v1133, %v1538
      %v1669 = vmul.f32 %v843, %v1540
      %v1670 = vmul.f32 %v845, %v1542
      %v1671 = vmul.f32 %v916, %v1544
      %v1672 = vmul.f32 %v918, %v1546
      %v1673 = vmul.f32 %v989, %v1548
      %v1674 = vmul.f32 %v991, %v1550
      %v1675 = vmul.f32 %v1062, %v1552
      %v1676 = vmul.f32 %v1064, %v1554
      %v1677 = vmul.f32 %v1135, %v1556
      %v1678 = vmul.f32 %v1137, %v1558
      %v1679 = vmul.f32 %v849, %v1560
      %v1680 = vmul.f32 %v851, %v1562
      %v1681 = vmul.f32 %v922, %v1564
      %v1682 = vmul.f32 %v924, %v1566
      %v1683 = vmul.f32 %v995, %v1568
      %v1684 = vmul.f32 %v997, %v1570
      %v1685 = vmul.f32 %v1068, %v1572
      %v1686 = vmul.f32 %v1070, %v1574
      %v1687 = vmul.f32 %v1141, %v1576
      %v1688 = vmul.f32 %v1143, %v1578
      %v1689 = vmul.f32 %v853, %v1580
      %v1690 = vmul.f32 %v855, %v1582
      %v1691 = vmul.f32 %v926, %v1584
      %v1692 = vmul.f32 %v928, %v1586
      %v1693 = vmul.f32 %v999, %v1588
      %v1694 = vmul.f32 %v1001, %v1590
      %v1695 = vmul.f32 %v1072, %v1592
      %v1696 = vmul.f32 %v1074, %v1594
      %v1697 = vmul.f32 %v1145, %v1596
      %v1698 = vmul.f32 %v1147, %v1598
      %v1699 = vmul.f32 %v859, %v1600
      %v1700 = vmul.f32 %v861, %v1602
      %v1701 = vmul.f32 %v932, %v1604
      %v1702 = vmul.f32 %v934, %v1606
      %v1703 = vmul.f32 %v1005, %v1608
      %v1704 = vmul.f32 %v1007, %v1610
      %v1705 = vmul.f32 %v1078, %v1612
      %v1706 = vmul.f32 %v1080, %v1614
      %v1707 = vmul.f32 %v1151, %v1616
      %v1708 = vmul.f32 %v1153, %v1618
      %v1709 = vmul.f32 %v863, %v1620
      %v1710 = vmul.f32 %v865, %v1622
      %v1711 = vmul.f32 %v936, %v1624
      %v1712 = vmul.f32 %v938, %v1626
      %v1713 = vmul.f32 %v1009, %v1628
      %v1714 = vmul.f32 %v1011, %v1630
      %v1715 = vmul.f32 %v1082, %v1632
      %v1716 = vmul.f32 %v1084, %v1634
      %v1717 = vmul.f32 %v1155, %v1636
      %v1718 = vmul.f32 %v1157, %v1638
      %v1719 = vld [vmem:[#allocation2] sm:$0xff]
      %v1720 = vld [vmem:[#allocation2 + $0x8] sm:$0x3]
      %v1721 = vadd.f32 %v1639, %v1649
      %v1722 = vadd.f32 %v1721, %v1659
      %v1723 = vadd.f32 %v1722, %v1669
      %v1724 = vadd.f32 %v1723, %v1679
      %v1725 = vadd.f32 %v1724, %v1689
      %v1726 = vadd.f32 %v1725, %v1699
      %v1727 = vadd.f32 %v1726, %v1709
      %v1728 = vrot.slane %v1727, 4
      %v1729 = vadd.f32 %v1727, %v1728
      %v1730 = vrot.slane %v1729, 2
      %v1731 = vadd.f32 %v1729, %v1730
      %v1732 = vrot.slane %v1731, 1
      %v1733 = vadd.f32 %v1731, %v1732
      %v1734 = vadd.f32 %v1640, %v1650
      %v1735 = vadd.f32 %v1734, %v1660
      %v1736 = vadd.f32 %v1735, %v1670
      %v1737 = vadd.f32 %v1736, %v1680
      %v1738 = vadd.f32 %v1737, %v1690
      %v1739 = vadd.f32 %v1738, %v1700
      %v1740 = vadd.f32 %v1739, %v1710
      %v1741 = vrot.slane %v1740, 4
      %v1742 = vadd.f32 %v1740, %v1741
      %v1743 = vrot.slane %v1742, 2
      %v1744 = vadd.f32 %v1742, %v1743
      %v1745 = vrot.slane %v1744, 1
      %v1746 = vadd.f32 %v1744, %v1745
      %v1747 = vadd.f32 %v1641, %v1651
      %v1748 = vadd.f32 %v1747, %v1661
      %v1749 = vadd.f32 %v1748, %v1671
      %v1750 = vadd.f32 %v1749, %v1681
      %v1751 = vadd.f32 %v1750, %v1691
      %v1752 = vadd.f32 %v1751, %v1701
      %v1753 = vadd.f32 %v1752, %v1711
      %v1754 = vrot.slane %v1753, 4
      %v1755 = vadd.f32 %v1753, %v1754
      %v1756 = vrot.slane %v1755, 2
      %v1757 = vadd.f32 %v1755, %v1756
      %v1758 = vrot.slane %v1757, 1
      %v1759 = vadd.f32 %v1757, %v1758
      %v1760 = vadd.f32 %v1642, %v1652
      %v1761 = vadd.f32 %v1760, %v1662
      %v1762 = vadd.f32 %v1761, %v1672
      %v1763 = vadd.f32 %v1762, %v1682
      %v1764 = vadd.f32 %v1763, %v1692
      %v1765 = vadd.f32 %v1764, %v1702
      %v1766 = vadd.f32 %v1765, %v1712
      %v1767 = vrot.slane %v1766, 4
      %v1768 = vadd.f32 %v1766, %v1767
      %v1769 = vrot.slane %v1768, 2
      %v1770 = vadd.f32 %v1768, %v1769
      %v1771 = vrot.slane %v1770, 1
      %v1772 = vadd.f32 %v1770, %v1771
      %v1773 = vadd.f32 %v1643, %v1653
      %v1774 = vadd.f32 %v1773, %v1663
      %v1775 = vadd.f32 %v1774, %v1673
      %v1776 = vadd.f32 %v1775, %v1683
      %v1777 = vadd.f32 %v1776, %v1693
      %v1778 = vadd.f32 %v1777, %v1703
      %v1779 = vadd.f32 %v1778, %v1713
      %v1780 = vrot.slane %v1779, 4
      %v1781 = vadd.f32 %v1779, %v1780
      %v1782 = vrot.slane %v1781, 2
      %v1783 = vadd.f32 %v1781, %v1782
      %v1784 = vrot.slane %v1783, 1
      %v1785 = vadd.f32 %v1783, %v1784
      %v1786 = vadd.f32 %v1644, %v1654
      %v1787 = vadd.f32 %v1786, %v1664
      %v1788 = vadd.f32 %v1787, %v1674
      %v1789 = vadd.f32 %v1788, %v1684
      %v1790 = vadd.f32 %v1789, %v1694
      %v1791 = vadd.f32 %v1790, %v1704
      %v1792 = vadd.f32 %v1791, %v1714
      %v1793 = vrot.slane %v1792, 4
      %v1794 = vadd.f32 %v1792, %v1793
      %v1795 = vrot.slane %v1794, 2
      %v1796 = vadd.f32 %v1794, %v1795
      %v1797 = vrot.slane %v1796, 1
      %v1798 = vadd.f32 %v1796, %v1797
      %v1799 = vadd.f32 %v1645, %v1655
      %v1800 = vadd.f32 %v1799, %v1665
      %v1801 = vadd.f32 %v1800, %v1675
      %v1802 = vadd.f32 %v1801, %v1685
      %v1803 = vadd.f32 %v1802, %v1695
      %v1804 = vadd.f32 %v1803, %v1705
      %v1805 = vadd.f32 %v1804, %v1715
      %v1806 = vrot.slane %v1805, 4
      %v1807 = vadd.f32 %v1805, %v1806
      %v1808 = vrot.slane %v1807, 2
      %v1809 = vadd.f32 %v1807, %v1808
      %v1810 = vrot.slane %v1809, 1
      %v1811 = vadd.f32 %v1809, %v1810
      %v1812 = vadd.f32 %v1646, %v1656
      %v1813 = vadd.f32 %v1812, %v1666
      %v1814 = vadd.f32 %v1813, %v1676
      %v1815 = vadd.f32 %v1814, %v1686
      %v1816 = vadd.f32 %v1815, %v1696
      %v1817 = vadd.f32 %v1816, %v1706
      %v1818 = vadd.f32 %v1817, %v1716
      %v1819 = vrot.slane %v1818, 4
      %v1820 = vadd.f32 %v1818, %v1819
      %v1821 = vrot.slane %v1820, 2
      %v1822 = vadd.f32 %v1820, %v1821
      %v1823 = vrot.slane %v1822, 1
      %v1824 = vadd.f32 %v1822, %v1823
      %v1825 = vadd.f32 %v1647, %v1657
      %v1826 = vadd.f32 %v1825, %v1667
      %v1827 = vadd.f32 %v1826, %v1677
      %v1828 = vadd.f32 %v1827, %v1687
      %v1829 = vadd.f32 %v1828, %v1697
      %v1830 = vadd.f32 %v1829, %v1707
      %v1831 = vadd.f32 %v1830, %v1717
      %v1832 = vrot.slane %v1831, 4
      %v1833 = vadd.f32 %v1831, %v1832
      %v1834 = vrot.slane %v1833, 2
      %v1835 = vadd.f32 %v1833, %v1834
      %v1836 = vrot.slane %v1835, 1
      %v1837 = vadd.f32 %v1835, %v1836
      %v1838 = vadd.f32 %v1648, %v1658
      %v1839 = vadd.f32 %v1838, %v1668
      %v1840 = vadd.f32 %v1839, %v1678
      %v1841 = vadd.f32 %v1840, %v1688
      %v1842 = vadd.f32 %v1841, %v1698
      %v1843 = vadd.f32 %v1842, %v1708
      %v1844 = vadd.f32 %v1843, %v1718
      %v1845 = vrot.slane %v1844, 4
      %v1846 = vadd.f32 %v1844, %v1845
      %v1847 = vrot.slane %v1846, 2
      %v1848 = vadd.f32 %v1846, %v1847
      %v1849 = vrot.slane %v1848, 1
      %v1850 = vadd.f32 %v1848, %v1849
      %v1861 = vcombine.low %v1733, %v1746
      %v1862 = vcombine.low %v1759, %v1772
      %v1863 = vcombine.low %v1785, %v1798
      %v1864 = vcombine.low %v1811, %v1824
      %v1866 = vunpack.c.l.s4 1966171168
      %v1867 = vunpack.c.0.s8 %v1866
      %v1868 = vlaneseq
      %v1869 = vshrl.u32 %v1868, 7
      %v1870 = vsub.s32 %v1867, %v1869
      %v1871 = vrot.slane %v1861, %v1870
      %v1873 = vunpack.c.l.s4 1966171168
      %v1874 = vunpack.c.0.s8 %v1873
      %v1875 = vlaneseq
      %v1876 = vshrl.u32 %v1875, 7
      %v1877 = vsub.s32 %v1874, %v1876
      %v1878 = vrot.slane %v1862, %v1877
      %v1880 = vunpack.c.l.s4 1966171168
      %v1881 = vunpack.c.0.s8 %v1880
      %v1882 = vlaneseq
      %v1883 = vshrl.u32 %v1882, 7
      %v1884 = vsub.s32 %v1881, %v1883
      %v1885 = vrot.slane %v1863, %v1884
      %v1887 = vunpack.c.l.s4 1966171168
      %v1888 = vunpack.c.0.s8 %v1887
      %v1889 = vlaneseq
      %v1890 = vshrl.u32 %v1889, 7
      %v1891 = vsub.s32 %v1888, %v1890
      %v1892 = vrot.slane %v1864, %v1891
      %v1893 = vcombine.low %v1871, %v1878
      %v1894 = vcombine.low %v1885, %v1892
      %v1896 = vunpack.c.l.s4 1966171168
      %v1897 = vunpack.c.0.s8 %v1896
      %v1898 = vlaneseq
      %v1899 = vshrl.u32 %v1898, 7
      %v1900 = vsub.s32 %v1897, %v1899
      %v1901 = vrot.slane %v1893, %v1900
      %v1903 = vunpack.c.l.s4 1966171168
      %v1904 = vunpack.c.0.s8 %v1903
      %v1905 = vlaneseq
      %v1906 = vshrl.u32 %v1905, 7
      %v1907 = vsub.s32 %v1904, %v1906
      %v1908 = vrot.slane %v1894, %v1907
      %v1909 = vcombine.low %v1901, %v1908
      %v1910 = vcombine.low %v1837, %v1850
      %v1912 = vunpack.c.l.s4 1966171168
      %v1913 = vunpack.c.0.s8 %v1912
      %v1914 = vlaneseq
      %v1915 = vshrl.u32 %v1914, 7
      %v1916 = vsub.s32 %v1913, %v1915
      %v1917 = vrot.slane %v1910, %v1916
      %v1919 = vunpack.c.l.s4 1966171168
      %v1920 = vunpack.c.0.s8 %v1919
      %v1921 = vlaneseq
      %v1922 = vshrl.u32 %v1921, 7
      %v1923 = vsub.s32 %v1920, %v1922
      %v1924 = vrot.slane %v1917, %v1923
      %v1927 = vadd.f32 %v1719, %v1909
      %v1928 = vadd.f32 %v1720, %v1924
      %1929 = vst [vmem:[#allocation2] sm:$0xff] %v1927
      %v1930 = vlaneseq
      %vm1931 = vcmp.ge.s32.totalorder %v1930, 0
      %vm1932 = vcmp.lt.s32.totalorder %v1930, 256
      %vm1933 = vmand %vm1931, %vm1932
      %1934 = vst.msk [vmem:[#allocation2 + $0x8] sm:$0x3] %vm1933, %v1928
      // Predicated region
      $region53: #{efficientnet_forward.8} parent=47 // pred_check
        %p1935 = pneg %p356
      $region54: #{efficientnet_forward.8} parent=47 // pred_check_branch
        %1937 = sbr.rel (%p1935) target = $region56
      $region55: #{efficientnet_forward.8} parent=47 // pred_region
        %v1938 = vld [vmem:[#allocation2] sm:$0xff]
        %v1939 = vld [vmem:[#allocation2 + $0x8] sm:$0x3]
        %v1940 = vmul.f32 %v1938, 0.015625
        %v1941 = vmul.f32 %v1939, 0.015625
        %v1944 = vlaneseq
        %v1945 = vshrl.u32 %v1944, 7
        %v1946 = vsub.s32 0, %v1945
        %v1947 = vrot.slane %v1940, %v1946
        %v1948 = vlaneseq
        %v1949 = vshrl.u32 %v1948, 7
        %v1950 = vsub.s32 1, %v1949
        %v1951 = vrot.slane %v1940, %v1950
        %v1952 = vlaneseq
        %v1953 = vshrl.u32 %v1952, 7
        %v1954 = vsub.s32 2, %v1953
        %v1955 = vrot.slane %v1940, %v1954
        %v1956 = vlaneseq
        %v1957 = vshrl.u32 %v1956, 7
        %v1958 = vsub.s32 3, %v1957
        %v1959 = vrot.slane %v1940, %v1958
        %v1960 = vlaneseq
        %v1961 = vshrl.u32 %v1960, 7
        %v1962 = vsub.s32 4, %v1961
        %v1963 = vrot.slane %v1940, %v1962
        %v1964 = vlaneseq
        %v1965 = vshrl.u32 %v1964, 7
        %v1966 = vsub.s32 5, %v1965
        %v1967 = vrot.slane %v1940, %v1966
        %v1968 = vlaneseq
        %v1969 = vshrl.u32 %v1968, 7
        %v1970 = vsub.s32 6, %v1969
        %v1971 = vrot.slane %v1940, %v1970
        %v1972 = vlaneseq
        %v1973 = vshrl.u32 %v1972, 7
        %v1974 = vsub.s32 7, %v1973
        %v1975 = vrot.slane %v1940, %v1974
        %v1976 = vlaneseq
        %v1977 = vshrl.u32 %v1976, 7
        %v1978 = vsub.s32 0, %v1977
        %v1979 = vrot.slane %v1941, %v1978
        %v1980 = vlaneseq
        %v1981 = vshrl.u32 %v1980, 7
        %v1982 = vsub.s32 1, %v1981
        %v1983 = vrot.slane %v1941, %v1982
        %v1994 = vpack.c.bf16 %v1947, %v1947
        %v1995 = vpack.c.bf16 %v1951, %v1951
        %v1996 = vpack.c.bf16 %v1955, %v1955
        %v1997 = vpack.c.bf16 %v1959, %v1959
        %v1998 = vpack.c.bf16 %v1963, %v1963
        %v1999 = vpack.c.bf16 %v1967, %v1967
        %v2000 = vpack.c.bf16 %v1971, %v1971
        %v2001 = vpack.c.bf16 %v1975, %v1975
        %v2002 = vpack.c.bf16 %v1979, %v1979
        %v2003 = vpack.c.bf16 %v1983, %v1983
        %v2014 = vcombine.low %v1994, %v1995
        %v2015 = vcombine.low %v1996, %v1997
        %v2016 = vcombine.low %v1998, %v1999
        %v2017 = vcombine.low %v2000, %v2001
        %v2019 = vunpack.c.l.s4 1966171168
        %v2020 = vunpack.c.0.s8 %v2019
        %v2021 = vlaneseq
        %v2022 = vshrl.u32 %v2021, 7
        %v2023 = vsub.s32 %v2020, %v2022
        %v2024 = vrot.slane %v2014, %v2023
        %v2026 = vunpack.c.l.s4 1966171168
        %v2027 = vunpack.c.0.s8 %v2026
        %v2028 = vlaneseq
        %v2029 = vshrl.u32 %v2028, 7
        %v2030 = vsub.s32 %v2027, %v2029
        %v2031 = vrot.slane %v2015, %v2030
        %v2033 = vunpack.c.l.s4 1966171168
        %v2034 = vunpack.c.0.s8 %v2033
        %v2035 = vlaneseq
        %v2036 = vshrl.u32 %v2035, 7
        %v2037 = vsub.s32 %v2034, %v2036
        %v2038 = vrot.slane %v2016, %v2037
        %v2040 = vunpack.c.l.s4 1966171168
        %v2041 = vunpack.c.0.s8 %v2040
        %v2042 = vlaneseq
        %v2043 = vshrl.u32 %v2042, 7
        %v2044 = vsub.s32 %v2041, %v2043
        %v2045 = vrot.slane %v2017, %v2044
        %v2046 = vcombine.low %v2024, %v2031
        %v2047 = vcombine.low %v2038, %v2045
        %v2049 = vunpack.c.l.s4 1966171168
        %v2050 = vunpack.c.0.s8 %v2049
        %v2051 = vlaneseq
        %v2052 = vshrl.u32 %v2051, 7
        %v2053 = vsub.s32 %v2050, %v2052
        %v2054 = vrot.slane %v2046, %v2053
        %v2056 = vunpack.c.l.s4 1966171168
        %v2057 = vunpack.c.0.s8 %v2056
        %v2058 = vlaneseq
        %v2059 = vshrl.u32 %v2058, 7
        %v2060 = vsub.s32 %v2057, %v2059
        %v2061 = vrot.slane %v2047, %v2060
        %v2062 = vcombine.low %v2054, %v2061
        %v2063 = vcombine.low %v2002, %v2003
        %v2065 = vunpack.c.l.s4 1966171168
        %v2066 = vunpack.c.0.s8 %v2065
        %v2067 = vlaneseq
        %v2068 = vshrl.u32 %v2067, 7
        %v2069 = vsub.s32 %v2066, %v2068
        %v2070 = vrot.slane %v2063, %v2069
        %v2072 = vunpack.c.l.s4 1966171168
        %v2073 = vunpack.c.0.s8 %v2072
        %v2074 = vlaneseq
        %v2075 = vshrl.u32 %v2074, 7
        %v2076 = vsub.s32 %v2073, %v2075
        %v2077 = vrot.slane %v2070, %v2076
        %vm2080 = vcmask 1040384
        %vm2081 = vsmask.f32 256
        %vm2082 = vmand %vm2080, %vm2081
        %vm2083 = vcmask 1041409
        %vm2084 = vsmask.f32 1280
        %vm2085 = vmand %vm2083, %vm2084
        %vm2086 = vmor %vm2085, %vm2082
        %vm2087 = vcmask 1042434
        %vm2088 = vsmask.f32 2304
        %vm2089 = vmand %vm2087, %vm2088
        %vm2090 = vmor %vm2089, %vm2086
        %vm2091 = vcmask 1043459
        %vm2092 = vsmask.f32 3328
        %vm2093 = vmand %vm2091, %vm2092
        %vm2094 = vmor %vm2093, %vm2090
        %vm2095 = vcmask 1044484
        %vm2096 = vsmask.f32 4352
        %vm2097 = vmand %vm2095, %vm2096
        %vm2098 = vmor %vm2097, %vm2094
        %vm2099 = vcmask 1045509
        %vm2100 = vsmask.f32 5376
        %vm2101 = vmand %vm2099, %vm2100
        %vm2102 = vmor %vm2101, %vm2098
        %vm2103 = vcmask 1046534
        %vm2104 = vsmask.f32 6400
        %vm2105 = vmand %vm2103, %vm2104
        %vm2106 = vmor %vm2105, %vm2102
        %vm2107 = vcmask 1047559
        %vm2108 = vsmask.f32 7424
        %vm2109 = vmand %vm2107, %vm2108
        %vm2110 = vmor %vm2109, %vm2106
        %v2111 = vld [vmem:[%s354] sm:$0xff]
        %v2112 = vsel %vm2110, %v2062, %v2111
        %2113 = vst [vmem:[%s354] sm:$0xff] %v2112
        %v2114 = vld [vmem:[%s354 + $0x8] sm:$0x3]
        %v2115 = vsel %vm2086, %v2077, %v2114
        %2116 = vst [vmem:[%s354 + $0x8] sm:$0x3] %v2115
      $region56: #{efficientnet_forward.8} parent=47 // pred_fallthru
        _
      %p2117 = scmp.lt.s32.totalorder %s22, 1
      %s2118 = scalar_select %p2117, %s22, 1
      %s2119 = smul.addr %s2118, 10
      %s2120 = scalar_lea.vmem %s7, %s2119
      // Predicated region
      $region57: #{efficientnet_forward.8} parent=47 // pred_check
        %p2121 = pneg %p214
      $region58: #{efficientnet_forward.8} parent=47 // pred_check_branch
        %2123 = sbr.rel (%p2121) target = $region60
      $region59: #{efficientnet_forward.8} parent=47 // pred_region
        _
      $region60: #{efficientnet_forward.8} parent=47 // pred_fallthru
        _
    $region48: #{efficientnet_forward.8} parent=5 // pred_fallthru
      _
    %p2124 = scmp.le.s32.totalorder 2, %s13
    // Predicated region
    $region61: #{efficientnet_forward.8} parent=5 // pred_check
      %p2125 = pneg %p2124
    $region62: #{efficientnet_forward.8} parent=5 // pred_check_branch
      %2127 = sbr.rel (%p2125) target = $region64
    $region63: #{efficientnet_forward.8} parent=5 // pred_region
      %s2128 = ssub.s32 %s13, 2
      // Predicated region
      $region65: #{efficientnet_forward.8} parent=63 // pred_check
        %p2129 = pneg %p220
      $region66: #{efficientnet_forward.8} parent=63 // pred_check_branch
        %2131 = sbr.rel (%p2129) target = $region68
      $region67: #{efficientnet_forward.8} parent=63 // pred_region
        %p2132 = scmp.lt.s32.totalorder %s24, 1
        %s2133 = scalar_select %p2132, %s24, 1
        %s2134 = smul.addr %s2133, 10
        %s2135 = scalar_lea.vmem %s7, %s2134
      $region68: #{efficientnet_forward.8} parent=63 // pred_fallthru
        _
    $region64: #{efficientnet_forward.8} parent=5 // pred_fallthru
      _
  $region6: #{efficientnet_forward.8} parent=0 // loop_footer
    %s17 = sadd.s32 1, %s13
  $region7: #{efficientnet_forward.8} parent=0 // loop_footer_branch
    %12 = sbr.rel target = $region3
  $region8: #{efficientnet_forward.8} parent=0 // loop_exit
    _

// kernel: efficientnet_forward.9
$region0: #{efficientnet_forward.9}
  #allocation0 [shape = 'u32[]', space=smem, size = 0x4, offset = 0x4, fixed_abs, tag = 'smem constant byte address 0x4 - core index']
  #allocation1 [shape = 'u32[144,128]{1,0:T(1,128)}', space=vmem, size = 0x12000, scoped, tag = 'internal scratch']
  %s0 = inlined_call_operand.vmem [shape: bf16[2,1280], index: 0, kind: input, shape index: {}]
  %s1 = inlined_call_operand.vmem [shape: bf16[1280,128], index: 1, kind: input, shape index: {}]
  %s2 = inlined_call_operand.vmem [shape: bf16[1,128], index: 2, kind: input, shape index: {}]
  %s3 = inlined_call_operand.hbm [shape: f32[2,128], index: 3, kind: output, shape index: {}]
  %s4 = sld [smem:[#allocation0]]
  $region22: #{efficientnet_forward.9} parent=0
    _
  %s6 = ssub.s32 1, %s4
  %s7 = scalar_select 0, %s6, %s4
  $region1: #{efficientnet_forward.9} parent=0
    #allocation2 [shape = 'u8[1024]{0}', space=vmem, size = 0x400, scoped, tag = 'output window, operand 0, single buffered']
    #allocation3 [shape = 's32[1]{0}', space=sflag, size = 0x4, scoped, tag = 'scoped memory for efficientnet_forward.9']
    %8 = vsyncpa [#allocation3], 0
    // Predicated region
    $region2: #{efficientnet_forward.9} parent=1 // pred_check
      _
    $region3: #{efficientnet_forward.9} parent=1 // pred_check_branch
      %10 = sbr.rel (0) target = $region5
    $region4: #{efficientnet_forward.9} parent=1 // pred_region
      _
    $region5: #{efficientnet_forward.9} parent=1 // pred_fallthru
      _
    // Predicated region
    $region6: #{efficientnet_forward.9} parent=1 // pred_check
      _
    $region7: #{efficientnet_forward.9} parent=1 // pred_check_branch
      %12 = sbr.rel (0) target = $region9
    $region8: #{efficientnet_forward.9} parent=1 // pred_region
      _
    $region9: #{efficientnet_forward.9} parent=1 // pred_fallthru
      _
    // Predicated region
    $region10: #{efficientnet_forward.9} parent=1 // pred_check
      _
    $region11: #{efficientnet_forward.9} parent=1 // pred_check_branch
      %14 = sbr.rel (0) target = $region13
    $region12: #{efficientnet_forward.9} parent=1 // pred_region
      _
    $region13: #{efficientnet_forward.9} parent=1 // pred_fallthru
      _
    %v16 = vld [vmem:[%s0] sm:$0xff]
    %v17 = vld [vmem:[%s0 + $0x8] sm:$0x3]
    %v18 = vld [vmem:[%s1] sm:$0xf]
    %v19 = vld [vmem:[%s1 + $0x4] sm:$0xf]
    %v20 = vld [vmem:[%s1 + $0x8] sm:$0xf]
    %v21 = vld [vmem:[%s1 + $0xc] sm:$0xf]
    %v22 = vld [vmem:[%s1 + $0x10] sm:$0xf]
    %v23 = vld [vmem:[%s1 + $0x14] sm:$0xf]
    %v24 = vld [vmem:[%s1 + $0x18] sm:$0xf]
    %v25 = vld [vmem:[%s1 + $0x1c] sm:$0xf]
    %v26 = vld [vmem:[%s1 + $0x20] sm:$0xf]
    %v27 = vld [vmem:[%s1 + $0x24] sm:$0xf]
    %v28 = vld [vmem:[%s1 + $0x28] sm:$0xf]
    %v29 = vld [vmem:[%s1 + $0x2c] sm:$0xf]
    %v30 = vld [vmem:[%s1 + $0x30] sm:$0xf]
    %v31 = vld [vmem:[%s1 + $0x34] sm:$0xf]
    %v32 = vld [vmem:[%s1 + $0x38] sm:$0xf]
    %v33 = vld [vmem:[%s1 + $0x3c] sm:$0xf]
    %v34 = vld [vmem:[%s1 + $0x40] sm:$0xf]
    %v35 = vld [vmem:[%s1 + $0x44] sm:$0xf]
    %v36 = vld [vmem:[%s1 + $0x48] sm:$0xf]
    %v37 = vld [vmem:[%s1 + $0x4c] sm:$0xf]
    %v38 = vld [vmem:[%s1 + $0x50] sm:$0xf]
    %v39 = vld [vmem:[%s1 + $0x54] sm:$0xf]
    %v40 = vld [vmem:[%s1 + $0x58] sm:$0xf]
    %v41 = vld [vmem:[%s1 + $0x5c] sm:$0xf]
    %v42 = vld [vmem:[%s1 + $0x60] sm:$0xf]
    %v43 = vld [vmem:[%s1 + $0x64] sm:$0xf]
    %v44 = vld [vmem:[%s1 + $0x68] sm:$0xf]
    %v45 = vld [vmem:[%s1 + $0x6c] sm:$0xf]
    %v46 = vld [vmem:[%s1 + $0x70] sm:$0xf]
    %v47 = vld [vmem:[%s1 + $0x74] sm:$0xf]
    %v48 = vld [vmem:[%s1 + $0x78] sm:$0xf]
    %v49 = vld [vmem:[%s1 + $0x7c] sm:$0xf]
    %v50 = vld [vmem:[%s1 + $0x80] sm:$0xf]
    %v51 = vld [vmem:[%s1 + $0x84] sm:$0xf]
    %v52 = vld [vmem:[%s1 + $0x88] sm:$0xf]
    %v53 = vld [vmem:[%s1 + $0x8c] sm:$0xf]
    %v54 = vld [vmem:[%s1 + $0x90] sm:$0xf]
    %v55 = vld [vmem:[%s1 + $0x94] sm:$0xf]
    %v56 = vld [vmem:[%s1 + $0x98] sm:$0xf]
    %v57 = vld [vmem:[%s1 + $0x9c] sm:$0xf]
    %v58 = vld [vmem:[%s1 + $0xa0] sm:$0xf]
    %v59 = vld [vmem:[%s1 + $0xa4] sm:$0xf]
    %v60 = vld [vmem:[%s1 + $0xa8] sm:$0xf]
    %v61 = vld [vmem:[%s1 + $0xac] sm:$0xf]
    %v62 = vld [vmem:[%s1 + $0xb0] sm:$0xf]
    %v63 = vld [vmem:[%s1 + $0xb4] sm:$0xf]
    %v64 = vld [vmem:[%s1 + $0xb8] sm:$0xf]
    %v65 = vld [vmem:[%s1 + $0xbc] sm:$0xf]
    %v66 = vld [vmem:[%s1 + $0xc0] sm:$0xf]
    %v67 = vld [vmem:[%s1 + $0xc4] sm:$0xf]
    %v68 = vld [vmem:[%s1 + $0xc8] sm:$0xf]
    %v69 = vld [vmem:[%s1 + $0xcc] sm:$0xf]
    %v70 = vld [vmem:[%s1 + $0xd0] sm:$0xf]
    %v71 = vld [vmem:[%s1 + $0xd4] sm:$0xf]
    %v72 = vld [vmem:[%s1 + $0xd8] sm:$0xf]
    %v73 = vld [vmem:[%s1 + $0xdc] sm:$0xf]
    %v74 = vld [vmem:[%s1 + $0xe0] sm:$0xf]
    %v75 = vld [vmem:[%s1 + $0xe4] sm:$0xf]
    %v76 = vld [vmem:[%s1 + $0xe8] sm:$0xf]
    %v77 = vld [vmem:[%s1 + $0xec] sm:$0xf]
    %v78 = vld [vmem:[%s1 + $0xf0] sm:$0xf]
    %v79 = vld [vmem:[%s1 + $0xf4] sm:$0xf]
    %v80 = vld [vmem:[%s1 + $0xf8] sm:$0xf]
    %v81 = vld [vmem:[%s1 + $0xfc] sm:$0xf]
    %v82 = vld [vmem:[%s1 + $0x100] sm:$0xf]
    %v83 = vld [vmem:[%s1 + $0x104] sm:$0xf]
    %v84 = vld [vmem:[%s1 + $0x108] sm:$0xf]
    %v85 = vld [vmem:[%s1 + $0x10c] sm:$0xf]
    %v86 = vld [vmem:[%s1 + $0x110] sm:$0xf]
    %v87 = vld [vmem:[%s1 + $0x114] sm:$0xf]
    %v88 = vld [vmem:[%s1 + $0x118] sm:$0xf]
    %v89 = vld [vmem:[%s1 + $0x11c] sm:$0xf]
    %v90 = vld [vmem:[%s1 + $0x120] sm:$0xf]
    %v91 = vld [vmem:[%s1 + $0x124] sm:$0xf]
    %v92 = vld [vmem:[%s1 + $0x128] sm:$0xf]
    %v93 = vld [vmem:[%s1 + $0x12c] sm:$0xf]
    %v94 = vld [vmem:[%s1 + $0x130] sm:$0xf]
    %v95 = vld [vmem:[%s1 + $0x134] sm:$0xf]
    %v96 = vld [vmem:[%s1 + $0x138] sm:$0xf]
    %v97 = vld [vmem:[%s1 + $0x13c] sm:$0xf]
    %v98 = vld [vmem:[%s1 + $0x140] sm:$0xf]
    %v99 = vld [vmem:[%s1 + $0x144] sm:$0xf]
    %v100 = vld [vmem:[%s1 + $0x148] sm:$0xf]
    %v101 = vld [vmem:[%s1 + $0x14c] sm:$0xf]
    %v102 = vld [vmem:[%s1 + $0x150] sm:$0xf]
    %v103 = vld [vmem:[%s1 + $0x154] sm:$0xf]
    %v104 = vld [vmem:[%s1 + $0x158] sm:$0xf]
    %v105 = vld [vmem:[%s1 + $0x15c] sm:$0xf]
    %v106 = vld [vmem:[%s1 + $0x160] sm:$0xf]
    %v107 = vld [vmem:[%s1 + $0x164] sm:$0xf]
    %v108 = vld [vmem:[%s1 + $0x168] sm:$0xf]
    %v109 = vld [vmem:[%s1 + $0x16c] sm:$0xf]
    %v110 = vld [vmem:[%s1 + $0x170] sm:$0xf]
    %v111 = vld [vmem:[%s1 + $0x174] sm:$0xf]
    %v112 = vld [vmem:[%s1 + $0x178] sm:$0xf]
    %v113 = vld [vmem:[%s1 + $0x17c] sm:$0xf]
    %v114 = vld [vmem:[%s1 + $0x180] sm:$0xf]
    %v115 = vld [vmem:[%s1 + $0x184] sm:$0xf]
    %v116 = vld [vmem:[%s1 + $0x188] sm:$0xf]
    %v117 = vld [vmem:[%s1 + $0x18c] sm:$0xf]
    %v118 = vld [vmem:[%s1 + $0x190] sm:$0xf]
    %v119 = vld [vmem:[%s1 + $0x194] sm:$0xf]
    %v120 = vld [vmem:[%s1 + $0x198] sm:$0xf]
    %v121 = vld [vmem:[%s1 + $0x19c] sm:$0xf]
    %v122 = vld [vmem:[%s1 + $0x1a0] sm:$0xf]
    %v123 = vld [vmem:[%s1 + $0x1a4] sm:$0xf]
    %v124 = vld [vmem:[%s1 + $0x1a8] sm:$0xf]
    %v125 = vld [vmem:[%s1 + $0x1ac] sm:$0xf]
    %v126 = vld [vmem:[%s1 + $0x1b0] sm:$0xf]
    %v127 = vld [vmem:[%s1 + $0x1b4] sm:$0xf]
    %v128 = vld [vmem:[%s1 + $0x1b8] sm:$0xf]
    %v129 = vld [vmem:[%s1 + $0x1bc] sm:$0xf]
    %v130 = vld [vmem:[%s1 + $0x1c0] sm:$0xf]
    %v131 = vld [vmem:[%s1 + $0x1c4] sm:$0xf]
    %v132 = vld [vmem:[%s1 + $0x1c8] sm:$0xf]
    %v133 = vld [vmem:[%s1 + $0x1cc] sm:$0xf]
    %v134 = vld [vmem:[%s1 + $0x1d0] sm:$0xf]
    %v135 = vld [vmem:[%s1 + $0x1d4] sm:$0xf]
    %v136 = vld [vmem:[%s1 + $0x1d8] sm:$0xf]
    %v137 = vld [vmem:[%s1 + $0x1dc] sm:$0xf]
    %v138 = vld [vmem:[%s1 + $0x1e0] sm:$0xf]
    %v139 = vld [vmem:[%s1 + $0x1e4] sm:$0xf]
    %v140 = vld [vmem:[%s1 + $0x1e8] sm:$0xf]
    %v141 = vld [vmem:[%s1 + $0x1ec] sm:$0xf]
    %v142 = vld [vmem:[%s1 + $0x1f0] sm:$0xf]
    %v143 = vld [vmem:[%s1 + $0x1f4] sm:$0xf]
    %v144 = vld [vmem:[%s1 + $0x1f8] sm:$0xf]
    %v145 = vld [vmem:[%s1 + $0x1fc] sm:$0xf]
    %v146 = vld [vmem:[%s1 + $0x200] sm:$0xf]
    %v147 = vld [vmem:[%s1 + $0x204] sm:$0xf]
    %v148 = vld [vmem:[%s1 + $0x208] sm:$0xf]
    %v149 = vld [vmem:[%s1 + $0x20c] sm:$0xf]
    %v150 = vld [vmem:[%s1 + $0x210] sm:$0xf]
    %v151 = vld [vmem:[%s1 + $0x214] sm:$0xf]
    %v152 = vld [vmem:[%s1 + $0x218] sm:$0xf]
    %v153 = vld [vmem:[%s1 + $0x21c] sm:$0xf]
    %v154 = vld [vmem:[%s1 + $0x220] sm:$0xf]
    %v155 = vld [vmem:[%s1 + $0x224] sm:$0xf]
    %v156 = vld [vmem:[%s1 + $0x228] sm:$0xf]
    %v157 = vld [vmem:[%s1 + $0x22c] sm:$0xf]
    %v158 = vld [vmem:[%s1 + $0x230] sm:$0xf]
    %v159 = vld [vmem:[%s1 + $0x234] sm:$0xf]
    %v160 = vld [vmem:[%s1 + $0x238] sm:$0xf]
    %v161 = vld [vmem:[%s1 + $0x23c] sm:$0xf]
    %v162 = vld [vmem:[%s1 + $0x240] sm:$0xf]
    %v163 = vld [vmem:[%s1 + $0x244] sm:$0xf]
    %v164 = vld [vmem:[%s1 + $0x248] sm:$0xf]
    %v165 = vld [vmem:[%s1 + $0x24c] sm:$0xf]
    %v166 = vld [vmem:[%s1 + $0x250] sm:$0xf]
    %v167 = vld [vmem:[%s1 + $0x254] sm:$0xf]
    %v168 = vld [vmem:[%s1 + $0x258] sm:$0xf]
    %v169 = vld [vmem:[%s1 + $0x25c] sm:$0xf]
    %v170 = vld [vmem:[%s1 + $0x260] sm:$0xf]
    %v171 = vld [vmem:[%s1 + $0x264] sm:$0xf]
    %v172 = vld [vmem:[%s1 + $0x268] sm:$0xf]
    %v173 = vld [vmem:[%s1 + $0x26c] sm:$0xf]
    %v174 = vld [vmem:[%s1 + $0x270] sm:$0xf]
    %v175 = vld [vmem:[%s1 + $0x274] sm:$0xf]
    %v176 = vld [vmem:[%s1 + $0x278] sm:$0xf]
    %v177 = vld [vmem:[%s1 + $0x27c] sm:$0xf]
    %v178 = vld [vmem:[%s2] sm:$0x1]
    %v179 = vunpack.c.l.bf16 %v178
    %v180 = vlaneseq
    %v181 = vshrl.u32 %v180, 7
    %v182 = vsub.s32 0, %v181
    %v183 = vrot.slane %v179, %v182
    %v186 = vcombine.high %v16, %v16
    %v188 = vunpack.c.l.s4 1966171168
    %v189 = vunpack.c.0.s8 %v188
    %v190 = vlaneseq
    %v191 = vshrl.u32 %v190, 7
    %v192 = vsub.s32 %v189, %v191
    %v193 = vrot.slane %v16, %v192
    %v195 = vunpack.c.l.s4 1966171168
    %v196 = vunpack.c.0.s8 %v195
    %v197 = vlaneseq
    %v198 = vshrl.u32 %v197, 7
    %v199 = vsub.s32 %v196, %v198
    %v200 = vrot.slane %v186, %v199
    %v201 = vcombine.high %v193, %v193
    %v202 = vcombine.high %v200, %v200
    %v204 = vunpack.c.l.s4 1966171168
    %v205 = vunpack.c.0.s8 %v204
    %v206 = vlaneseq
    %v207 = vshrl.u32 %v206, 7
    %v208 = vsub.s32 %v205, %v207
    %v209 = vrot.slane %v193, %v208
    %v211 = vunpack.c.l.s4 1966171168
    %v212 = vunpack.c.0.s8 %v211
    %v213 = vlaneseq
    %v214 = vshrl.u32 %v213, 7
    %v215 = vsub.s32 %v212, %v214
    %v216 = vrot.slane %v200, %v215
    %v218 = vunpack.c.l.s4 1966171168
    %v219 = vunpack.c.0.s8 %v218
    %v220 = vlaneseq
    %v221 = vshrl.u32 %v220, 7
    %v222 = vsub.s32 %v219, %v221
    %v223 = vrot.slane %v201, %v222
    %v225 = vunpack.c.l.s4 1966171168
    %v226 = vunpack.c.0.s8 %v225
    %v227 = vlaneseq
    %v228 = vshrl.u32 %v227, 7
    %v229 = vsub.s32 %v226, %v228
    %v230 = vrot.slane %v202, %v229
    %v231 = vcombine.high %v209, %v209
    %v232 = vcombine.high %v216, %v216
    %v233 = vcombine.high %v223, %v223
    %v234 = vcombine.high %v230, %v230
    %v236 = vunpack.c.l.s4 1966171168
    %v237 = vunpack.c.0.s8 %v236
    %v238 = vlaneseq
    %v239 = vshrl.u32 %v238, 7
    %v240 = vsub.s32 %v237, %v239
    %v241 = vrot.slane %v17, %v240
    %v242 = vcombine.high %v241, %v241
    %v244 = vunpack.c.l.s4 1966171168
    %v245 = vunpack.c.0.s8 %v244
    %v246 = vlaneseq
    %v247 = vshrl.u32 %v246, 7
    %v248 = vsub.s32 %v245, %v247
    %v249 = vrot.slane %v241, %v248
    %v251 = vunpack.c.l.s4 1966171168
    %v252 = vunpack.c.0.s8 %v251
    %v253 = vlaneseq
    %v254 = vshrl.u32 %v253, 7
    %v255 = vsub.s32 %v252, %v254
    %v256 = vrot.slane %v242, %v255
    %v427 = vunpack.c.l.b16 %v18
    %v428 = vunpack.c.l.b16 %v19
    %v429 = vunpack.c.l.b16 %v20
    %v430 = vunpack.c.l.b16 %v21
    %v431 = vunpack.c.l.b16 %v22
    %v432 = vunpack.c.l.b16 %v23
    %v433 = vunpack.c.l.b16 %v24
    %v434 = vunpack.c.l.b16 %v25
    %v435 = vunpack.c.l.b16 %v26
    %v436 = vunpack.c.l.b16 %v27
    %v437 = vunpack.c.l.b16 %v28
    %v438 = vunpack.c.l.b16 %v29
    %v439 = vunpack.c.l.b16 %v30
    %v440 = vunpack.c.l.b16 %v31
    %v441 = vunpack.c.l.b16 %v32
    %v442 = vunpack.c.l.b16 %v33
    %v443 = vunpack.c.l.b16 %v34
    %v444 = vunpack.c.l.b16 %v35
    %v445 = vunpack.c.l.b16 %v36
    %v446 = vunpack.c.l.b16 %v37
    %v447 = vunpack.c.l.b16 %v38
    %v448 = vunpack.c.l.b16 %v39
    %v449 = vunpack.c.l.b16 %v40
    %v450 = vunpack.c.l.b16 %v41
    %v451 = vunpack.c.l.b16 %v42
    %v452 = vunpack.c.l.b16 %v43
    %v453 = vunpack.c.l.b16 %v44
    %v454 = vunpack.c.l.b16 %v45
    %v455 = vunpack.c.l.b16 %v46
    %v456 = vunpack.c.l.b16 %v47
    %v457 = vunpack.c.l.b16 %v48
    %v458 = vunpack.c.l.b16 %v49
    %v459 = vunpack.c.l.b16 %v50
    %v460 = vunpack.c.l.b16 %v51
    %v461 = vunpack.c.l.b16 %v52
    %v462 = vunpack.c.l.b16 %v53
    %v463 = vunpack.c.l.b16 %v54
    %v464 = vunpack.c.l.b16 %v55
    %v465 = vunpack.c.l.b16 %v56
    %v466 = vunpack.c.l.b16 %v57
    %v467 = vunpack.c.l.b16 %v58
    %v468 = vunpack.c.l.b16 %v59
    %v469 = vunpack.c.l.b16 %v60
    %v470 = vunpack.c.l.b16 %v61
    %v471 = vunpack.c.l.b16 %v62
    %v472 = vunpack.c.l.b16 %v63
    %v473 = vunpack.c.l.b16 %v64
    %v474 = vunpack.c.l.b16 %v65
    %v475 = vunpack.c.l.b16 %v66
    %v476 = vunpack.c.l.b16 %v67
    %v477 = vunpack.c.l.b16 %v68
    %v478 = vunpack.c.l.b16 %v69
    %v479 = vunpack.c.l.b16 %v70
    %v480 = vunpack.c.l.b16 %v71
    %v481 = vunpack.c.l.b16 %v72
    %v482 = vunpack.c.l.b16 %v73
    %v483 = vunpack.c.l.b16 %v74
    %v484 = vunpack.c.l.b16 %v75
    %v485 = vunpack.c.l.b16 %v76
    %v486 = vunpack.c.l.b16 %v77
    %v487 = vunpack.c.l.b16 %v78
    %v488 = vunpack.c.l.b16 %v79
    %v489 = vunpack.c.l.b16 %v80
    %v490 = vunpack.c.l.b16 %v81
    %v491 = vunpack.c.l.b16 %v82
    %v492 = vunpack.c.l.b16 %v83
    %v493 = vunpack.c.l.b16 %v84
    %v494 = vunpack.c.l.b16 %v85
    %v495 = vunpack.c.l.b16 %v86
    %v496 = vunpack.c.l.b16 %v87
    %v497 = vunpack.c.l.b16 %v88
    %v498 = vunpack.c.l.b16 %v89
    %v499 = vunpack.c.l.b16 %v90
    %v500 = vunpack.c.l.b16 %v91
    %v501 = vunpack.c.l.b16 %v92
    %v502 = vunpack.c.l.b16 %v93
    %v503 = vunpack.c.l.b16 %v94
    %v504 = vunpack.c.l.b16 %v95
    %v505 = vunpack.c.l.b16 %v96
    %v506 = vunpack.c.l.b16 %v97
    %v507 = vunpack.c.l.b16 %v98
    %v508 = vunpack.c.l.b16 %v99
    %v509 = vunpack.c.l.b16 %v100
    %v510 = vunpack.c.l.b16 %v101
    %v511 = vunpack.c.l.b16 %v102
    %v512 = vunpack.c.l.b16 %v103
    %v513 = vunpack.c.l.b16 %v104
    %v514 = vunpack.c.l.b16 %v105
    %v515 = vunpack.c.l.b16 %v106
    %v516 = vunpack.c.l.b16 %v107
    %v517 = vunpack.c.l.b16 %v108
    %v518 = vunpack.c.l.b16 %v109
    %v519 = vunpack.c.l.b16 %v110
    %v520 = vunpack.c.l.b16 %v111
    %v521 = vunpack.c.l.b16 %v112
    %v522 = vunpack.c.l.b16 %v113
    %v523 = vunpack.c.l.b16 %v114
    %v524 = vunpack.c.l.b16 %v115
    %v525 = vunpack.c.l.b16 %v116
    %v526 = vunpack.c.l.b16 %v117
    %v527 = vunpack.c.l.b16 %v118
    %v528 = vunpack.c.l.b16 %v119
    %v529 = vunpack.c.l.b16 %v120
    %v530 = vunpack.c.l.b16 %v121
    %v531 = vunpack.c.l.b16 %v122
    %v532 = vunpack.c.l.b16 %v123
    %v533 = vunpack.c.l.b16 %v124
    %v534 = vunpack.c.l.b16 %v125
    %v535 = vunpack.c.l.b16 %v126
    %v536 = vunpack.c.l.b16 %v127
    %v537 = vunpack.c.l.b16 %v128
    %v538 = vunpack.c.l.b16 %v129
    %v539 = vunpack.c.l.b16 %v130
    %v540 = vunpack.c.l.b16 %v131
    %v541 = vunpack.c.l.b16 %v132
    %v542 = vunpack.c.l.b16 %v133
    %v543 = vunpack.c.l.b16 %v134
    %v544 = vunpack.c.l.b16 %v135
    %v545 = vunpack.c.l.b16 %v136
    %v546 = vunpack.c.l.b16 %v137
    %v547 = vunpack.c.l.b16 %v138
    %v548 = vunpack.c.l.b16 %v139
    %v549 = vunpack.c.l.b16 %v140
    %v550 = vunpack.c.l.b16 %v141
    %v551 = vunpack.c.l.b16 %v142
    %v552 = vunpack.c.l.b16 %v143
    %v553 = vunpack.c.l.b16 %v144
    %v554 = vunpack.c.l.b16 %v145
    %v555 = vunpack.c.l.b16 %v146
    %v556 = vunpack.c.l.b16 %v147
    %v557 = vunpack.c.l.b16 %v148
    %v558 = vunpack.c.l.b16 %v149
    %v559 = vunpack.c.l.b16 %v150
    %v560 = vunpack.c.l.b16 %v151
    %v561 = vunpack.c.l.b16 %v152
    %v562 = vunpack.c.l.b16 %v153
    %v563 = vunpack.c.l.b16 %v154
    %v564 = vunpack.c.l.b16 %v155
    %v565 = vunpack.c.l.b16 %v156
    %v566 = vunpack.c.l.b16 %v157
    %v567 = vunpack.c.l.b16 %v158
    %v568 = vunpack.c.l.b16 %v159
    %v569 = vunpack.c.l.b16 %v160
    %v570 = vunpack.c.l.b16 %v161
    %v571 = vunpack.c.l.b16 %v162
    %v572 = vunpack.c.l.b16 %v163
    %v573 = vunpack.c.l.b16 %v164
    %v574 = vunpack.c.l.b16 %v165
    %v575 = vunpack.c.l.b16 %v166
    %v576 = vunpack.c.l.b16 %v167
    %v577 = vunpack.c.l.b16 %v168
    %v578 = vunpack.c.l.b16 %v169
    %v579 = vunpack.c.l.b16 %v170
    %v580 = vunpack.c.l.b16 %v171
    %v581 = vunpack.c.l.b16 %v172
    %v582 = vunpack.c.l.b16 %v173
    %v583 = vunpack.c.l.b16 %v174
    %v584 = vunpack.c.l.b16 %v175
    %v585 = vunpack.c.l.b16 %v176
    %v586 = vunpack.c.l.b16 %v177
    %v587 = vpack.c.b16 %v428, %v427
    %v588 = vpack.c.b16 %v430, %v429
    %v589 = vpack.c.b16 %v432, %v431
    %v590 = vpack.c.b16 %v434, %v433
    %v591 = vpack.c.b16 %v436, %v435
    %v592 = vpack.c.b16 %v438, %v437
    %v593 = vpack.c.b16 %v440, %v439
    %v594 = vpack.c.b16 %v442, %v441
    %v595 = vpack.c.b16 %v444, %v443
    %v596 = vpack.c.b16 %v446, %v445
    %v597 = vpack.c.b16 %v448, %v447
    %v598 = vpack.c.b16 %v450, %v449
    %v599 = vpack.c.b16 %v452, %v451
    %v600 = vpack.c.b16 %v454, %v453
    %v601 = vpack.c.b16 %v456, %v455
    %v602 = vpack.c.b16 %v458, %v457
    %v603 = vpack.c.b16 %v460, %v459
    %v604 = vpack.c.b16 %v462, %v461
    %v605 = vpack.c.b16 %v464, %v463
    %v606 = vpack.c.b16 %v466, %v465
    %v607 = vpack.c.b16 %v468, %v467
    %v608 = vpack.c.b16 %v470, %v469
    %v609 = vpack.c.b16 %v472, %v471
    %v610 = vpack.c.b16 %v474, %v473
    %v611 = vpack.c.b16 %v476, %v475
    %v612 = vpack.c.b16 %v478, %v477
    %v613 = vpack.c.b16 %v480, %v479
    %v614 = vpack.c.b16 %v482, %v481
    %v615 = vpack.c.b16 %v484, %v483
    %v616 = vpack.c.b16 %v486, %v485
    %v617 = vpack.c.b16 %v488, %v487
    %v618 = vpack.c.b16 %v490, %v489
    %v619 = vpack.c.b16 %v492, %v491
    %v620 = vpack.c.b16 %v494, %v493
    %v621 = vpack.c.b16 %v496, %v495
    %v622 = vpack.c.b16 %v498, %v497
    %v623 = vpack.c.b16 %v500, %v499
    %v624 = vpack.c.b16 %v502, %v501
    %v625 = vpack.c.b16 %v504, %v503
    %v626 = vpack.c.b16 %v506, %v505
    %v627 = vpack.c.b16 %v508, %v507
    %v628 = vpack.c.b16 %v510, %v509
    %v629 = vpack.c.b16 %v512, %v511
    %v630 = vpack.c.b16 %v514, %v513
    %v631 = vpack.c.b16 %v516, %v515
    %v632 = vpack.c.b16 %v518, %v517
    %v633 = vpack.c.b16 %v520, %v519
    %v634 = vpack.c.b16 %v522, %v521
    %v635 = vpack.c.b16 %v524, %v523
    %v636 = vpack.c.b16 %v526, %v525
    %v637 = vpack.c.b16 %v528, %v527
    %v638 = vpack.c.b16 %v530, %v529
    %v639 = vpack.c.b16 %v532, %v531
    %v640 = vpack.c.b16 %v534, %v533
    %v641 = vpack.c.b16 %v536, %v535
    %v642 = vpack.c.b16 %v538, %v537
    %v643 = vpack.c.b16 %v540, %v539
    %v644 = vpack.c.b16 %v542, %v541
    %v645 = vpack.c.b16 %v544, %v543
    %v646 = vpack.c.b16 %v546, %v545
    %v647 = vpack.c.b16 %v548, %v547
    %v648 = vpack.c.b16 %v550, %v549
    %v649 = vpack.c.b16 %v552, %v551
    %v650 = vpack.c.b16 %v554, %v553
    %v651 = vpack.c.b16 %v556, %v555
    %v652 = vpack.c.b16 %v558, %v557
    %v653 = vpack.c.b16 %v560, %v559
    %v654 = vpack.c.b16 %v562, %v561
    %v655 = vpack.c.b16 %v564, %v563
    %v656 = vpack.c.b16 %v566, %v565
    %v657 = vpack.c.b16 %v568, %v567
    %v658 = vpack.c.b16 %v570, %v569
    %v659 = vpack.c.b16 %v572, %v571
    %v660 = vpack.c.b16 %v574, %v573
    %v661 = vpack.c.b16 %v576, %v575
    %v662 = vpack.c.b16 %v578, %v577
    %v663 = vpack.c.b16 %v580, %v579
    %v664 = vpack.c.b16 %v582, %v581
    %v665 = vpack.c.b16 %v584, %v583
    %v666 = vpack.c.b16 %v586, %v585
    %747 = vmatprep.subr.bf16.mxu0 0
    %748 = vmatpush1.bf16.msra.mxu0 %v587
    %749 = vmatprep.subr.bf16.mxu0 0
    %750 = vmatpush1.bf16.msra.mxu0 %v588
    %751 = vmatprep.subr.bf16.mxu0 0
    %752 = vmatpush1.bf16.msra.mxu0 %v589
    %753 = vmatprep.subr.bf16.mxu0 0
    %754 = vmatpush1.bf16.msra.mxu0 %v590
    %755 = vmatprep.subr.bf16.mxu0 0
    %756 = vmatpush1.bf16.msra.mxu0 %v591
    %757 = vmatprep.subr.bf16.mxu0 0
    %758 = vmatpush1.bf16.msra.mxu0 %v592
    %759 = vmatprep.subr.bf16.mxu0 0
    %760 = vmatpush1.bf16.msra.mxu0 %v593
    %761 = vmatprep.subr.bf16.mxu0 0
    %762 = vmatpush1.bf16.msra.mxu0 %v594
    %763 = vmatprep.subr.bf16.mxu0 0
    %764 = vmatpush1.bf16.msra.mxu0 %v595
    %765 = vmatprep.subr.bf16.mxu0 0
    %766 = vmatpush1.bf16.msra.mxu0 %v596
    %767 = vmatprep.subr.bf16.mxu0 0
    %768 = vmatpush1.bf16.msra.mxu0 %v597
    %769 = vmatprep.subr.bf16.mxu0 0
    %770 = vmatpush1.bf16.msra.mxu0 %v598
    %771 = vmatprep.subr.bf16.mxu0 0
    %772 = vmatpush1.bf16.msra.mxu0 %v599
    %773 = vmatprep.subr.bf16.mxu0 0
    %774 = vmatpush1.bf16.msra.mxu0 %v600
    %775 = vmatprep.subr.bf16.mxu0 0
    %776 = vmatpush1.bf16.msra.mxu0 %v601
    %777 = vmatprep.subr.bf16.mxu0 0
    %778 = vmatpush1.bf16.msra.mxu0 %v602
    %779 = vmatprep.mubr.bf16.mxu0 %v223
    %780 = vmatmul.mubr.bf16.gmra.mrb[0].mxu0 %v209
    %v781 = vpop.f32.mrb[0].mxu0
    %v782 = vadd.f32 %v183, %v781
    %v783 = vpop.f32.mrb[0].mxu0
    %v784 = vpop.f32.mrb[0].mxu0
    %v785 = vpop.f32.mrb[0].mxu0
    %786 = vdwg.mxu0
    %787 = vmatprep.subr.bf16.mxu0 0
    %788 = vmatpush1.bf16.msra.mxu0 %v603
    %789 = vmatprep.subr.bf16.mxu0 0
    %790 = vmatpush1.bf16.msra.mxu0 %v604
    %791 = vmatprep.subr.bf16.mxu0 0
    %792 = vmatpush1.bf16.msra.mxu0 %v605
    %793 = vmatprep.subr.bf16.mxu0 0
    %794 = vmatpush1.bf16.msra.mxu0 %v606
    %795 = vmatprep.subr.bf16.mxu0 0
    %796 = vmatpush1.bf16.msra.mxu0 %v607
    %797 = vmatprep.subr.bf16.mxu0 0
    %798 = vmatpush1.bf16.msra.mxu0 %v608
    %799 = vmatprep.subr.bf16.mxu0 0
    %800 = vmatpush1.bf16.msra.mxu0 %v609
    %801 = vmatprep.subr.bf16.mxu0 0
    %802 = vmatpush1.bf16.msra.mxu0 %v610
    %803 = vmatprep.subr.bf16.mxu0 0
    %804 = vmatpush1.bf16.msra.mxu0 %v611
    %805 = vmatprep.subr.bf16.mxu0 0
    %806 = vmatpush1.bf16.msra.mxu0 %v612
    %807 = vmatprep.subr.bf16.mxu0 0
    %808 = vmatpush1.bf16.msra.mxu0 %v613
    %809 = vmatprep.subr.bf16.mxu0 0
    %810 = vmatpush1.bf16.msra.mxu0 %v614
    %811 = vmatprep.subr.bf16.mxu0 0
    %812 = vmatpush1.bf16.msra.mxu0 %v615
    %813 = vmatprep.subr.bf16.mxu0 0
    %814 = vmatpush1.bf16.msra.mxu0 %v616
    %815 = vmatprep.subr.bf16.mxu0 0
    %816 = vmatpush1.bf16.msra.mxu0 %v617
    %817 = vmatprep.subr.bf16.mxu0 0
    %818 = vmatpush1.bf16.msra.mxu0 %v618
    %819 = vmatprep.mubr.bf16.mxu0 %v233
    %820 = vmatmul.mubr.bf16.gmra.mrb[0].mxu0 %v231
    %v821 = vpop.f32.mrb[0].mxu0
    %v822 = vadd.f32 %v782, %v821
    %v823 = vpop.f32.mrb[0].mxu0
    %v824 = vpop.f32.mrb[0].mxu0
    %v825 = vpop.f32.mrb[0].mxu0
    %826 = vdwg.mxu0
    %827 = vmatprep.subr.bf16.mxu0 0
    %828 = vmatpush1.bf16.msra.mxu0 %v619
    %829 = vmatprep.subr.bf16.mxu0 0
    %830 = vmatpush1.bf16.msra.mxu0 %v620
    %831 = vmatprep.subr.bf16.mxu0 0
    %832 = vmatpush1.bf16.msra.mxu0 %v621
    %833 = vmatprep.subr.bf16.mxu0 0
    %834 = vmatpush1.bf16.msra.mxu0 %v622
    %835 = vmatprep.subr.bf16.mxu0 0
    %836 = vmatpush1.bf16.msra.mxu0 %v623
    %837 = vmatprep.subr.bf16.mxu0 0
    %838 = vmatpush1.bf16.msra.mxu0 %v624
    %839 = vmatprep.subr.bf16.mxu0 0
    %840 = vmatpush1.bf16.msra.mxu0 %v625
    %841 = vmatprep.subr.bf16.mxu0 0
    %842 = vmatpush1.bf16.msra.mxu0 %v626
    %843 = vmatprep.subr.bf16.mxu0 0
    %844 = vmatpush1.bf16.msra.mxu0 %v627
    %845 = vmatprep.subr.bf16.mxu0 0
    %846 = vmatpush1.bf16.msra.mxu0 %v628
    %847 = vmatprep.subr.bf16.mxu0 0
    %848 = vmatpush1.bf16.msra.mxu0 %v629
    %849 = vmatprep.subr.bf16.mxu0 0
    %850 = vmatpush1.bf16.msra.mxu0 %v630
    %851 = vmatprep.subr.bf16.mxu0 0
    %852 = vmatpush1.bf16.msra.mxu0 %v631
    %853 = vmatprep.subr.bf16.mxu0 0
    %854 = vmatpush1.bf16.msra.mxu0 %v632
    %855 = vmatprep.subr.bf16.mxu0 0
    %856 = vmatpush1.bf16.msra.mxu0 %v633
    %857 = vmatprep.subr.bf16.mxu0 0
    %858 = vmatpush1.bf16.msra.mxu0 %v634
    %859 = vmatprep.mubr.bf16.mxu0 %v230
    %860 = vmatmul.mubr.bf16.gmra.mrb[0].mxu0 %v216
    %v861 = vpop.f32.mrb[0].mxu0
    %v862 = vadd.f32 %v822, %v861
    %v863 = vpop.f32.mrb[0].mxu0
    %v864 = vpop.f32.mrb[0].mxu0
    %v865 = vpop.f32.mrb[0].mxu0
    %866 = vdwg.mxu0
    %867 = vmatprep.subr.bf16.mxu0 0
    %868 = vmatpush1.bf16.msra.mxu0 %v635
    %869 = vmatprep.subr.bf16.mxu0 0
    %870 = vmatpush1.bf16.msra.mxu0 %v636
    %871 = vmatprep.subr.bf16.mxu0 0
    %872 = vmatpush1.bf16.msra.mxu0 %v637
    %873 = vmatprep.subr.bf16.mxu0 0
    %874 = vmatpush1.bf16.msra.mxu0 %v638
    %875 = vmatprep.subr.bf16.mxu0 0
    %876 = vmatpush1.bf16.msra.mxu0 %v639
    %877 = vmatprep.subr.bf16.mxu0 0
    %878 = vmatpush1.bf16.msra.mxu0 %v640
    %879 = vmatprep.subr.bf16.mxu0 0
    %880 = vmatpush1.bf16.msra.mxu0 %v641
    %881 = vmatprep.subr.bf16.mxu0 0
    %882 = vmatpush1.bf16.msra.mxu0 %v642
    %883 = vmatprep.subr.bf16.mxu0 0
    %884 = vmatpush1.bf16.msra.mxu0 %v643
    %885 = vmatprep.subr.bf16.mxu0 0
    %886 = vmatpush1.bf16.msra.mxu0 %v644
    %887 = vmatprep.subr.bf16.mxu0 0
    %888 = vmatpush1.bf16.msra.mxu0 %v645
    %889 = vmatprep.subr.bf16.mxu0 0
    %890 = vmatpush1.bf16.msra.mxu0 %v646
    %891 = vmatprep.subr.bf16.mxu0 0
    %892 = vmatpush1.bf16.msra.mxu0 %v647
    %893 = vmatprep.subr.bf16.mxu0 0
    %894 = vmatpush1.bf16.msra.mxu0 %v648
    %895 = vmatprep.subr.bf16.mxu0 0
    %896 = vmatpush1.bf16.msra.mxu0 %v649
    %897 = vmatprep.subr.bf16.mxu0 0
    %898 = vmatpush1.bf16.msra.mxu0 %v650
    %899 = vmatprep.mubr.bf16.mxu0 %v234
    %900 = vmatmul.mubr.bf16.gmra.mrb[0].mxu0 %v232
    %v901 = vpop.f32.mrb[0].mxu0
    %v902 = vadd.f32 %v862, %v901
    %v903 = vpop.f32.mrb[0].mxu0
    %v904 = vpop.f32.mrb[0].mxu0
    %v905 = vpop.f32.mrb[0].mxu0
    %906 = vdwg.mxu0
    %907 = vmatprep.subr.bf16.mxu0 0
    %908 = vmatpush1.bf16.msra.mxu0 %v651
    %909 = vmatprep.subr.bf16.mxu0 0
    %910 = vmatpush1.bf16.msra.mxu0 %v652
    %911 = vmatprep.subr.bf16.mxu0 0
    %912 = vmatpush1.bf16.msra.mxu0 %v653
    %913 = vmatprep.subr.bf16.mxu0 0
    %914 = vmatpush1.bf16.msra.mxu0 %v654
    %915 = vmatprep.subr.bf16.mxu0 0
    %916 = vmatpush1.bf16.msra.mxu0 %v655
    %917 = vmatprep.subr.bf16.mxu0 0
    %918 = vmatpush1.bf16.msra.mxu0 %v656
    %919 = vmatprep.subr.bf16.mxu0 0
    %920 = vmatpush1.bf16.msra.mxu0 %v657
    %921 = vmatprep.subr.bf16.mxu0 0
    %922 = vmatpush1.bf16.msra.mxu0 %v658
    %923 = vmatprep.subr.bf16.mxu0 0
    %924 = vmatpush1.bf16.msra.mxu0 %v659
    %925 = vmatprep.subr.bf16.mxu0 0
    %926 = vmatpush1.bf16.msra.mxu0 %v660
    %927 = vmatprep.subr.bf16.mxu0 0
    %928 = vmatpush1.bf16.msra.mxu0 %v661
    %929 = vmatprep.subr.bf16.mxu0 0
    %930 = vmatpush1.bf16.msra.mxu0 %v662
    %931 = vmatprep.subr.bf16.mxu0 0
    %932 = vmatpush1.bf16.msra.mxu0 %v663
    %933 = vmatprep.subr.bf16.mxu0 0
    %934 = vmatpush1.bf16.msra.mxu0 %v664
    %935 = vmatprep.subr.bf16.mxu0 0
    %936 = vmatpush1.bf16.msra.mxu0 %v665
    %937 = vmatprep.subr.bf16.mxu0 0
    %938 = vmatpush1.bf16.msra.mxu0 %v666
    %939 = vmatprep.mubr.bf16.mxu0 %v256
    %940 = vmatmul.mubr.bf16.gmra.mrb[0].mxu0 %v249
    %v941 = vpop.f32.mrb[0].mxu0
    %v942 = vadd.f32 %v902, %v941
    %v943 = vpop.f32.mrb[0].mxu0
    %v944 = vpop.f32.mrb[0].mxu0
    %v945 = vpop.f32.mrb[0].mxu0
    %946 = vdwg.mxu0
    %947 = vst [vmem:[#allocation2] sm:$0x3] %v942
    // Predicated region
    $region14: #{efficientnet_forward.9} parent=1 // pred_check
      _
    $region15: #{efficientnet_forward.9} parent=1 // pred_check_branch
      %949 = sbr.rel (0) target = $region17
    $region16: #{efficientnet_forward.9} parent=1 // pred_region
      %s951 = ssub.s32 32, 32
      %952 = vsyncadd [#allocation3], %s951
      %s954 = sshll.u32 [#allocation2], 4
      %s955 = int_to_ptr.vmem [resolvable:$true] %s954
      %957 = dma.vmem_to_hbm [thread:$0]  %s955, 32, %s3, [#allocation3]
    $region17: #{efficientnet_forward.9} parent=1 // pred_fallthru
      _
    // Predicated region
    $region18: #{efficientnet_forward.9} parent=1 // pred_check
      _
    $region19: #{efficientnet_forward.9} parent=1 // pred_check_branch
      %959 = sbr.rel (0) target = $region21
    $region20: #{efficientnet_forward.9} parent=1 // pred_region
      %960 = dma.done [#allocation3], 32
    $region21: #{efficientnet_forward.9} parent=1 // pred_fallthru
      _
    %961 = vsyncpa [#allocation3], 1

</llo_original>
